<compile_context>
chip_gen: v5e
topology: v5e:2x2
jax: 0.10.0
libtpu: 0.0.40
codegen_flags: <defaults>
</compile_context>

<pallas_src>
import jax
import jax.numpy as jnp
from jax import lax
from jax.experimental import pallas as pl
from jax.experimental.pallas import tpu as pltpu


# ---------------------------------------------------------------------------
# In-kernel helpers (traced inside the Pallas kernel body)
# ---------------------------------------------------------------------------
def _even_row_select(n_out, n_in):
    """(n_out, n_in) f32 matrix S with S[i, 2*i] = 1  (S @ X picks even rows)."""
    r = lax.broadcasted_iota(jnp.int32, (n_out, n_in), 0)
    c = lax.broadcasted_iota(jnp.int32, (n_out, n_in), 1)
    return (c == 2 * r).astype(jnp.float32)


def _even_col_select(n_in, n_out):
    """(n_in, n_out) f32 matrix S with S[2*j, j] = 1  (X @ S picks even cols)."""
    r = lax.broadcasted_iota(jnp.int32, (n_in, n_out), 0)
    c = lax.broadcasted_iota(jnp.int32, (n_in, n_out), 1)
    return (r == 2 * c).astype(jnp.float32)


def _max_pool_2x2(y, sl, sr):
    """2x2 / stride-2 max pool (floor) of a 2-D value.

    Adjacent-max over rows/cols (contiguous static slices only), then even-index
    compaction via 0/1 selection matmuls -- avoids strided slices and reshapes.
    """
    a = jnp.maximum(y[:-1, :], y[1:, :])
    a = jnp.maximum(a[:, :-1], a[:, 1:])
    a = jnp.dot(sl, a, preferred_element_type=jnp.float32)
    return jnp.dot(a, sr, preferred_element_type=jnp.float32)


# ---------------------------------------------------------------------------
# Fused forward kernel: one grid step == one image, everything stays in VMEM.
# ---------------------------------------------------------------------------
def _lenet_kernel(x_ref, w1_ref, b1_ref, w2_ref, b2_ref,
                  fc1w_ref, fc1b_ref, fc2w_ref, fc2b_ref, fc3w_ref, fc3b_ref,
                  o_ref):
    f32 = jnp.float32
    img = x_ref[0, 0]                                        # (32, 32)

    # ---- conv1 (1 -> 6, 3x3, VALID) + ReLU + 2x2 max-pool --------------------
    # 9 shifted scalar FMAs per output channel on the VPU (weights from SMEM).
    shifts1 = [img[ky:ky + 30, kx:kx + 30]
               for ky in range(3) for kx in range(3)]        # 9 x (30, 30)
    sl1 = _even_row_select(15, 29)
    sr1 = _even_col_select(29, 15)
    pooled1 = []
    for c in range(6):
        acc = w1_ref[c, 0] * shifts1[0]
        for t in range(1, 9):
            acc = acc + w1_ref[c, t] * shifts1[t]
        y = jnp.maximum(acc + b1_ref[c], 0.0)                # (30, 30)
        pooled1.append(_max_pool_2x2(y, sl1, sr1))           # (15, 15)

    # ---- conv2 (6 -> 16, 3x3) + ReLU + pool + fc1 partial sums ---------------
    # Rolled over the 16 output channels (lax.fori_loop) to keep code size small;
    # each channel's pooled (6,6) block is consumed immediately by fc1, so the
    # torch (c, h, w) flatten never has to be materialized.
    sl2 = _even_row_select(6, 12)
    sr2 = _even_col_select(12, 6)

    def body(co, acc_fc1):
        acc = None
        for ci in range(6):
            p = pooled1[ci]
            for ky in range(3):
                for kx in range(3):
                    w = w2_ref[co, ci * 9 + ky * 3 + kx]     # SMEM scalar (dyn row)
                    term = w * p[ky:ky + 13, kx:kx + 13]
                    acc = term if acc is None else acc + term
        y = jnp.maximum(acc + b2_ref[co], 0.0)               # (13, 13)
        p2 = _max_pool_2x2(y, sl2, sr2)                      # (6, 6)
        # fc1 contribution of this output channel; weight layout is (c*6+h, w, n),
        # which matches torch's view(-1, 576) feature order (c, h, w).
        for h in range(6):
            w_blk = fc1w_ref[co * 6 + h]                     # (6, 120)
            acc_fc1 = acc_fc1 + jnp.dot(p2[h:h + 1, :], w_blk,
                                        preferred_element_type=f32)
        return acc_fc1

    acc_fc1 = lax.fori_loop(0, 16, body, jnp.zeros((1, 120), f32))

    # ---- fused MLP head: relu(fc1) -> relu(fc2) -> fc3 -----------------------
    h1 = jnp.maximum(acc_fc1 + fc1b_ref[...], 0.0)           # (1, 120)
    h2 = jnp.dot(h1, fc2w_ref[...], preferred_element_type=f32) + fc2b_ref[...]
    h2 = jnp.maximum(h2, 0.0)                                # (1, 84)
    out = jnp.dot(h2, fc3w_ref[...], preferred_element_type=f32) + fc3b_ref[...]
    o_ref[0] = out.astype(o_ref.dtype)                       # (1, 10)


# ---------------------------------------------------------------------------
# Wrapper: single pallas_call over the batch.
# ---------------------------------------------------------------------------
def net_forward(x_nchw, pp):
    """Forward pass of `Net`.  x_nchw: (B, 1, 32, 32) f32 -> (B, 10) f32."""
    B = x_nchw.shape[0]
    smem = pl.BlockSpec(memory_space=pltpu.MemorySpace.SMEM)
    out = pl.pallas_call(
        _lenet_kernel,
        out_shape=jax.ShapeDtypeStruct((B, 1, 10), jnp.float32),
        grid=(B,),
        in_specs=[
            pl.BlockSpec((1, 1, 32, 32), lambda i: (i, 0, 0, 0)),   # image
            smem,                                                   # conv1 w  (6, 9)
            smem,                                                   # conv1 b  (6,)
            smem,                                                   # conv2 w  (16, 54)
            smem,                                                   # conv2 b  (16,)
            pl.BlockSpec((96, 6, 120), lambda i: (0, 0, 0)),        # fc1 w
            pl.BlockSpec((1, 120), lambda i: (0, 0)),               # fc1 b
            pl.BlockSpec((120, 84), lambda i: (0, 0)),              # fc2 w
            pl.BlockSpec((1, 84), lambda i: (0, 0)),                # fc2 b
            pl.BlockSpec((84, 10), lambda i: (0, 0)),               # fc3 w
            pl.BlockSpec((1, 10), lambda i: (0, 0)),                # fc3 b
        ],
        out_specs=pl.BlockSpec((1, 1, 10), lambda i: (i, 0, 0)),
        compiler_params=pltpu.CompilerParams(
            dimension_semantics=("parallel",)),                     # v7x: 2 TCs split B
    )(x_nchw, pp["w1"], pp["b1"], pp["w2"], pp["b2"],
      pp["fc1_w"], pp["fc1_b"], pp["fc2_w"], pp["fc2_b"],
      pp["fc3_w"], pp["fc3_b"])
    return out.reshape(B, 10)


# ---------------------------------------------------------------------------
# One-time parameter preparation (all layout work hoisted out of the forward).
# ---------------------------------------------------------------------------
def prepare_params(p):
    return {
        "w1": p["conv1_w"].reshape(6, 9),             # (Cout, ky*3+kx)
        "b1": p["conv1_b"],                           # (6,)
        "w2": p["conv2_w"].reshape(16, 54),           # (Cout, ci*9+ky*3+kx)
        "b2": p["conv2_b"],                           # (16,)
        # torch flatten order is (c, h, w): store fc1 as (c*6+h, w, n).
        "fc1_w": p["fc1_w"].T.reshape(96, 6, 120),
        "fc1_b": p["fc1_b"].reshape(1, 120),
        "fc2_w": p["fc2_w"].T,                        # (120, 84)
        "fc2_b": p["fc2_b"].reshape(1, 84),
        "fc3_w": p["fc3_w"].T,                        # (84, 10)
        "fc3_b": p["fc3_b"].reshape(1, 10),
    }


# ---------------------------------------------------------------------------
# Deterministic parameter init (PyTorch-style U(-1/sqrt(fan_in), 1/sqrt(fan_in)))
# ---------------------------------------------------------------------------
def init_params(key):
    def uinit(k, shape, fan_in):
        bound = float(fan_in) ** -0.5
        return jax.random.uniform(k, shape, jnp.float32, -bound, bound)

    ks = jax.random.split(key, 10)
    return {
        "conv1_w": uinit(ks[0], (6, 1, 3, 3), 9),
        "conv1_b": uinit(ks[1], (6,), 9),
        "conv2_w": uinit(ks[2], (16, 6, 3, 3), 54),
        "conv2_b": uinit(ks[3], (16,), 54),
        "fc1_w": uinit(ks[4], (120, 576), 576),
        "fc1_b": uinit(ks[5], (120,), 576),
        "fc2_w": uinit(ks[6], (84, 120), 120),
        "fc2_b": uinit(ks[7], (84,), 120),
        "fc3_w": uinit(ks[8], (10, 84), 84),
        "fc3_b": uinit(ks[9], (10,), 84),
    }


# ---------------------------------------------------------------------------
# Pure-JAX reference (correctness check)
# ---------------------------------------------------------------------------
def ref_forward(x_nchw, p):
    hp = lax.Precision.HIGHEST

    def conv(x, w, b):
        y = lax.conv_general_dilated(x, w, (1, 1), "VALID",
                                     dimension_numbers=("NCHW", "OIHW", "NCHW"),
                                     precision=hp)
        return jax.nn.relu(y + b[None, :, None, None])

    def pool(x):
        return lax.reduce_window(x, -jnp.inf, lax.max,
                                 (1, 1, 2, 2), (1, 1, 2, 2), "VALID")

    x = pool(conv(x_nchw, p["conv1_w"], p["conv1_b"]))
    x = pool(conv(x, p["conv2_w"], p["conv2_b"]))
    x = x.reshape(x.shape[0], -1)
    x = jax.nn.relu(jnp.dot(x, p["fc1_w"].T, precision=hp) + p["fc1_b"])
    x = jax.nn.relu(jnp.dot(x, p["fc2_w"].T, precision=hp) + p["fc2_b"])
    return jnp.dot(x, p["fc3_w"].T, precision=hp) + p["fc3_b"]


if __name__ == "__main__":
    key = jax.random.PRNGKey(0)
    pkey, xkey = jax.random.split(key)
    params = init_params(pkey)
    prepped = prepare_params(params)          # one-time weight layout prep

    # NCHW input, as the PyTorch module expects: (batch=2, 1 channel, 32x32).
    x = jax.random.normal(xkey, (2, 1, 32, 32), jnp.float32)

    fwd = jax.jit(net_forward)
    out = jax.block_until_ready(fwd(x, prepped))

    ref = ref_forward(x, params)
    assert out.shape == (2, 10), out.shape
    assert bool(jnp.all(jnp.isfinite(out)))
    # conv/pool path is exact f32 (VPU FMAs + 0/1 selection matmuls); the fc layers
    # run on the MXU, so keep a modest (but 2.5x tighter than before) tolerance.
    assert bool(jnp.allclose(out, ref, atol=2e-2, rtol=2e-2)), (out, ref)

    print("KERNEL_OK")
</pallas_src>

<mosaic_0001>
module attributes {stable_mosaic.version = 11 : i64} {
  func.func @_lenet_kernel(%arg0: i32, %arg1: memref<1x1x32x32xf32, #tpu.memory_space<vmem>>, %arg2: memref<6x9xf32, #tpu.memory_space<smem>>, %arg3: memref<6xf32, #tpu.memory_space<smem>>, %arg4: memref<16x54xf32, #tpu.memory_space<smem>>, %arg5: memref<16xf32, #tpu.memory_space<smem>>, %arg6: memref<96x6x120xf32, #tpu.memory_space<vmem>>, %arg7: memref<1x120xf32, #tpu.memory_space<vmem>>, %arg8: memref<120x84xf32, #tpu.memory_space<vmem>>, %arg9: memref<1x84xf32, #tpu.memory_space<vmem>>, %arg10: memref<84x10xf32, #tpu.memory_space<vmem>>, %arg11: memref<1x10xf32, #tpu.memory_space<vmem>>, %arg12: memref<1x1x10xf32, #tpu.memory_space<vmem>>) attributes {dimension_semantics = [#tpu.dimension_semantics<parallel>], iteration_bounds = array<i64: 2>, scalar_prefetch = 0 : i64, scratch_operands = 0 : i64, tpu.core_type = #tpu.core_type<tc>, window_params = [{transform_indices = @transform_0, window_bounds = array<i64: 1, 1, 32, 32>}, {transform_indices = @transform_1, window_bounds = array<i64: 6, 9>}, {transform_indices = @transform_2, window_bounds = array<i64: 6>}, {transform_indices = @transform_3, window_bounds = array<i64: 16, 54>}, {transform_indices = @transform_4, window_bounds = array<i64: 16>}, {pipeline_mode = #tpu.pipeline_mode<synchronous>, transform_indices = @transform_5, window_bounds = array<i64: 96, 6, 120>}, {pipeline_mode = #tpu.pipeline_mode<synchronous>, transform_indices = @transform_6, window_bounds = array<i64: 1, 120>}, {pipeline_mode = #tpu.pipeline_mode<synchronous>, transform_indices = @transform_7, window_bounds = array<i64: 120, 84>}, {pipeline_mode = #tpu.pipeline_mode<synchronous>, transform_indices = @transform_8, window_bounds = array<i64: 1, 84>}, {pipeline_mode = #tpu.pipeline_mode<synchronous>, transform_indices = @transform_9, window_bounds = array<i64: 84, 10>}, {pipeline_mode = #tpu.pipeline_mode<synchronous>, transform_indices = @transform_10, window_bounds = array<i64: 1, 10>}, {transform_indices = @transform_11, window_bounds = array<i64: 1, 1, 10>}]} {
    %c0 = arith.constant 0 : index
    %c0_0 = arith.constant 0 : index
    %c0_1 = arith.constant 0 : index
    %c0_2 = arith.constant 0 : index
    %0 = vector.load %arg1[%c0, %c0_0, %c0_1, %c0_2] : memref<1x1x32x32xf32, #tpu.memory_space<vmem>>, vector<1x1x32x32xf32>
    %1 = vector.shape_cast %0 : vector<1x1x32x32xf32> to vector<32x32xf32>
    %2 = vector.extract_strided_slice %1 {offsets = [0, 0], sizes = [30, 30], strides = [1, 1]} : vector<32x32xf32> to vector<30x30xf32>
    %3 = vector.extract_strided_slice %1 {offsets = [0, 1], sizes = [30, 30], strides = [1, 1]} : vector<32x32xf32> to vector<30x30xf32>
    %4 = vector.extract_strided_slice %1 {offsets = [0, 2], sizes = [30, 30], strides = [1, 1]} : vector<32x32xf32> to vector<30x30xf32>
    %5 = vector.extract_strided_slice %1 {offsets = [1, 0], sizes = [30, 30], strides = [1, 1]} : vector<32x32xf32> to vector<30x30xf32>
    %6 = vector.extract_strided_slice %1 {offsets = [1, 1], sizes = [30, 30], strides = [1, 1]} : vector<32x32xf32> to vector<30x30xf32>
    %7 = vector.extract_strided_slice %1 {offsets = [1, 2], sizes = [30, 30], strides = [1, 1]} : vector<32x32xf32> to vector<30x30xf32>
    %8 = vector.extract_strided_slice %1 {offsets = [2, 0], sizes = [30, 30], strides = [1, 1]} : vector<32x32xf32> to vector<30x30xf32>
    %9 = vector.extract_strided_slice %1 {offsets = [2, 1], sizes = [30, 30], strides = [1, 1]} : vector<32x32xf32> to vector<30x30xf32>
    %10 = vector.extract_strided_slice %1 {offsets = [2, 2], sizes = [30, 30], strides = [1, 1]} : vector<32x32xf32> to vector<30x30xf32>
    %11 = tpu.iota {dimensions = array<i32: 0>} : vector<15x29xi32>
    %12 = tpu.iota {dimensions = array<i32: 1>} : vector<15x29xi32>
    %c2_i32 = arith.constant 2 : i32
    %13 = vector.broadcast %c2_i32 : i32 to vector<15x29xi32>
    %14 = arith.muli %13, %11 : vector<15x29xi32>
    %15 = arith.cmpi eq, %12, %14 : vector<15x29xi32>
    %16 = arith.extui %15 : vector<15x29xi1> to vector<15x29xi32>
    %17 = arith.sitofp %16 : vector<15x29xi32> to vector<15x29xf32>
    %18 = tpu.iota {dimensions = array<i32: 0>} : vector<29x15xi32>
    %19 = tpu.iota {dimensions = array<i32: 1>} : vector<29x15xi32>
    %c2_i32_3 = arith.constant 2 : i32
    %20 = vector.broadcast %c2_i32_3 : i32 to vector<29x15xi32>
    %21 = arith.muli %20, %19 : vector<29x15xi32>
    %22 = arith.cmpi eq, %18, %21 : vector<29x15xi32>
    %23 = arith.extui %22 : vector<29x15xi1> to vector<29x15xi32>
    %24 = arith.sitofp %23 : vector<29x15xi32> to vector<29x15xf32>
    %c0_4 = arith.constant 0 : index
    %c0_5 = arith.constant 0 : index
    %25 = memref.load %arg2[%c0_4, %c0_5] : memref<6x9xf32, #tpu.memory_space<smem>>
    %26 = vector.broadcast %25 : f32 to vector<30x30xf32>
    %27 = arith.mulf %26, %2 : vector<30x30xf32>
    %c0_6 = arith.constant 0 : index
    %c1 = arith.constant 1 : index
    %28 = memref.load %arg2[%c0_6, %c1] : memref<6x9xf32, #tpu.memory_space<smem>>
    %29 = vector.broadcast %28 : f32 to vector<30x30xf32>
    %30 = arith.mulf %29, %3 : vector<30x30xf32>
    %31 = arith.addf %27, %30 : vector<30x30xf32>
    %c0_7 = arith.constant 0 : index
    %c2 = arith.constant 2 : index
    %32 = memref.load %arg2[%c0_7, %c2] : memref<6x9xf32, #tpu.memory_space<smem>>
    %33 = vector.broadcast %32 : f32 to vector<30x30xf32>
    %34 = arith.mulf %33, %4 : vector<30x30xf32>
    %35 = arith.addf %31, %34 : vector<30x30xf32>
    %c0_8 = arith.constant 0 : index
    %c3 = arith.constant 3 : index
    %36 = memref.load %arg2[%c0_8, %c3] : memref<6x9xf32, #tpu.memory_space<smem>>
    %37 = vector.broadcast %36 : f32 to vector<30x30xf32>
    %38 = arith.mulf %37, %5 : vector<30x30xf32>
    %39 = arith.addf %35, %38 : vector<30x30xf32>
    %c0_9 = arith.constant 0 : index
    %c4 = arith.constant 4 : index
    %40 = memref.load %arg2[%c0_9, %c4] : memref<6x9xf32, #tpu.memory_space<smem>>
    %41 = vector.broadcast %40 : f32 to vector<30x30xf32>
    %42 = arith.mulf %41, %6 : vector<30x30xf32>
    %43 = arith.addf %39, %42 : vector<30x30xf32>
    %c0_10 = arith.constant 0 : index
    %c5 = arith.constant 5 : index
    %44 = memref.load %arg2[%c0_10, %c5] : memref<6x9xf32, #tpu.memory_space<smem>>
    %45 = vector.broadcast %44 : f32 to vector<30x30xf32>
    %46 = arith.mulf %45, %7 : vector<30x30xf32>
    %47 = arith.addf %43, %46 : vector<30x30xf32>
    %c0_11 = arith.constant 0 : index
    %c6 = arith.constant 6 : index
    %48 = memref.load %arg2[%c0_11, %c6] : memref<6x9xf32, #tpu.memory_space<smem>>
    %49 = vector.broadcast %48 : f32 to vector<30x30xf32>
    %50 = arith.mulf %49, %8 : vector<30x30xf32>
    %51 = arith.addf %47, %50 : vector<30x30xf32>
    %c0_12 = arith.constant 0 : index
    %c7 = arith.constant 7 : index
    %52 = memref.load %arg2[%c0_12, %c7] : memref<6x9xf32, #tpu.memory_space<smem>>
    %53 = vector.broadcast %52 : f32 to vector<30x30xf32>
    %54 = arith.mulf %53, %9 : vector<30x30xf32>
    %55 = arith.addf %51, %54 : vector<30x30xf32>
    %c0_13 = arith.constant 0 : index
    %c8 = arith.constant 8 : index
    %56 = memref.load %arg2[%c0_13, %c8] : memref<6x9xf32, #tpu.memory_space<smem>>
    %57 = vector.broadcast %56 : f32 to vector<30x30xf32>
    %58 = arith.mulf %57, %10 : vector<30x30xf32>
    %59 = arith.addf %55, %58 : vector<30x30xf32>
    %c0_14 = arith.constant 0 : index
    %60 = memref.load %arg3[%c0_14] : memref<6xf32, #tpu.memory_space<smem>>
    %61 = vector.broadcast %60 : f32 to vector<30x30xf32>
    %62 = arith.addf %59, %61 : vector<30x30xf32>
    %cst = arith.constant 0.000000e+00 : f32
    %63 = vector.broadcast %cst : f32 to vector<30x30xf32>
    %64 = arith.maximumf %62, %63 : vector<30x30xf32>
    %65 = vector.extract_strided_slice %64 {offsets = [0, 0], sizes = [29, 30], strides = [1, 1]} : vector<30x30xf32> to vector<29x30xf32>
    %66 = vector.extract_strided_slice %64 {offsets = [1, 0], sizes = [29, 30], strides = [1, 1]} : vector<30x30xf32> to vector<29x30xf32>
    %67 = arith.maximumf %65, %66 : vector<29x30xf32>
    %68 = vector.extract_strided_slice %67 {offsets = [0, 0], sizes = [29, 29], strides = [1, 1]} : vector<29x30xf32> to vector<29x29xf32>
    %69 = vector.extract_strided_slice %67 {offsets = [0, 1], sizes = [29, 29], strides = [1, 1]} : vector<29x30xf32> to vector<29x29xf32>
    %70 = arith.maximumf %68, %69 : vector<29x29xf32>
    %cst_15 = arith.constant dense<0.000000e+00> : vector<15x29xf32>
    %71 = tpu.matmul %17, %70, %cst_15 {dimension_numbers = #tpu.dot_dimension_numbers<[1], [0], [0], [1], [0, 0, 1, 1], [], []>} : vector<15x29xf32>, vector<29x29xf32>, vector<15x29xf32> -> vector<15x29xf32>
    %cst_16 = arith.constant dense<0.000000e+00> : vector<15x15xf32>
    %72 = tpu.matmul %71, %24, %cst_16 {dimension_numbers = #tpu.dot_dimension_numbers<[1], [0], [0], [1], [0, 0, 1, 1], [], []>} : vector<15x29xf32>, vector<29x15xf32>, vector<15x15xf32> -> vector<15x15xf32>
    %c1_17 = arith.constant 1 : index
    %c0_18 = arith.constant 0 : index
    %73 = memref.load %arg2[%c1_17, %c0_18] : memref<6x9xf32, #tpu.memory_space<smem>>
    %74 = vector.broadcast %73 : f32 to vector<30x30xf32>
    %75 = arith.mulf %74, %2 : vector<30x30xf32>
    %c1_19 = arith.constant 1 : index
    %c1_20 = arith.constant 1 : index
    %76 = memref.load %arg2[%c1_19, %c1_20] : memref<6x9xf32, #tpu.memory_space<smem>>
    %77 = vector.broadcast %76 : f32 to vector<30x30xf32>
    %78 = arith.mulf %77, %3 : vector<30x30xf32>
    %79 = arith.addf %75, %78 : vector<30x30xf32>
    %c1_21 = arith.constant 1 : index
    %c2_22 = arith.constant 2 : index
    %80 = memref.load %arg2[%c1_21, %c2_22] : memref<6x9xf32, #tpu.memory_space<smem>>
    %81 = vector.broadcast %80 : f32 to vector<30x30xf32>
    %82 = arith.mulf %81, %4 : vector<30x30xf32>
    %83 = arith.addf %79, %82 : vector<30x30xf32>
    %c1_23 = arith.constant 1 : index
    %c3_24 = arith.constant 3 : index
    %84 = memref.load %arg2[%c1_23, %c3_24] : memref<6x9xf32, #tpu.memory_space<smem>>
    %85 = vector.broadcast %84 : f32 to vector<30x30xf32>
    %86 = arith.mulf %85, %5 : vector<30x30xf32>
    %87 = arith.addf %83, %86 : vector<30x30xf32>
    %c1_25 = arith.constant 1 : index
    %c4_26 = arith.constant 4 : index
    %88 = memref.load %arg2[%c1_25, %c4_26] : memref<6x9xf32, #tpu.memory_space<smem>>
    %89 = vector.broadcast %88 : f32 to vector<30x30xf32>
    %90 = arith.mulf %89, %6 : vector<30x30xf32>
    %91 = arith.addf %87, %90 : vector<30x30xf32>
    %c1_27 = arith.constant 1 : index
    %c5_28 = arith.constant 5 : index
    %92 = memref.load %arg2[%c1_27, %c5_28] : memref<6x9xf32, #tpu.memory_space<smem>>
    %93 = vector.broadcast %92 : f32 to vector<30x30xf32>
    %94 = arith.mulf %93, %7 : vector<30x30xf32>
    %95 = arith.addf %91, %94 : vector<30x30xf32>
    %c1_29 = arith.constant 1 : index
    %c6_30 = arith.constant 6 : index
    %96 = memref.load %arg2[%c1_29, %c6_30] : memref<6x9xf32, #tpu.memory_space<smem>>
    %97 = vector.broadcast %96 : f32 to vector<30x30xf32>
    %98 = arith.mulf %97, %8 : vector<30x30xf32>
    %99 = arith.addf %95, %98 : vector<30x30xf32>
    %c1_31 = arith.constant 1 : index
    %c7_32 = arith.constant 7 : index
    %100 = memref.load %arg2[%c1_31, %c7_32] : memref<6x9xf32, #tpu.memory_space<smem>>
    %101 = vector.broadcast %100 : f32 to vector<30x30xf32>
    %102 = arith.mulf %101, %9 : vector<30x30xf32>
    %103 = arith.addf %99, %102 : vector<30x30xf32>
    %c1_33 = arith.constant 1 : index
    %c8_34 = arith.constant 8 : index
    %104 = memref.load %arg2[%c1_33, %c8_34] : memref<6x9xf32, #tpu.memory_space<smem>>
    %105 = vector.broadcast %104 : f32 to vector<30x30xf32>
    %106 = arith.mulf %105, %10 : vector<30x30xf32>
    %107 = arith.addf %103, %106 : vector<30x30xf32>
    %c1_35 = arith.constant 1 : index
    %108 = memref.load %arg3[%c1_35] : memref<6xf32, #tpu.memory_space<smem>>
    %109 = vector.broadcast %108 : f32 to vector<30x30xf32>
    %110 = arith.addf %107, %109 : vector<30x30xf32>
    %cst_36 = arith.constant 0.000000e+00 : f32
    %111 = vector.broadcast %cst_36 : f32 to vector<30x30xf32>
    %112 = arith.maximumf %110, %111 : vector<30x30xf32>
    %113 = vector.extract_strided_slice %112 {offsets = [0, 0], sizes = [29, 30], strides = [1, 1]} : vector<30x30xf32> to vector<29x30xf32>
    %114 = vector.extract_strided_slice %112 {offsets = [1, 0], sizes = [29, 30], strides = [1, 1]} : vector<30x30xf32> to vector<29x30xf32>
    %115 = arith.maximumf %113, %114 : vector<29x30xf32>
    %116 = vector.extract_strided_slice %115 {offsets = [0, 0], sizes = [29, 29], strides = [1, 1]} : vector<29x30xf32> to vector<29x29xf32>
    %117 = vector.extract_strided_slice %115 {offsets = [0, 1], sizes = [29, 29], strides = [1, 1]} : vector<29x30xf32> to vector<29x29xf32>
    %118 = arith.maximumf %116, %117 : vector<29x29xf32>
    %cst_37 = arith.constant dense<0.000000e+00> : vector<15x29xf32>
    %119 = tpu.matmul %17, %118, %cst_37 {dimension_numbers = #tpu.dot_dimension_numbers<[1], [0], [0], [1], [0, 0, 1, 1], [], []>} : vector<15x29xf32>, vector<29x29xf32>, vector<15x29xf32> -> vector<15x29xf32>
    %cst_38 = arith.constant dense<0.000000e+00> : vector<15x15xf32>
    %120 = tpu.matmul %119, %24, %cst_38 {dimension_numbers = #tpu.dot_dimension_numbers<[1], [0], [0], [1], [0, 0, 1, 1], [], []>} : vector<15x29xf32>, vector<29x15xf32>, vector<15x15xf32> -> vector<15x15xf32>
    %c2_39 = arith.constant 2 : index
    %c0_40 = arith.constant 0 : index
    %121 = memref.load %arg2[%c2_39, %c0_40] : memref<6x9xf32, #tpu.memory_space<smem>>
    %122 = vector.broadcast %121 : f32 to vector<30x30xf32>
    %123 = arith.mulf %122, %2 : vector<30x30xf32>
    %c2_41 = arith.constant 2 : index
    %c1_42 = arith.constant 1 : index
    %124 = memref.load %arg2[%c2_41, %c1_42] : memref<6x9xf32, #tpu.memory_space<smem>>
    %125 = vector.broadcast %124 : f32 to vector<30x30xf32>
    %126 = arith.mulf %125, %3 : vector<30x30xf32>
    %127 = arith.addf %123, %126 : vector<30x30xf32>
    %c2_43 = arith.constant 2 : index
    %c2_44 = arith.constant 2 : index
    %128 = memref.load %arg2[%c2_43, %c2_44] : memref<6x9xf32, #tpu.memory_space<smem>>
    %129 = vector.broadcast %128 : f32 to vector<30x30xf32>
    %130 = arith.mulf %129, %4 : vector<30x30xf32>
    %131 = arith.addf %127, %130 : vector<30x30xf32>
    %c2_45 = arith.constant 2 : index
    %c3_46 = arith.constant 3 : index
    %132 = memref.load %arg2[%c2_45, %c3_46] : memref<6x9xf32, #tpu.memory_space<smem>>
    %133 = vector.broadcast %132 : f32 to vector<30x30xf32>
    %134 = arith.mulf %133, %5 : vector<30x30xf32>
    %135 = arith.addf %131, %134 : vector<30x30xf32>
    %c2_47 = arith.constant 2 : index
    %c4_48 = arith.constant 4 : index
    %136 = memref.load %arg2[%c2_47, %c4_48] : memref<6x9xf32, #tpu.memory_space<smem>>
    %137 = vector.broadcast %136 : f32 to vector<30x30xf32>
    %138 = arith.mulf %137, %6 : vector<30x30xf32>
    %139 = arith.addf %135, %138 : vector<30x30xf32>
    %c2_49 = arith.constant 2 : index
    %c5_50 = arith.constant 5 : index
    %140 = memref.load %arg2[%c2_49, %c5_50] : memref<6x9xf32, #tpu.memory_space<smem>>
    %141 = vector.broadcast %140 : f32 to vector<30x30xf32>
    %142 = arith.mulf %141, %7 : vector<30x30xf32>
    %143 = arith.addf %139, %142 : vector<30x30xf32>
    %c2_51 = arith.constant 2 : index
    %c6_52 = arith.constant 6 : index
    %144 = memref.load %arg2[%c2_51, %c6_52] : memref<6x9xf32, #tpu.memory_space<smem>>
    %145 = vector.broadcast %144 : f32 to vector<30x30xf32>
    %146 = arith.mulf %145, %8 : vector<30x30xf32>
    %147 = arith.addf %143, %146 : vector<30x30xf32>
    %c2_53 = arith.constant 2 : index
    %c7_54 = arith.constant 7 : index
    %148 = memref.load %arg2[%c2_53, %c7_54] : memref<6x9xf32, #tpu.memory_space<smem>>
    %149 = vector.broadcast %148 : f32 to vector<30x30xf32>
    %150 = arith.mulf %149, %9 : vector<30x30xf32>
    %151 = arith.addf %147, %150 : vector<30x30xf32>
    %c2_55 = arith.constant 2 : index
    %c8_56 = arith.constant 8 : index
    %152 = memref.load %arg2[%c2_55, %c8_56] : memref<6x9xf32, #tpu.memory_space<smem>>
    %153 = vector.broadcast %152 : f32 to vector<30x30xf32>
    %154 = arith.mulf %153, %10 : vector<30x30xf32>
    %155 = arith.addf %151, %154 : vector<30x30xf32>
    %c2_57 = arith.constant 2 : index
    %156 = memref.load %arg3[%c2_57] : memref<6xf32, #tpu.memory_space<smem>>
    %157 = vector.broadcast %156 : f32 to vector<30x30xf32>
    %158 = arith.addf %155, %157 : vector<30x30xf32>
    %cst_58 = arith.constant 0.000000e+00 : f32
    %159 = vector.broadcast %cst_58 : f32 to vector<30x30xf32>
    %160 = arith.maximumf %158, %159 : vector<30x30xf32>
    %161 = vector.extract_strided_slice %160 {offsets = [0, 0], sizes = [29, 30], strides = [1, 1]} : vector<30x30xf32> to vector<29x30xf32>
    %162 = vector.extract_strided_slice %160 {offsets = [1, 0], sizes = [29, 30], strides = [1, 1]} : vector<30x30xf32> to vector<29x30xf32>
    %163 = arith.maximumf %161, %162 : vector<29x30xf32>
    %164 = vector.extract_strided_slice %163 {offsets = [0, 0], sizes = [29, 29], strides = [1, 1]} : vector<29x30xf32> to vector<29x29xf32>
    %165 = vector.extract_strided_slice %163 {offsets = [0, 1], sizes = [29, 29], strides = [1, 1]} : vector<29x30xf32> to vector<29x29xf32>
    %166 = arith.maximumf %164, %165 : vector<29x29xf32>
    %cst_59 = arith.constant dense<0.000000e+00> : vector<15x29xf32>
    %167 = tpu.matmul %17, %166, %cst_59 {dimension_numbers = #tpu.dot_dimension_numbers<[1], [0], [0], [1], [0, 0, 1, 1], [], []>} : vector<15x29xf32>, vector<29x29xf32>, vector<15x29xf32> -> vector<15x29xf32>
    %cst_60 = arith.constant dense<0.000000e+00> : vector<15x15xf32>
    %168 = tpu.matmul %167, %24, %cst_60 {dimension_numbers = #tpu.dot_dimension_numbers<[1], [0], [0], [1], [0, 0, 1, 1], [], []>} : vector<15x29xf32>, vector<29x15xf32>, vector<15x15xf32> -> vector<15x15xf32>
    %c3_61 = arith.constant 3 : index
    %c0_62 = arith.constant 0 : index
    %169 = memref.load %arg2[%c3_61, %c0_62] : memref<6x9xf32, #tpu.memory_space<smem>>
    %170 = vector.broadcast %169 : f32 to vector<30x30xf32>
    %171 = arith.mulf %170, %2 : vector<30x30xf32>
    %c3_63 = arith.constant 3 : index
    %c1_64 = arith.constant 1 : index
    %172 = memref.load %arg2[%c3_63, %c1_64] : memref<6x9xf32, #tpu.memory_space<smem>>
    %173 = vector.broadcast %172 : f32 to vector<30x30xf32>
    %174 = arith.mulf %173, %3 : vector<30x30xf32>
    %175 = arith.addf %171, %174 : vector<30x30xf32>
    %c3_65 = arith.constant 3 : index
    %c2_66 = arith.constant 2 : index
    %176 = memref.load %arg2[%c3_65, %c2_66] : memref<6x9xf32, #tpu.memory_space<smem>>
    %177 = vector.broadcast %176 : f32 to vector<30x30xf32>
    %178 = arith.mulf %177, %4 : vector<30x30xf32>
    %179 = arith.addf %175, %178 : vector<30x30xf32>
    %c3_67 = arith.constant 3 : index
    %c3_68 = arith.constant 3 : index
    %180 = memref.load %arg2[%c3_67, %c3_68] : memref<6x9xf32, #tpu.memory_space<smem>>
    %181 = vector.broadcast %180 : f32 to vector<30x30xf32>
    %182 = arith.mulf %181, %5 : vector<30x30xf32>
    %183 = arith.addf %179, %182 : vector<30x30xf32>
    %c3_69 = arith.constant 3 : index
    %c4_70 = arith.constant 4 : index
    %184 = memref.load %arg2[%c3_69, %c4_70] : memref<6x9xf32, #tpu.memory_space<smem>>
    %185 = vector.broadcast %184 : f32 to vector<30x30xf32>
    %186 = arith.mulf %185, %6 : vector<30x30xf32>
    %187 = arith.addf %183, %186 : vector<30x30xf32>
    %c3_71 = arith.constant 3 : index
    %c5_72 = arith.constant 5 : index
    %188 = memref.load %arg2[%c3_71, %c5_72] : memref<6x9xf32, #tpu.memory_space<smem>>
    %189 = vector.broadcast %188 : f32 to vector<30x30xf32>
    %190 = arith.mulf %189, %7 : vector<30x30xf32>
    %191 = arith.addf %187, %190 : vector<30x30xf32>
    %c3_73 = arith.constant 3 : index
    %c6_74 = arith.constant 6 : index
    %192 = memref.load %arg2[%c3_73, %c6_74] : memref<6x9xf32, #tpu.memory_space<smem>>
    %193 = vector.broadcast %192 : f32 to vector<30x30xf32>
    %194 = arith.mulf %193, %8 : vector<30x30xf32>
    %195 = arith.addf %191, %194 : vector<30x30xf32>
    %c3_75 = arith.constant 3 : index
    %c7_76 = arith.constant 7 : index
    %196 = memref.load %arg2[%c3_75, %c7_76] : memref<6x9xf32, #tpu.memory_space<smem>>
    %197 = vector.broadcast %196 : f32 to vector<30x30xf32>
    %198 = arith.mulf %197, %9 : vector<30x30xf32>
    %199 = arith.addf %195, %198 : vector<30x30xf32>
    %c3_77 = arith.constant 3 : index
    %c8_78 = arith.constant 8 : index
    %200 = memref.load %arg2[%c3_77, %c8_78] : memref<6x9xf32, #tpu.memory_space<smem>>
    %201 = vector.broadcast %200 : f32 to vector<30x30xf32>
    %202 = arith.mulf %201, %10 : vector<30x30xf32>
    %203 = arith.addf %199, %202 : vector<30x30xf32>
    %c3_79 = arith.constant 3 : index
    %204 = memref.load %arg3[%c3_79] : memref<6xf32, #tpu.memory_space<smem>>
    %205 = vector.broadcast %204 : f32 to vector<30x30xf32>
    %206 = arith.addf %203, %205 : vector<30x30xf32>
    %cst_80 = arith.constant 0.000000e+00 : f32
    %207 = vector.broadcast %cst_80 : f32 to vector<30x30xf32>
    %208 = arith.maximumf %206, %207 : vector<30x30xf32>
    %209 = vector.extract_strided_slice %208 {offsets = [0, 0], sizes = [29, 30], strides = [1, 1]} : vector<30x30xf32> to vector<29x30xf32>
    %210 = vector.extract_strided_slice %208 {offsets = [1, 0], sizes = [29, 30], strides = [1, 1]} : vector<30x30xf32> to vector<29x30xf32>
    %211 = arith.maximumf %209, %210 : vector<29x30xf32>
    %212 = vector.extract_strided_slice %211 {offsets = [0, 0], sizes = [29, 29], strides = [1, 1]} : vector<29x30xf32> to vector<29x29xf32>
    %213 = vector.extract_strided_slice %211 {offsets = [0, 1], sizes = [29, 29], strides = [1, 1]} : vector<29x30xf32> to vector<29x29xf32>
    %214 = arith.maximumf %212, %213 : vector<29x29xf32>
    %cst_81 = arith.constant dense<0.000000e+00> : vector<15x29xf32>
    %215 = tpu.matmul %17, %214, %cst_81 {dimension_numbers = #tpu.dot_dimension_numbers<[1], [0], [0], [1], [0, 0, 1, 1], [], []>} : vector<15x29xf32>, vector<29x29xf32>, vector<15x29xf32> -> vector<15x29xf32>
    %cst_82 = arith.constant dense<0.000000e+00> : vector<15x15xf32>
    %216 = tpu.matmul %215, %24, %cst_82 {dimension_numbers = #tpu.dot_dimension_numbers<[1], [0], [0], [1], [0, 0, 1, 1], [], []>} : vector<15x29xf32>, vector<29x15xf32>, vector<15x15xf32> -> vector<15x15xf32>
    %c4_83 = arith.constant 4 : index
    %c0_84 = arith.constant 0 : index
    %217 = memref.load %arg2[%c4_83, %c0_84] : memref<6x9xf32, #tpu.memory_space<smem>>
    %218 = vector.broadcast %217 : f32 to vector<30x30xf32>
    %219 = arith.mulf %218, %2 : vector<30x30xf32>
    %c4_85 = arith.constant 4 : index
    %c1_86 = arith.constant 1 : index
    %220 = memref.load %arg2[%c4_85, %c1_86] : memref<6x9xf32, #tpu.memory_space<smem>>
    %221 = vector.broadcast %220 : f32 to vector<30x30xf32>
    %222 = arith.mulf %221, %3 : vector<30x30xf32>
    %223 = arith.addf %219, %222 : vector<30x30xf32>
    %c4_87 = arith.constant 4 : index
    %c2_88 = arith.constant 2 : index
    %224 = memref.load %arg2[%c4_87, %c2_88] : memref<6x9xf32, #tpu.memory_space<smem>>
    %225 = vector.broadcast %224 : f32 to vector<30x30xf32>
    %226 = arith.mulf %225, %4 : vector<30x30xf32>
    %227 = arith.addf %223, %226 : vector<30x30xf32>
    %c4_89 = arith.constant 4 : index
    %c3_90 = arith.constant 3 : index
    %228 = memref.load %arg2[%c4_89, %c3_90] : memref<6x9xf32, #tpu.memory_space<smem>>
    %229 = vector.broadcast %228 : f32 to vector<30x30xf32>
    %230 = arith.mulf %229, %5 : vector<30x30xf32>
    %231 = arith.addf %227, %230 : vector<30x30xf32>
    %c4_91 = arith.constant 4 : index
    %c4_92 = arith.constant 4 : index
    %232 = memref.load %arg2[%c4_91, %c4_92] : memref<6x9xf32, #tpu.memory_space<smem>>
    %233 = vector.broadcast %232 : f32 to vector<30x30xf32>
    %234 = arith.mulf %233, %6 : vector<30x30xf32>
    %235 = arith.addf %231, %234 : vector<30x30xf32>
    %c4_93 = arith.constant 4 : index
    %c5_94 = arith.constant 5 : index
    %236 = memref.load %arg2[%c4_93, %c5_94] : memref<6x9xf32, #tpu.memory_space<smem>>
    %237 = vector.broadcast %236 : f32 to vector<30x30xf32>
    %238 = arith.mulf %237, %7 : vector<30x30xf32>
    %239 = arith.addf %235, %238 : vector<30x30xf32>
    %c4_95 = arith.constant 4 : index
    %c6_96 = arith.constant 6 : index
    %240 = memref.load %arg2[%c4_95, %c6_96] : memref<6x9xf32, #tpu.memory_space<smem>>
    %241 = vector.broadcast %240 : f32 to vector<30x30xf32>
    %242 = arith.mulf %241, %8 : vector<30x30xf32>
    %243 = arith.addf %239, %242 : vector<30x30xf32>
    %c4_97 = arith.constant 4 : index
    %c7_98 = arith.constant 7 : index
    %244 = memref.load %arg2[%c4_97, %c7_98] : memref<6x9xf32, #tpu.memory_space<smem>>
    %245 = vector.broadcast %244 : f32 to vector<30x30xf32>
    %246 = arith.mulf %245, %9 : vector<30x30xf32>
    %247 = arith.addf %243, %246 : vector<30x30xf32>
    %c4_99 = arith.constant 4 : index
    %c8_100 = arith.constant 8 : index
    %248 = memref.load %arg2[%c4_99, %c8_100] : memref<6x9xf32, #tpu.memory_space<smem>>
    %249 = vector.broadcast %248 : f32 to vector<30x30xf32>
    %250 = arith.mulf %249, %10 : vector<30x30xf32>
    %251 = arith.addf %247, %250 : vector<30x30xf32>
    %c4_101 = arith.constant 4 : index
    %252 = memref.load %arg3[%c4_101] : memref<6xf32, #tpu.memory_space<smem>>
    %253 = vector.broadcast %252 : f32 to vector<30x30xf32>
    %254 = arith.addf %251, %253 : vector<30x30xf32>
    %cst_102 = arith.constant 0.000000e+00 : f32
    %255 = vector.broadcast %cst_102 : f32 to vector<30x30xf32>
    %256 = arith.maximumf %254, %255 : vector<30x30xf32>
    %257 = vector.extract_strided_slice %256 {offsets = [0, 0], sizes = [29, 30], strides = [1, 1]} : vector<30x30xf32> to vector<29x30xf32>
    %258 = vector.extract_strided_slice %256 {offsets = [1, 0], sizes = [29, 30], strides = [1, 1]} : vector<30x30xf32> to vector<29x30xf32>
    %259 = arith.maximumf %257, %258 : vector<29x30xf32>
    %260 = vector.extract_strided_slice %259 {offsets = [0, 0], sizes = [29, 29], strides = [1, 1]} : vector<29x30xf32> to vector<29x29xf32>
    %261 = vector.extract_strided_slice %259 {offsets = [0, 1], sizes = [29, 29], strides = [1, 1]} : vector<29x30xf32> to vector<29x29xf32>
    %262 = arith.maximumf %260, %261 : vector<29x29xf32>
    %cst_103 = arith.constant dense<0.000000e+00> : vector<15x29xf32>
    %263 = tpu.matmul %17, %262, %cst_103 {dimension_numbers = #tpu.dot_dimension_numbers<[1], [0], [0], [1], [0, 0, 1, 1], [], []>} : vector<15x29xf32>, vector<29x29xf32>, vector<15x29xf32> -> vector<15x29xf32>
    %cst_104 = arith.constant dense<0.000000e+00> : vector<15x15xf32>
    %264 = tpu.matmul %263, %24, %cst_104 {dimension_numbers = #tpu.dot_dimension_numbers<[1], [0], [0], [1], [0, 0, 1, 1], [], []>} : vector<15x29xf32>, vector<29x15xf32>, vector<15x15xf32> -> vector<15x15xf32>
    %c5_105 = arith.constant 5 : index
    %c0_106 = arith.constant 0 : index
    %265 = memref.load %arg2[%c5_105, %c0_106] : memref<6x9xf32, #tpu.memory_space<smem>>
    %266 = vector.broadcast %265 : f32 to vector<30x30xf32>
    %267 = arith.mulf %266, %2 : vector<30x30xf32>
    %c5_107 = arith.constant 5 : index
    %c1_108 = arith.constant 1 : index
    %268 = memref.load %arg2[%c5_107, %c1_108] : memref<6x9xf32, #tpu.memory_space<smem>>
    %269 = vector.broadcast %268 : f32 to vector<30x30xf32>
    %270 = arith.mulf %269, %3 : vector<30x30xf32>
    %271 = arith.addf %267, %270 : vector<30x30xf32>
    %c5_109 = arith.constant 5 : index
    %c2_110 = arith.constant 2 : index
    %272 = memref.load %arg2[%c5_109, %c2_110] : memref<6x9xf32, #tpu.memory_space<smem>>
    %273 = vector.broadcast %272 : f32 to vector<30x30xf32>
    %274 = arith.mulf %273, %4 : vector<30x30xf32>
    %275 = arith.addf %271, %274 : vector<30x30xf32>
    %c5_111 = arith.constant 5 : index
    %c3_112 = arith.constant 3 : index
    %276 = memref.load %arg2[%c5_111, %c3_112] : memref<6x9xf32, #tpu.memory_space<smem>>
    %277 = vector.broadcast %276 : f32 to vector<30x30xf32>
    %278 = arith.mulf %277, %5 : vector<30x30xf32>
    %279 = arith.addf %275, %278 : vector<30x30xf32>
    %c5_113 = arith.constant 5 : index
    %c4_114 = arith.constant 4 : index
    %280 = memref.load %arg2[%c5_113, %c4_114] : memref<6x9xf32, #tpu.memory_space<smem>>
    %281 = vector.broadcast %280 : f32 to vector<30x30xf32>
    %282 = arith.mulf %281, %6 : vector<30x30xf32>
    %283 = arith.addf %279, %282 : vector<30x30xf32>
    %c5_115 = arith.constant 5 : index
    %c5_116 = arith.constant 5 : index
    %284 = memref.load %arg2[%c5_115, %c5_116] : memref<6x9xf32, #tpu.memory_space<smem>>
    %285 = vector.broadcast %284 : f32 to vector<30x30xf32>
    %286 = arith.mulf %285, %7 : vector<30x30xf32>
    %287 = arith.addf %283, %286 : vector<30x30xf32>
    %c5_117 = arith.constant 5 : index
    %c6_118 = arith.constant 6 : index
    %288 = memref.load %arg2[%c5_117, %c6_118] : memref<6x9xf32, #tpu.memory_space<smem>>
    %289 = vector.broadcast %288 : f32 to vector<30x30xf32>
    %290 = arith.mulf %289, %8 : vector<30x30xf32>
    %291 = arith.addf %287, %290 : vector<30x30xf32>
    %c5_119 = arith.constant 5 : index
    %c7_120 = arith.constant 7 : index
    %292 = memref.load %arg2[%c5_119, %c7_120] : memref<6x9xf32, #tpu.memory_space<smem>>
    %293 = vector.broadcast %292 : f32 to vector<30x30xf32>
    %294 = arith.mulf %293, %9 : vector<30x30xf32>
    %295 = arith.addf %291, %294 : vector<30x30xf32>
    %c5_121 = arith.constant 5 : index
    %c8_122 = arith.constant 8 : index
    %296 = memref.load %arg2[%c5_121, %c8_122] : memref<6x9xf32, #tpu.memory_space<smem>>
    %297 = vector.broadcast %296 : f32 to vector<30x30xf32>
    %298 = arith.mulf %297, %10 : vector<30x30xf32>
    %299 = arith.addf %295, %298 : vector<30x30xf32>
    %c5_123 = arith.constant 5 : index
    %300 = memref.load %arg3[%c5_123] : memref<6xf32, #tpu.memory_space<smem>>
    %301 = vector.broadcast %300 : f32 to vector<30x30xf32>
    %302 = arith.addf %299, %301 : vector<30x30xf32>
    %cst_124 = arith.constant 0.000000e+00 : f32
    %303 = vector.broadcast %cst_124 : f32 to vector<30x30xf32>
    %304 = arith.maximumf %302, %303 : vector<30x30xf32>
    %305 = vector.extract_strided_slice %304 {offsets = [0, 0], sizes = [29, 30], strides = [1, 1]} : vector<30x30xf32> to vector<29x30xf32>
    %306 = vector.extract_strided_slice %304 {offsets = [1, 0], sizes = [29, 30], strides = [1, 1]} : vector<30x30xf32> to vector<29x30xf32>
    %307 = arith.maximumf %305, %306 : vector<29x30xf32>
    %308 = vector.extract_strided_slice %307 {offsets = [0, 0], sizes = [29, 29], strides = [1, 1]} : vector<29x30xf32> to vector<29x29xf32>
    %309 = vector.extract_strided_slice %307 {offsets = [0, 1], sizes = [29, 29], strides = [1, 1]} : vector<29x30xf32> to vector<29x29xf32>
    %310 = arith.maximumf %308, %309 : vector<29x29xf32>
    %cst_125 = arith.constant dense<0.000000e+00> : vector<15x29xf32>
    %311 = tpu.matmul %17, %310, %cst_125 {dimension_numbers = #tpu.dot_dimension_numbers<[1], [0], [0], [1], [0, 0, 1, 1], [], []>} : vector<15x29xf32>, vector<29x29xf32>, vector<15x29xf32> -> vector<15x29xf32>
    %cst_126 = arith.constant dense<0.000000e+00> : vector<15x15xf32>
    %312 = tpu.matmul %311, %24, %cst_126 {dimension_numbers = #tpu.dot_dimension_numbers<[1], [0], [0], [1], [0, 0, 1, 1], [], []>} : vector<15x29xf32>, vector<29x15xf32>, vector<15x15xf32> -> vector<15x15xf32>
    %313 = tpu.iota {dimensions = array<i32: 0>} : vector<6x12xi32>
    %314 = tpu.iota {dimensions = array<i32: 1>} : vector<6x12xi32>
    %c2_i32_127 = arith.constant 2 : i32
    %315 = vector.broadcast %c2_i32_127 : i32 to vector<6x12xi32>
    %316 = arith.muli %315, %313 : vector<6x12xi32>
    %317 = arith.cmpi eq, %314, %316 : vector<6x12xi32>
    %318 = arith.extui %317 : vector<6x12xi1> to vector<6x12xi32>
    %319 = arith.sitofp %318 : vector<6x12xi32> to vector<6x12xf32>
    %320 = tpu.iota {dimensions = array<i32: 0>} : vector<12x6xi32>
    %321 = tpu.iota {dimensions = array<i32: 1>} : vector<12x6xi32>
    %c2_i32_128 = arith.constant 2 : i32
    %322 = vector.broadcast %c2_i32_128 : i32 to vector<12x6xi32>
    %323 = arith.muli %322, %321 : vector<12x6xi32>
    %324 = arith.cmpi eq, %320, %323 : vector<12x6xi32>
    %325 = arith.extui %324 : vector<12x6xi1> to vector<12x6xi32>
    %326 = arith.sitofp %325 : vector<12x6xi32> to vector<12x6xf32>
    %cst_129 = arith.constant 0.000000e+00 : f32
    %327 = vector.broadcast %cst_129 : f32 to vector<1x120xf32>
    %c0_i32 = arith.constant 0 : i32
    %c16_i32 = arith.constant 16 : i32
    %328 = arith.addi %c0_i32, %c16_i32 : i32
    %c1_i32 = arith.constant 1 : i32
    %329 = scf.for %arg13 = %c0_i32 to %328 step %c1_i32 iter_args(%arg14 = %327) -> (vector<1x120xf32>)  : i32 {
      %347 = arith.index_cast %arg13 : i32 to index
      %c0_148 = arith.constant 0 : index
      %348 = memref.load %arg4[%347, %c0_148] : memref<16x54xf32, #tpu.memory_space<smem>>
      %349 = vector.extract_strided_slice %72 {offsets = [0, 0], sizes = [13, 13], strides = [1, 1]} : vector<15x15xf32> to vector<13x13xf32>
      %350 = vector.broadcast %348 : f32 to vector<13x13xf32>
      %351 = arith.mulf %350, %349 : vector<13x13xf32>
      %352 = arith.index_cast %arg13 : i32 to index
      %c1_149 = arith.constant 1 : index
      %353 = memref.load %arg4[%352, %c1_149] : memref<16x54xf32, #tpu.memory_space<smem>>
      %354 = vector.extract_strided_slice %72 {offsets = [0, 1], sizes = [13, 13], strides = [1, 1]} : vector<15x15xf32> to vector<13x13xf32>
      %355 = vector.broadcast %353 : f32 to vector<13x13xf32>
      %356 = arith.mulf %355, %354 : vector<13x13xf32>
      %357 = arith.addf %351, %356 : vector<13x13xf32>
      %358 = arith.index_cast %arg13 : i32 to index
      %c2_150 = arith.constant 2 : index
      %359 = memref.load %arg4[%358, %c2_150] : memref<16x54xf32, #tpu.memory_space<smem>>
      %360 = vector.extract_strided_slice %72 {offsets = [0, 2], sizes = [13, 13], strides = [1, 1]} : vector<15x15xf32> to vector<13x13xf32>
      %361 = vector.broadcast %359 : f32 to vector<13x13xf32>
      %362 = arith.mulf %361, %360 : vector<13x13xf32>
      %363 = arith.addf %357, %362 : vector<13x13xf32>
      %364 = arith.index_cast %arg13 : i32 to index
      %c3_151 = arith.constant 3 : index
      %365 = memref.load %arg4[%364, %c3_151] : memref<16x54xf32, #tpu.memory_space<smem>>
      %366 = vector.extract_strided_slice %72 {offsets = [1, 0], sizes = [13, 13], strides = [1, 1]} : vector<15x15xf32> to vector<13x13xf32>
      %367 = vector.broadcast %365 : f32 to vector<13x13xf32>
      %368 = arith.mulf %367, %366 : vector<13x13xf32>
      %369 = arith.addf %363, %368 : vector<13x13xf32>
      %370 = arith.index_cast %arg13 : i32 to index
      %c4_152 = arith.constant 4 : index
      %371 = memref.load %arg4[%370, %c4_152] : memref<16x54xf32, #tpu.memory_space<smem>>
      %372 = vector.extract_strided_slice %72 {offsets = [1, 1], sizes = [13, 13], strides = [1, 1]} : vector<15x15xf32> to vector<13x13xf32>
      %373 = vector.broadcast %371 : f32 to vector<13x13xf32>
      %374 = arith.mulf %373, %372 : vector<13x13xf32>
      %375 = arith.addf %369, %374 : vector<13x13xf32>
      %376 = arith.index_cast %arg13 : i32 to index
      %c5_153 = arith.constant 5 : index
      %377 = memref.load %arg4[%376, %c5_153] : memref<16x54xf32, #tpu.memory_space<smem>>
      %378 = vector.extract_strided_slice %72 {offsets = [1, 2], sizes = [13, 13], strides = [1, 1]} : vector<15x15xf32> to vector<13x13xf32>
      %379 = vector.broadcast %377 : f32 to vector<13x13xf32>
      %380 = arith.mulf %379, %378 : vector<13x13xf32>
      %381 = arith.addf %375, %380 : vector<13x13xf32>
      %382 = arith.index_cast %arg13 : i32 to index
      %c6_154 = arith.constant 6 : index
      %383 = memref.load %arg4[%382, %c6_154] : memref<16x54xf32, #tpu.memory_space<smem>>
      %384 = vector.extract_strided_slice %72 {offsets = [2, 0], sizes = [13, 13], strides = [1, 1]} : vector<15x15xf32> to vector<13x13xf32>
      %385 = vector.broadcast %383 : f32 to vector<13x13xf32>
      %386 = arith.mulf %385, %384 : vector<13x13xf32>
      %387 = arith.addf %381, %386 : vector<13x13xf32>
      %388 = arith.index_cast %arg13 : i32 to index
      %c7_155 = arith.constant 7 : index
      %389 = memref.load %arg4[%388, %c7_155] : memref<16x54xf32, #tpu.memory_space<smem>>
      %390 = vector.extract_strided_slice %72 {offsets = [2, 1], sizes = [13, 13], strides = [1, 1]} : vector<15x15xf32> to vector<13x13xf32>
      %391 = vector.broadcast %389 : f32 to vector<13x13xf32>
      %392 = arith.mulf %391, %390 : vector<13x13xf32>
      %393 = arith.addf %387, %392 : vector<13x13xf32>
      %394 = arith.index_cast %arg13 : i32 to index
      %c8_156 = arith.constant 8 : index
      %395 = memref.load %arg4[%394, %c8_156] : memref<16x54xf32, #tpu.memory_space<smem>>
      %396 = vector.extract_strided_slice %72 {offsets = [2, 2], sizes = [13, 13], strides = [1, 1]} : vector<15x15xf32> to vector<13x13xf32>
      %397 = vector.broadcast %395 : f32 to vector<13x13xf32>
      %398 = arith.mulf %397, %396 : vector<13x13xf32>
      %399 = arith.addf %393, %398 : vector<13x13xf32>
      %400 = arith.index_cast %arg13 : i32 to index
      %c9 = arith.constant 9 : index
      %401 = memref.load %arg4[%400, %c9] : memref<16x54xf32, #tpu.memory_space<smem>>
      %402 = vector.extract_strided_slice %120 {offsets = [0, 0], sizes = [13, 13], strides = [1, 1]} : vector<15x15xf32> to vector<13x13xf32>
      %403 = vector.broadcast %401 : f32 to vector<13x13xf32>
      %404 = arith.mulf %403, %402 : vector<13x13xf32>
      %405 = arith.addf %399, %404 : vector<13x13xf32>
      %406 = arith.index_cast %arg13 : i32 to index
      %c10 = arith.constant 10 : index
      %407 = memref.load %arg4[%406, %c10] : memref<16x54xf32, #tpu.memory_space<smem>>
      %408 = vector.extract_strided_slice %120 {offsets = [0, 1], sizes = [13, 13], strides = [1, 1]} : vector<15x15xf32> to vector<13x13xf32>
      %409 = vector.broadcast %407 : f32 to vector<13x13xf32>
      %410 = arith.mulf %409, %408 : vector<13x13xf32>
      %411 = arith.addf %405, %410 : vector<13x13xf32>
      %412 = arith.index_cast %arg13 : i32 to index
      %c11 = arith.constant 11 : index
      %413 = memref.load %arg4[%412, %c11] : memref<16x54xf32, #tpu.memory_space<smem>>
      %414 = vector.extract_strided_slice %120 {offsets = [0, 2], sizes = [13, 13], strides = [1, 1]} : vector<15x15xf32> to vector<13x13xf32>
      %415 = vector.broadcast %413 : f32 to vector<13x13xf32>
      %416 = arith.mulf %415, %414 : vector<13x13xf32>
      %417 = arith.addf %411, %416 : vector<13x13xf32>
      %418 = arith.index_cast %arg13 : i32 to index
      %c12 = arith.constant 12 : index
      %419 = memref.load %arg4[%418, %c12] : memref<16x54xf32, #tpu.memory_space<smem>>
      %420 = vector.extract_strided_slice %120 {offsets = [1, 0], sizes = [13, 13], strides = [1, 1]} : vector<15x15xf32> to vector<13x13xf32>
      %421 = vector.broadcast %419 : f32 to vector<13x13xf32>
      %422 = arith.mulf %421, %420 : vector<13x13xf32>
      %423 = arith.addf %417, %422 : vector<13x13xf32>
      %424 = arith.index_cast %arg13 : i32 to index
      %c13 = arith.constant 13 : index
      %425 = memref.load %arg4[%424, %c13] : memref<16x54xf32, #tpu.memory_space<smem>>
      %426 = vector.extract_strided_slice %120 {offsets = [1, 1], sizes = [13, 13], strides = [1, 1]} : vector<15x15xf32> to vector<13x13xf32>
      %427 = vector.broadcast %425 : f32 to vector<13x13xf32>
      %428 = arith.mulf %427, %426 : vector<13x13xf32>
      %429 = arith.addf %423, %428 : vector<13x13xf32>
      %430 = arith.index_cast %arg13 : i32 to index
      %c14 = arith.constant 14 : index
      %431 = memref.load %arg4[%430, %c14] : memref<16x54xf32, #tpu.memory_space<smem>>
      %432 = vector.extract_strided_slice %120 {offsets = [1, 2], sizes = [13, 13], strides = [1, 1]} : vector<15x15xf32> to vector<13x13xf32>
      %433 = vector.broadcast %431 : f32 to vector<13x13xf32>
      %434 = arith.mulf %433, %432 : vector<13x13xf32>
      %435 = arith.addf %429, %434 : vector<13x13xf32>
      %436 = arith.index_cast %arg13 : i32 to index
      %c15 = arith.constant 15 : index
      %437 = memref.load %arg4[%436, %c15] : memref<16x54xf32, #tpu.memory_space<smem>>
      %438 = vector.extract_strided_slice %120 {offsets = [2, 0], sizes = [13, 13], strides = [1, 1]} : vector<15x15xf32> to vector<13x13xf32>
      %439 = vector.broadcast %437 : f32 to vector<13x13xf32>
      %440 = arith.mulf %439, %438 : vector<13x13xf32>
      %441 = arith.addf %435, %440 : vector<13x13xf32>
      %442 = arith.index_cast %arg13 : i32 to index
      %c16 = arith.constant 16 : index
      %443 = memref.load %arg4[%442, %c16] : memref<16x54xf32, #tpu.memory_space<smem>>
      %444 = vector.extract_strided_slice %120 {offsets = [2, 1], sizes = [13, 13], strides = [1, 1]} : vector<15x15xf32> to vector<13x13xf32>
      %445 = vector.broadcast %443 : f32 to vector<13x13xf32>
      %446 = arith.mulf %445, %444 : vector<13x13xf32>
      %447 = arith.addf %441, %446 : vector<13x13xf32>
      %448 = arith.index_cast %arg13 : i32 to index
      %c17 = arith.constant 17 : index
      %449 = memref.load %arg4[%448, %c17] : memref<16x54xf32, #tpu.memory_space<smem>>
      %450 = vector.extract_strided_slice %120 {offsets = [2, 2], sizes = [13, 13], strides = [1, 1]} : vector<15x15xf32> to vector<13x13xf32>
      %451 = vector.broadcast %449 : f32 to vector<13x13xf32>
      %452 = arith.mulf %451, %450 : vector<13x13xf32>
      %453 = arith.addf %447, %452 : vector<13x13xf32>
      %454 = arith.index_cast %arg13 : i32 to index
      %c18 = arith.constant 18 : index
      %455 = memref.load %arg4[%454, %c18] : memref<16x54xf32, #tpu.memory_space<smem>>
      %456 = vector.extract_strided_slice %168 {offsets = [0, 0], sizes = [13, 13], strides = [1, 1]} : vector<15x15xf32> to vector<13x13xf32>
      %457 = vector.broadcast %455 : f32 to vector<13x13xf32>
      %458 = arith.mulf %457, %456 : vector<13x13xf32>
      %459 = arith.addf %453, %458 : vector<13x13xf32>
      %460 = arith.index_cast %arg13 : i32 to index
      %c19 = arith.constant 19 : index
      %461 = memref.load %arg4[%460, %c19] : memref<16x54xf32, #tpu.memory_space<smem>>
      %462 = vector.extract_strided_slice %168 {offsets = [0, 1], sizes = [13, 13], strides = [1, 1]} : vector<15x15xf32> to vector<13x13xf32>
      %463 = vector.broadcast %461 : f32 to vector<13x13xf32>
      %464 = arith.mulf %463, %462 : vector<13x13xf32>
      %465 = arith.addf %459, %464 : vector<13x13xf32>
      %466 = arith.index_cast %arg13 : i32 to index
      %c20 = arith.constant 20 : index
      %467 = memref.load %arg4[%466, %c20] : memref<16x54xf32, #tpu.memory_space<smem>>
      %468 = vector.extract_strided_slice %168 {offsets = [0, 2], sizes = [13, 13], strides = [1, 1]} : vector<15x15xf32> to vector<13x13xf32>
      %469 = vector.broadcast %467 : f32 to vector<13x13xf32>
      %470 = arith.mulf %469, %468 : vector<13x13xf32>
      %471 = arith.addf %465, %470 : vector<13x13xf32>
      %472 = arith.index_cast %arg13 : i32 to index
      %c21 = arith.constant 21 : index
      %473 = memref.load %arg4[%472, %c21] : memref<16x54xf32, #tpu.memory_space<smem>>
      %474 = vector.extract_strided_slice %168 {offsets = [1, 0], sizes = [13, 13], strides = [1, 1]} : vector<15x15xf32> to vector<13x13xf32>
      %475 = vector.broadcast %473 : f32 to vector<13x13xf32>
      %476 = arith.mulf %475, %474 : vector<13x13xf32>
      %477 = arith.addf %471, %476 : vector<13x13xf32>
      %478 = arith.index_cast %arg13 : i32 to index
      %c22 = arith.constant 22 : index
      %479 = memref.load %arg4[%478, %c22] : memref<16x54xf32, #tpu.memory_space<smem>>
      %480 = vector.extract_strided_slice %168 {offsets = [1, 1], sizes = [13, 13], strides = [1, 1]} : vector<15x15xf32> to vector<13x13xf32>
      %481 = vector.broadcast %479 : f32 to vector<13x13xf32>
      %482 = arith.mulf %481, %480 : vector<13x13xf32>
      %483 = arith.addf %477, %482 : vector<13x13xf32>
      %484 = arith.index_cast %arg13 : i32 to index
      %c23 = arith.constant 23 : index
      %485 = memref.load %arg4[%484, %c23] : memref<16x54xf32, #tpu.memory_space<smem>>
      %486 = vector.extract_strided_slice %168 {offsets = [1, 2], sizes = [13, 13], strides = [1, 1]} : vector<15x15xf32> to vector<13x13xf32>
      %487 = vector.broadcast %485 : f32 to vector<13x13xf32>
      %488 = arith.mulf %487, %486 : vector<13x13xf32>
      %489 = arith.addf %483, %488 : vector<13x13xf32>
      %490 = arith.index_cast %arg13 : i32 to index
      %c24 = arith.constant 24 : index
      %491 = memref.load %arg4[%490, %c24] : memref<16x54xf32, #tpu.memory_space<smem>>
      %492 = vector.extract_strided_slice %168 {offsets = [2, 0], sizes = [13, 13], strides = [1, 1]} : vector<15x15xf32> to vector<13x13xf32>
      %493 = vector.broadcast %491 : f32 to vector<13x13xf32>
      %494 = arith.mulf %493, %492 : vector<13x13xf32>
      %495 = arith.addf %489, %494 : vector<13x13xf32>
      %496 = arith.index_cast %arg13 : i32 to index
      %c25 = arith.constant 25 : index
      %497 = memref.load %arg4[%496, %c25] : memref<16x54xf32, #tpu.memory_space<smem>>
      %498 = vector.extract_strided_slice %168 {offsets = [2, 1], sizes = [13, 13], strides = [1, 1]} : vector<15x15xf32> to vector<13x13xf32>
      %499 = vector.broadcast %497 : f32 to vector<13x13xf32>
      %500 = arith.mulf %499, %498 : vector<13x13xf32>
      %501 = arith.addf %495, %500 : vector<13x13xf32>
      %502 = arith.index_cast %arg13 : i32 to index
      %c26 = arith.constant 26 : index
      %503 = memref.load %arg4[%502, %c26] : memref<16x54xf32, #tpu.memory_space<smem>>
      %504 = vector.extract_strided_slice %168 {offsets = [2, 2], sizes = [13, 13], strides = [1, 1]} : vector<15x15xf32> to vector<13x13xf32>
      %505 = vector.broadcast %503 : f32 to vector<13x13xf32>
      %506 = arith.mulf %505, %504 : vector<13x13xf32>
      %507 = arith.addf %501, %506 : vector<13x13xf32>
      %508 = arith.index_cast %arg13 : i32 to index
      %c27 = arith.constant 27 : index
      %509 = memref.load %arg4[%508, %c27] : memref<16x54xf32, #tpu.memory_space<smem>>
      %510 = vector.extract_strided_slice %216 {offsets = [0, 0], sizes = [13, 13], strides = [1, 1]} : vector<15x15xf32> to vector<13x13xf32>
      %511 = vector.broadcast %509 : f32 to vector<13x13xf32>
      %512 = arith.mulf %511, %510 : vector<13x13xf32>
      %513 = arith.addf %507, %512 : vector<13x13xf32>
      %514 = arith.index_cast %arg13 : i32 to index
      %c28 = arith.constant 28 : index
      %515 = memref.load %arg4[%514, %c28] : memref<16x54xf32, #tpu.memory_space<smem>>
      %516 = vector.extract_strided_slice %216 {offsets = [0, 1], sizes = [13, 13], strides = [1, 1]} : vector<15x15xf32> to vector<13x13xf32>
      %517 = vector.broadcast %515 : f32 to vector<13x13xf32>
      %518 = arith.mulf %517, %516 : vector<13x13xf32>
      %519 = arith.addf %513, %518 : vector<13x13xf32>
      %520 = arith.index_cast %arg13 : i32 to index
      %c29 = arith.constant 29 : index
      %521 = memref.load %arg4[%520, %c29] : memref<16x54xf32, #tpu.memory_space<smem>>
      %522 = vector.extract_strided_slice %216 {offsets = [0, 2], sizes = [13, 13], strides = [1, 1]} : vector<15x15xf32> to vector<13x13xf32>
      %523 = vector.broadcast %521 : f32 to vector<13x13xf32>
      %524 = arith.mulf %523, %522 : vector<13x13xf32>
      %525 = arith.addf %519, %524 : vector<13x13xf32>
      %526 = arith.index_cast %arg13 : i32 to index
      %c30 = arith.constant 30 : index
      %527 = memref.load %arg4[%526, %c30] : memref<16x54xf32, #tpu.memory_space<smem>>
      %528 = vector.extract_strided_slice %216 {offsets = [1, 0], sizes = [13, 13], strides = [1, 1]} : vector<15x15xf32> to vector<13x13xf32>
      %529 = vector.broadcast %527 : f32 to vector<13x13xf32>
      %530 = arith.mulf %529, %528 : vector<13x13xf32>
      %531 = arith.addf %525, %530 : vector<13x13xf32>
      %532 = arith.index_cast %arg13 : i32 to index
      %c31 = arith.constant 31 : index
      %533 = memref.load %arg4[%532, %c31] : memref<16x54xf32, #tpu.memory_space<smem>>
      %534 = vector.extract_strided_slice %216 {offsets = [1, 1], sizes = [13, 13], strides = [1, 1]} : vector<15x15xf32> to vector<13x13xf32>
      %535 = vector.broadcast %533 : f32 to vector<13x13xf32>
      %536 = arith.mulf %535, %534 : vector<13x13xf32>
      %537 = arith.addf %531, %536 : vector<13x13xf32>
      %538 = arith.index_cast %arg13 : i32 to index
      %c32 = arith.constant 32 : index
      %539 = memref.load %arg4[%538, %c32] : memref<16x54xf32, #tpu.memory_space<smem>>
      %540 = vector.extract_strided_slice %216 {offsets = [1, 2], sizes = [13, 13], strides = [1, 1]} : vector<15x15xf32> to vector<13x13xf32>
      %541 = vector.broadcast %539 : f32 to vector<13x13xf32>
      %542 = arith.mulf %541, %540 : vector<13x13xf32>
      %543 = arith.addf %537, %542 : vector<13x13xf32>
      %544 = arith.index_cast %arg13 : i32 to index
      %c33 = arith.constant 33 : index
      %545 = memref.load %arg4[%544, %c33] : memref<16x54xf32, #tpu.memory_space<smem>>
      %546 = vector.extract_strided_slice %216 {offsets = [2, 0], sizes = [13, 13], strides = [1, 1]} : vector<15x15xf32> to vector<13x13xf32>
      %547 = vector.broadcast %545 : f32 to vector<13x13xf32>
      %548 = arith.mulf %547, %546 : vector<13x13xf32>
      %549 = arith.addf %543, %548 : vector<13x13xf32>
      %550 = arith.index_cast %arg13 : i32 to index
      %c34 = arith.constant 34 : index
      %551 = memref.load %arg4[%550, %c34] : memref<16x54xf32, #tpu.memory_space<smem>>
      %552 = vector.extract_strided_slice %216 {offsets = [2, 1], sizes = [13, 13], strides = [1, 1]} : vector<15x15xf32> to vector<13x13xf32>
      %553 = vector.broadcast %551 : f32 to vector<13x13xf32>
      %554 = arith.mulf %553, %552 : vector<13x13xf32>
      %555 = arith.addf %549, %554 : vector<13x13xf32>
      %556 = arith.index_cast %arg13 : i32 to index
      %c35 = arith.constant 35 : index
      %557 = memref.load %arg4[%556, %c35] : memref<16x54xf32, #tpu.memory_space<smem>>
      %558 = vector.extract_strided_slice %216 {offsets = [2, 2], sizes = [13, 13], strides = [1, 1]} : vector<15x15xf32> to vector<13x13xf32>
      %559 = vector.broadcast %557 : f32 to vector<13x13xf32>
      %560 = arith.mulf %559, %558 : vector<13x13xf32>
      %561 = arith.addf %555, %560 : vector<13x13xf32>
      %562 = arith.index_cast %arg13 : i32 to index
      %c36 = arith.constant 36 : index
      %563 = memref.load %arg4[%562, %c36] : memref<16x54xf32, #tpu.memory_space<smem>>
      %564 = vector.extract_strided_slice %264 {offsets = [0, 0], sizes = [13, 13], strides = [1, 1]} : vector<15x15xf32> to vector<13x13xf32>
      %565 = vector.broadcast %563 : f32 to vector<13x13xf32>
      %566 = arith.mulf %565, %564 : vector<13x13xf32>
      %567 = arith.addf %561, %566 : vector<13x13xf32>
      %568 = arith.index_cast %arg13 : i32 to index
      %c37 = arith.constant 37 : index
      %569 = memref.load %arg4[%568, %c37] : memref<16x54xf32, #tpu.memory_space<smem>>
      %570 = vector.extract_strided_slice %264 {offsets = [0, 1], sizes = [13, 13], strides = [1, 1]} : vector<15x15xf32> to vector<13x13xf32>
      %571 = vector.broadcast %569 : f32 to vector<13x13xf32>
      %572 = arith.mulf %571, %570 : vector<13x13xf32>
      %573 = arith.addf %567, %572 : vector<13x13xf32>
      %574 = arith.index_cast %arg13 : i32 to index
      %c38 = arith.constant 38 : index
      %575 = memref.load %arg4[%574, %c38] : memref<16x54xf32, #tpu.memory_space<smem>>
      %576 = vector.extract_strided_slice %264 {offsets = [0, 2], sizes = [13, 13], strides = [1, 1]} : vector<15x15xf32> to vector<13x13xf32>
      %577 = vector.broadcast %575 : f32 to vector<13x13xf32>
      %578 = arith.mulf %577, %576 : vector<13x13xf32>
      %579 = arith.addf %573, %578 : vector<13x13xf32>
      %580 = arith.index_cast %arg13 : i32 to index
      %c39 = arith.constant 39 : index
      %581 = memref.load %arg4[%580, %c39] : memref<16x54xf32, #tpu.memory_space<smem>>
      %582 = vector.extract_strided_slice %264 {offsets = [1, 0], sizes = [13, 13], strides = [1, 1]} : vector<15x15xf32> to vector<13x13xf32>
      %583 = vector.broadcast %581 : f32 to vector<13x13xf32>
      %584 = arith.mulf %583, %582 : vector<13x13xf32>
      %585 = arith.addf %579, %584 : vector<13x13xf32>
      %586 = arith.index_cast %arg13 : i32 to index
      %c40 = arith.constant 40 : index
      %587 = memref.load %arg4[%586, %c40] : memref<16x54xf32, #tpu.memory_space<smem>>
      %588 = vector.extract_strided_slice %264 {offsets = [1, 1], sizes = [13, 13], strides = [1, 1]} : vector<15x15xf32> to vector<13x13xf32>
      %589 = vector.broadcast %587 : f32 to vector<13x13xf32>
      %590 = arith.mulf %589, %588 : vector<13x13xf32>
      %591 = arith.addf %585, %590 : vector<13x13xf32>
      %592 = arith.index_cast %arg13 : i32 to index
      %c41 = arith.constant 41 : index
      %593 = memref.load %arg4[%592, %c41] : memref<16x54xf32, #tpu.memory_space<smem>>
      %594 = vector.extract_strided_slice %264 {offsets = [1, 2], sizes = [13, 13], strides = [1, 1]} : vector<15x15xf32> to vector<13x13xf32>
      %595 = vector.broadcast %593 : f32 to vector<13x13xf32>
      %596 = arith.mulf %595, %594 : vector<13x13xf32>
      %597 = arith.addf %591, %596 : vector<13x13xf32>
      %598 = arith.index_cast %arg13 : i32 to index
      %c42 = arith.constant 42 : index
      %599 = memref.load %arg4[%598, %c42] : memref<16x54xf32, #tpu.memory_space<smem>>
      %600 = vector.extract_strided_slice %264 {offsets = [2, 0], sizes = [13, 13], strides = [1, 1]} : vector<15x15xf32> to vector<13x13xf32>
      %601 = vector.broadcast %599 : f32 to vector<13x13xf32>
      %602 = arith.mulf %601, %600 : vector<13x13xf32>
      %603 = arith.addf %597, %602 : vector<13x13xf32>
      %604 = arith.index_cast %arg13 : i32 to index
      %c43 = arith.constant 43 : index
      %605 = memref.load %arg4[%604, %c43] : memref<16x54xf32, #tpu.memory_space<smem>>
      %606 = vector.extract_strided_slice %264 {offsets = [2, 1], sizes = [13, 13], strides = [1, 1]} : vector<15x15xf32> to vector<13x13xf32>
      %607 = vector.broadcast %605 : f32 to vector<13x13xf32>
      %608 = arith.mulf %607, %606 : vector<13x13xf32>
      %609 = arith.addf %603, %608 : vector<13x13xf32>
      %610 = arith.index_cast %arg13 : i32 to index
      %c44 = arith.constant 44 : index
      %611 = memref.load %arg4[%610, %c44] : memref<16x54xf32, #tpu.memory_space<smem>>
      %612 = vector.extract_strided_slice %264 {offsets = [2, 2], sizes = [13, 13], strides = [1, 1]} : vector<15x15xf32> to vector<13x13xf32>
      %613 = vector.broadcast %611 : f32 to vector<13x13xf32>
      %614 = arith.mulf %613, %612 : vector<13x13xf32>
      %615 = arith.addf %609, %614 : vector<13x13xf32>
      %616 = arith.index_cast %arg13 : i32 to index
      %c45 = arith.constant 45 : index
      %617 = memref.load %arg4[%616, %c45] : memref<16x54xf32, #tpu.memory_space<smem>>
      %618 = vector.extract_strided_slice %312 {offsets = [0, 0], sizes = [13, 13], strides = [1, 1]} : vector<15x15xf32> to vector<13x13xf32>
      %619 = vector.broadcast %617 : f32 to vector<13x13xf32>
      %620 = arith.mulf %619, %618 : vector<13x13xf32>
      %621 = arith.addf %615, %620 : vector<13x13xf32>
      %622 = arith.index_cast %arg13 : i32 to index
      %c46 = arith.constant 46 : index
      %623 = memref.load %arg4[%622, %c46] : memref<16x54xf32, #tpu.memory_space<smem>>
      %624 = vector.extract_strided_slice %312 {offsets = [0, 1], sizes = [13, 13], strides = [1, 1]} : vector<15x15xf32> to vector<13x13xf32>
      %625 = vector.broadcast %623 : f32 to vector<13x13xf32>
      %626 = arith.mulf %625, %624 : vector<13x13xf32>
      %627 = arith.addf %621, %626 : vector<13x13xf32>
      %628 = arith.index_cast %arg13 : i32 to index
      %c47 = arith.constant 47 : index
      %629 = memref.load %arg4[%628, %c47] : memref<16x54xf32, #tpu.memory_space<smem>>
      %630 = vector.extract_strided_slice %312 {offsets = [0, 2], sizes = [13, 13], strides = [1, 1]} : vector<15x15xf32> to vector<13x13xf32>
      %631 = vector.broadcast %629 : f32 to vector<13x13xf32>
      %632 = arith.mulf %631, %630 : vector<13x13xf32>
      %633 = arith.addf %627, %632 : vector<13x13xf32>
      %634 = arith.index_cast %arg13 : i32 to index
      %c48 = arith.constant 48 : index
      %635 = memref.load %arg4[%634, %c48] : memref<16x54xf32, #tpu.memory_space<smem>>
      %636 = vector.extract_strided_slice %312 {offsets = [1, 0], sizes = [13, 13], strides = [1, 1]} : vector<15x15xf32> to vector<13x13xf32>
      %637 = vector.broadcast %635 : f32 to vector<13x13xf32>
      %638 = arith.mulf %637, %636 : vector<13x13xf32>
      %639 = arith.addf %633, %638 : vector<13x13xf32>
      %640 = arith.index_cast %arg13 : i32 to index
      %c49 = arith.constant 49 : index
      %641 = memref.load %arg4[%640, %c49] : memref<16x54xf32, #tpu.memory_space<smem>>
      %642 = vector.extract_strided_slice %312 {offsets = [1, 1], sizes = [13, 13], strides = [1, 1]} : vector<15x15xf32> to vector<13x13xf32>
      %643 = vector.broadcast %641 : f32 to vector<13x13xf32>
      %644 = arith.mulf %643, %642 : vector<13x13xf32>
      %645 = arith.addf %639, %644 : vector<13x13xf32>
      %646 = arith.index_cast %arg13 : i32 to index
      %c50 = arith.constant 50 : index
      %647 = memref.load %arg4[%646, %c50] : memref<16x54xf32, #tpu.memory_space<smem>>
      %648 = vector.extract_strided_slice %312 {offsets = [1, 2], sizes = [13, 13], strides = [1, 1]} : vector<15x15xf32> to vector<13x13xf32>
      %649 = vector.broadcast %647 : f32 to vector<13x13xf32>
      %650 = arith.mulf %649, %648 : vector<13x13xf32>
      %651 = arith.addf %645, %650 : vector<13x13xf32>
      %652 = arith.index_cast %arg13 : i32 to index
      %c51 = arith.constant 51 : index
      %653 = memref.load %arg4[%652, %c51] : memref<16x54xf32, #tpu.memory_space<smem>>
      %654 = vector.extract_strided_slice %312 {offsets = [2, 0], sizes = [13, 13], strides = [1, 1]} : vector<15x15xf32> to vector<13x13xf32>
      %655 = vector.broadcast %653 : f32 to vector<13x13xf32>
      %656 = arith.mulf %655, %654 : vector<13x13xf32>
      %657 = arith.addf %651, %656 : vector<13x13xf32>
      %658 = arith.index_cast %arg13 : i32 to index
      %c52 = arith.constant 52 : index
      %659 = memref.load %arg4[%658, %c52] : memref<16x54xf32, #tpu.memory_space<smem>>
      %660 = vector.extract_strided_slice %312 {offsets = [2, 1], sizes = [13, 13], strides = [1, 1]} : vector<15x15xf32> to vector<13x13xf32>
      %661 = vector.broadcast %659 : f32 to vector<13x13xf32>
      %662 = arith.mulf %661, %660 : vector<13x13xf32>
      %663 = arith.addf %657, %662 : vector<13x13xf32>
      %664 = arith.index_cast %arg13 : i32 to index
      %c53 = arith.constant 53 : index
      %665 = memref.load %arg4[%664, %c53] : memref<16x54xf32, #tpu.memory_space<smem>>
      %666 = vector.extract_strided_slice %312 {offsets = [2, 2], sizes = [13, 13], strides = [1, 1]} : vector<15x15xf32> to vector<13x13xf32>
      %667 = vector.broadcast %665 : f32 to vector<13x13xf32>
      %668 = arith.mulf %667, %666 : vector<13x13xf32>
      %669 = arith.addf %663, %668 : vector<13x13xf32>
      %670 = arith.index_cast %arg13 : i32 to index
      %671 = memref.load %arg5[%670] : memref<16xf32, #tpu.memory_space<smem>>
      %672 = vector.broadcast %671 : f32 to vector<13x13xf32>
      %673 = arith.addf %669, %672 : vector<13x13xf32>
      %cst_157 = arith.constant 0.000000e+00 : f32
      %674 = vector.broadcast %cst_157 : f32 to vector<13x13xf32>
      %675 = arith.maximumf %673, %674 : vector<13x13xf32>
      %676 = vector.extract_strided_slice %675 {offsets = [0, 0], sizes = [12, 13], strides = [1, 1]} : vector<13x13xf32> to vector<12x13xf32>
      %677 = vector.extract_strided_slice %675 {offsets = [1, 0], sizes = [12, 13], strides = [1, 1]} : vector<13x13xf32> to vector<12x13xf32>
      %678 = arith.maximumf %676, %677 : vector<12x13xf32>
      %679 = vector.extract_strided_slice %678 {offsets = [0, 0], sizes = [12, 12], strides = [1, 1]} : vector<12x13xf32> to vector<12x12xf32>
      %680 = vector.extract_strided_slice %678 {offsets = [0, 1], sizes = [12, 12], strides = [1, 1]} : vector<12x13xf32> to vector<12x12xf32>
      %681 = arith.maximumf %679, %680 : vector<12x12xf32>
      %cst_158 = arith.constant dense<0.000000e+00> : vector<6x12xf32>
      %682 = tpu.matmul %319, %681, %cst_158 {dimension_numbers = #tpu.dot_dimension_numbers<[1], [0], [0], [1], [0, 0, 1, 1], [], []>} : vector<6x12xf32>, vector<12x12xf32>, vector<6x12xf32> -> vector<6x12xf32>
      %cst_159 = arith.constant dense<0.000000e+00> : vector<6x6xf32>
      %683 = tpu.matmul %682, %326, %cst_159 {dimension_numbers = #tpu.dot_dimension_numbers<[1], [0], [0], [1], [0, 0, 1, 1], [], []>} : vector<6x12xf32>, vector<12x6xf32>, vector<6x6xf32> -> vector<6x6xf32>
      %c6_i32 = arith.constant 6 : i32
      %684 = arith.muli %arg13, %c6_i32 : i32
      %c0_i32_160 = arith.constant 0 : i32
      %685 = arith.addi %684, %c0_i32_160 : i32
      %686 = arith.index_cast %685 : i32 to index
      %c0_161 = arith.constant 0 : index
      %c0_162 = arith.constant 0 : index
      %687 = vector.load %arg6[%686, %c0_161, %c0_162] : memref<96x6x120xf32, #tpu.memory_space<vmem>>, vector<1x6x120xf32>
      %688 = vector.shape_cast %687 : vector<1x6x120xf32> to vector<6x120xf32>
      %689 = vector.extract_strided_slice %683 {offsets = [0, 0], sizes = [1, 6], strides = [1, 1]} : vector<6x6xf32> to vector<1x6xf32>
      %cst_163 = arith.constant dense<0.000000e+00> : vector<1x120xf32>
      %690 = tpu.matmul %689, %688, %cst_163 {dimension_numbers = #tpu.dot_dimension_numbers<[1], [0], [0], [1], [0, 0, 1, 1], [], []>} : vector<1x6xf32>, vector<6x120xf32>, vector<1x120xf32> -> vector<1x120xf32>
      %691 = arith.addf %arg14, %690 : vector<1x120xf32>
      %c6_i32_164 = arith.constant 6 : i32
      %692 = arith.muli %arg13, %c6_i32_164 : i32
      %c1_i32_165 = arith.constant 1 : i32
      %693 = arith.addi %692, %c1_i32_165 : i32
      %694 = arith.index_cast %693 : i32 to index
      %c0_166 = arith.constant 0 : index
      %c0_167 = arith.constant 0 : index
      %695 = vector.load %arg6[%694, %c0_166, %c0_167] : memref<96x6x120xf32, #tpu.memory_space<vmem>>, vector<1x6x120xf32>
      %696 = vector.shape_cast %695 : vector<1x6x120xf32> to vector<6x120xf32>
      %697 = vector.extract_strided_slice %683 {offsets = [1, 0], sizes = [1, 6], strides = [1, 1]} : vector<6x6xf32> to vector<1x6xf32>
      %cst_168 = arith.constant dense<0.000000e+00> : vector<1x120xf32>
      %698 = tpu.matmul %697, %696, %cst_168 {dimension_numbers = #tpu.dot_dimension_numbers<[1], [0], [0], [1], [0, 0, 1, 1], [], []>} : vector<1x6xf32>, vector<6x120xf32>, vector<1x120xf32> -> vector<1x120xf32>
      %699 = arith.addf %691, %698 : vector<1x120xf32>
      %c6_i32_169 = arith.constant 6 : i32
      %700 = arith.muli %arg13, %c6_i32_169 : i32
      %c2_i32_170 = arith.constant 2 : i32
      %701 = arith.addi %700, %c2_i32_170 : i32
      %702 = arith.index_cast %701 : i32 to index
      %c0_171 = arith.constant 0 : index
      %c0_172 = arith.constant 0 : index
      %703 = vector.load %arg6[%702, %c0_171, %c0_172] : memref<96x6x120xf32, #tpu.memory_space<vmem>>, vector<1x6x120xf32>
      %704 = vector.shape_cast %703 : vector<1x6x120xf32> to vector<6x120xf32>
      %705 = vector.extract_strided_slice %683 {offsets = [2, 0], sizes = [1, 6], strides = [1, 1]} : vector<6x6xf32> to vector<1x6xf32>
      %cst_173 = arith.constant dense<0.000000e+00> : vector<1x120xf32>
      %706 = tpu.matmul %705, %704, %cst_173 {dimension_numbers = #tpu.dot_dimension_numbers<[1], [0], [0], [1], [0, 0, 1, 1], [], []>} : vector<1x6xf32>, vector<6x120xf32>, vector<1x120xf32> -> vector<1x120xf32>
      %707 = arith.addf %699, %706 : vector<1x120xf32>
      %c6_i32_174 = arith.constant 6 : i32
      %708 = arith.muli %arg13, %c6_i32_174 : i32
      %c3_i32 = arith.constant 3 : i32
      %709 = arith.addi %708, %c3_i32 : i32
      %710 = arith.index_cast %709 : i32 to index
      %c0_175 = arith.constant 0 : index
      %c0_176 = arith.constant 0 : index
      %711 = vector.load %arg6[%710, %c0_175, %c0_176] : memref<96x6x120xf32, #tpu.memory_space<vmem>>, vector<1x6x120xf32>
      %712 = vector.shape_cast %711 : vector<1x6x120xf32> to vector<6x120xf32>
      %713 = vector.extract_strided_slice %683 {offsets = [3, 0], sizes = [1, 6], strides = [1, 1]} : vector<6x6xf32> to vector<1x6xf32>
      %cst_177 = arith.constant dense<0.000000e+00> : vector<1x120xf32>
      %714 = tpu.matmul %713, %712, %cst_177 {dimension_numbers = #tpu.dot_dimension_numbers<[1], [0], [0], [1], [0, 0, 1, 1], [], []>} : vector<1x6xf32>, vector<6x120xf32>, vector<1x120xf32> -> vector<1x120xf32>
      %715 = arith.addf %707, %714 : vector<1x120xf32>
      %c6_i32_178 = arith.constant 6 : i32
      %716 = arith.muli %arg13, %c6_i32_178 : i32
      %c4_i32 = arith.constant 4 : i32
      %717 = arith.addi %716, %c4_i32 : i32
      %718 = arith.index_cast %717 : i32 to index
      %c0_179 = arith.constant 0 : index
      %c0_180 = arith.constant 0 : index
      %719 = vector.load %arg6[%718, %c0_179, %c0_180] : memref<96x6x120xf32, #tpu.memory_space<vmem>>, vector<1x6x120xf32>
      %720 = vector.shape_cast %719 : vector<1x6x120xf32> to vector<6x120xf32>
      %721 = vector.extract_strided_slice %683 {offsets = [4, 0], sizes = [1, 6], strides = [1, 1]} : vector<6x6xf32> to vector<1x6xf32>
      %cst_181 = arith.constant dense<0.000000e+00> : vector<1x120xf32>
      %722 = tpu.matmul %721, %720, %cst_181 {dimension_numbers = #tpu.dot_dimension_numbers<[1], [0], [0], [1], [0, 0, 1, 1], [], []>} : vector<1x6xf32>, vector<6x120xf32>, vector<1x120xf32> -> vector<1x120xf32>
      %723 = arith.addf %715, %722 : vector<1x120xf32>
      %c6_i32_182 = arith.constant 6 : i32
      %724 = arith.muli %arg13, %c6_i32_182 : i32
      %c5_i32 = arith.constant 5 : i32
      %725 = arith.addi %724, %c5_i32 : i32
      %726 = arith.index_cast %725 : i32 to index
      %c0_183 = arith.constant 0 : index
      %c0_184 = arith.constant 0 : index
      %727 = vector.load %arg6[%726, %c0_183, %c0_184] : memref<96x6x120xf32, #tpu.memory_space<vmem>>, vector<1x6x120xf32>
      %728 = vector.shape_cast %727 : vector<1x6x120xf32> to vector<6x120xf32>
      %729 = vector.extract_strided_slice %683 {offsets = [5, 0], sizes = [1, 6], strides = [1, 1]} : vector<6x6xf32> to vector<1x6xf32>
      %cst_185 = arith.constant dense<0.000000e+00> : vector<1x120xf32>
      %730 = tpu.matmul %729, %728, %cst_185 {dimension_numbers = #tpu.dot_dimension_numbers<[1], [0], [0], [1], [0, 0, 1, 1], [], []>} : vector<1x6xf32>, vector<6x120xf32>, vector<1x120xf32> -> vector<1x120xf32>
      %731 = arith.addf %723, %730 : vector<1x120xf32>
      scf.yield %731 : vector<1x120xf32>
    }
    %c16_i32_130 = arith.constant 16 : i32
    %c0_131 = arith.constant 0 : index
    %c0_132 = arith.constant 0 : index
    %330 = vector.load %arg7[%c0_131, %c0_132] : memref<1x120xf32, #tpu.memory_space<vmem>>, vector<1x120xf32>
    %331 = arith.addf %329, %330 : vector<1x120xf32>
    %cst_133 = arith.constant 0.000000e+00 : f32
    %332 = vector.broadcast %cst_133 : f32 to vector<1x120xf32>
    %333 = arith.maximumf %331, %332 : vector<1x120xf32>
    %c0_134 = arith.constant 0 : index
    %c0_135 = arith.constant 0 : index
    %334 = vector.load %arg8[%c0_134, %c0_135] : memref<120x84xf32, #tpu.memory_space<vmem>>, vector<120x84xf32>
    %cst_136 = arith.constant dense<0.000000e+00> : vector<1x84xf32>
    %335 = tpu.matmul %333, %334, %cst_136 {dimension_numbers = #tpu.dot_dimension_numbers<[1], [0], [0], [1], [0, 0, 1, 1], [], []>} : vector<1x120xf32>, vector<120x84xf32>, vector<1x84xf32> -> vector<1x84xf32>
    %c0_137 = arith.constant 0 : index
    %c0_138 = arith.constant 0 : index
    %336 = vector.load %arg9[%c0_137, %c0_138] : memref<1x84xf32, #tpu.memory_space<vmem>>, vector<1x84xf32>
    %337 = arith.addf %335, %336 : vector<1x84xf32>
    %cst_139 = arith.constant 0.000000e+00 : f32
    %338 = vector.broadcast %cst_139 : f32 to vector<1x84xf32>
    %339 = arith.maximumf %337, %338 : vector<1x84xf32>
    %c0_140 = arith.constant 0 : index
    %c0_141 = arith.constant 0 : index
    %340 = vector.load %arg10[%c0_140, %c0_141] : memref<84x10xf32, #tpu.memory_space<vmem>>, vector<84x10xf32>
    %cst_142 = arith.constant dense<0.000000e+00> : vector<1x10xf32>
    %341 = tpu.matmul %339, %340, %cst_142 {dimension_numbers = #tpu.dot_dimension_numbers<[1], [0], [0], [1], [0, 0, 1, 1], [], []>} : vector<1x84xf32>, vector<84x10xf32>, vector<1x10xf32> -> vector<1x10xf32>
    %c0_143 = arith.constant 0 : index
    %c0_144 = arith.constant 0 : index
    %342 = vector.load %arg11[%c0_143, %c0_144] : memref<1x10xf32, #tpu.memory_space<vmem>>, vector<1x10xf32>
    %343 = arith.addf %341, %342 : vector<1x10xf32>
    %c0_145 = arith.constant 0 : index
    %c0_146 = arith.constant 0 : index
    %c0_147 = arith.constant 0 : index
    %344 = vector.load %arg12[%c0_145, %c0_146, %c0_147] : memref<1x1x10xf32, #tpu.memory_space<vmem>>, vector<1x1x10xf32>
    %345 = vector.shape_cast %344 : vector<1x1x10xf32> to vector<1x10xf32>
    %346 = vector.shape_cast %343 : vector<1x10xf32> to vector<1x1x10xf32>
    tpu.vector_store %arg12[%c0_145, %c0_146, %c0_147], %346 {strides = array<i32>} : memref<1x1x10xf32, #tpu.memory_space<vmem>>, vector<1x1x10xf32>,
    return
  }
  func.func @transform_0(%arg0: i32) -> (i32, i32, i32, i32) {
    %c0_i32 = arith.constant 0 : i32
    %c0_i32_0 = arith.constant 0 : i32
    %c0_i32_1 = arith.constant 0 : i32
    %c0_i32_2 = arith.constant 0 : i32
    return %arg0, %c0_i32, %c0_i32_0, %c0_i32_1 : i32, i32, i32, i32
  }
  func.func @transform_1(%arg0: i32) -> (i32, i32) {
    %c0_i32 = arith.constant 0 : i32
    %c0_i32_0 = arith.constant 0 : i32
    %c0_i32_1 = arith.constant 0 : i32
    return %c0_i32, %c0_i32_0 : i32, i32
  }
  func.func @transform_2(%arg0: i32) -> i32 {
    %c0_i32 = arith.constant 0 : i32
    %c0_i32_0 = arith.constant 0 : i32
    return %c0_i32 : i32
  }
  func.func @transform_3(%arg0: i32) -> (i32, i32) {
    %c0_i32 = arith.constant 0 : i32
    %c0_i32_0 = arith.constant 0 : i32
    %c0_i32_1 = arith.constant 0 : i32
    return %c0_i32, %c0_i32_0 : i32, i32
  }
  func.func @transform_4(%arg0: i32) -> i32 {
    %c0_i32 = arith.constant 0 : i32
    %c0_i32_0 = arith.constant 0 : i32
    return %c0_i32 : i32
  }
  func.func @transform_5(%arg0: i32) -> (i32, i32, i32) {
    %c0_i32 = arith.constant 0 : i32
    %c0_i32_0 = arith.constant 0 : i32
    %c0_i32_1 = arith.constant 0 : i32
    %c0_i32_2 = arith.constant 0 : i32
    return %c0_i32, %c0_i32_0, %c0_i32_1 : i32, i32, i32
  }
  func.func @transform_6(%arg0: i32) -> (i32, i32) {
    %c0_i32 = arith.constant 0 : i32
    %c0_i32_0 = arith.constant 0 : i32
    %c0_i32_1 = arith.constant 0 : i32
    return %c0_i32, %c0_i32_0 : i32, i32
  }
  func.func @transform_7(%arg0: i32) -> (i32, i32) {
    %c0_i32 = arith.constant 0 : i32
    %c0_i32_0 = arith.constant 0 : i32
    %c0_i32_1 = arith.constant 0 : i32
    return %c0_i32, %c0_i32_0 : i32, i32
  }
  func.func @transform_8(%arg0: i32) -> (i32, i32) {
    %c0_i32 = arith.constant 0 : i32
    %c0_i32_0 = arith.constant 0 : i32
    %c0_i32_1 = arith.constant 0 : i32
    return %c0_i32, %c0_i32_0 : i32, i32
  }
  func.func @transform_9(%arg0: i32) -> (i32, i32) {
    %c0_i32 = arith.constant 0 : i32
    %c0_i32_0 = arith.constant 0 : i32
    %c0_i32_1 = arith.constant 0 : i32
    return %c0_i32, %c0_i32_0 : i32, i32
  }
  func.func @transform_10(%arg0: i32) -> (i32, i32) {
    %c0_i32 = arith.constant 0 : i32
    %c0_i32_0 = arith.constant 0 : i32
    %c0_i32_1 = arith.constant 0 : i32
    return %c0_i32, %c0_i32_0 : i32, i32
  }
  func.func @transform_11(%arg0: i32) -> (i32, i32, i32) {
    %c0_i32 = arith.constant 0 : i32
    %c0_i32_0 = arith.constant 0 : i32
    %c0_i32_1 = arith.constant 0 : i32
    return %arg0, %c0_i32, %c0_i32_0 : i32, i32, i32
  }
}

</mosaic_0001>

<llo_original>
// kernel: net_forward.1
$region0: #{net_forward.1}
  #allocation0 [shape = 'u32[]', space=smem, size = 0x4, offset = 0x4, fixed_abs, tag = 'smem constant byte address 0x4 - core index']
  #allocation1 [shape = 'u32[72,128]{1,0:T(1,128)}', space=vmem, size = 0x9000, scoped, tag = 'internal scratch']
  %s0 = inlined_call_operand.vmem [shape: f32[2,1,32,32], index: 0, kind: input, shape index: {}]
  %s1 = inlined_call_operand.vmem [shape: f32[6,9], index: 1, kind: input, shape index: {}]
  %s2 = inlined_call_operand.vmem [shape: f32[6], index: 2, kind: input, shape index: {}]
  %s3 = inlined_call_operand.vmem [shape: f32[16,54], index: 3, kind: input, shape index: {}]
  %s4 = inlined_call_operand.vmem [shape: f32[16], index: 4, kind: input, shape index: {}]
  %s5 = inlined_call_operand.vmem [shape: f32[96,6,120], index: 5, kind: input, shape index: {}]
  %s6 = inlined_call_operand.vmem [shape: f32[1,120], index: 6, kind: input, shape index: {}]
  %s7 = inlined_call_operand.vmem [shape: f32[120,84], index: 7, kind: input, shape index: {}]
  %s8 = inlined_call_operand.vmem [shape: f32[1,84], index: 8, kind: input, shape index: {}]
  %s9 = inlined_call_operand.vmem [shape: f32[84,10], index: 9, kind: input, shape index: {}]
  %s10 = inlined_call_operand.vmem [shape: f32[1,10], index: 10, kind: input, shape index: {}]
  %s11 = inlined_call_operand.hbm [shape: f32[2,1,10], index: 11, kind: output, shape index: {}]
  %s12 = sld [smem:[#allocation0]]
  $region100: #{net_forward.1} parent=0
    _
  %s14 = ssub.s32 1, %s12
  %s15 = scalar_select 0, %s14, %s12
  $region1: #{net_forward.1} parent=0
    #allocation2 [shape = 'u8[4096]{0}', space=smem, size = 0x1000, scoped, tag = 'input window, operand 1, single buffered']
    #allocation3 [shape = 's32[2]{0}', space=sflag, size = 0x8, scoped, tag = 'scoped memory for net_forward.1']
    #allocation4 [shape = 's32[2]{0}', space=sflag, size = 0x8, scoped, tag = 'scoped memory for net_forward.1']
    #allocation5 [shape = 'u8[512]{0}', space=smem, size = 0x200, scoped, tag = 'input window, operand 2, single buffered']
    #allocation6 [shape = 's32[1]{0}', space=sflag, size = 0x4, scoped, tag = 'scoped memory for net_forward.1']
    #allocation7 [shape = 'u8[8192]{0}', space=smem, size = 0x2000, scoped, tag = 'input window, operand 3, single buffered']
    #allocation8 [shape = 'u8[512]{0}', space=smem, size = 0x200, scoped, tag = 'input window, operand 4, single buffered']
    #allocation9 [shape = 's32[1]{0}', space=sflag, size = 0x4, scoped, tag = 'scoped memory for net_forward.1']
    #allocation10 [shape = 'u8[1024]{0}', space=vmem, size = 0x400, scoped, tag = 'output window, operand 0']
    %16 = vsyncpa [#allocation4], 0
    %17 = vsyncpa [#allocation6], 0
    %18 = vsyncpa [#allocation9], 0
    %19 = vsyncpa [#allocation3], 0
    %s20 = scalar_lea.sflag [#allocation3], 1
    %21 = vsyncpa %s20, 0
    loop: start=0, step=1, limit=4
    $region2: #{net_forward.1} parent=1 // loop_pre_header
      _
    $region3: #{net_forward.1} parent=1 // loop_header
      %s23 = sphi 0, %s27
      %p24 = scmp.ge.s32.totalorder %s23, 4
      %s33 = sphi 0, %s35
      %s36 = sphi 0, %s33
      %s37 = sphi 0, %s36
      %s53 = sphi 0, %s37
      %s57 = sphi 0, %s57
      %s59 = sphi 0, %s57
      %s60 = sphi 0, %s59
      %s74 = sphi 0, %s60
      %s78 = sphi 0, %s78
      %s80 = sphi 0, %s78
      %s81 = sphi 0, %s80
      %s95 = sphi 0, %s81
      %s99 = sphi 0, %s99
      %s101 = sphi 0, %s99
      %s102 = sphi 0, %s101
      %s116 = sphi 0, %s102
      %s120 = sphi 0, %s120
      %s122 = sphi 0, %s120
      %s123 = sphi 0, %s122
      %s137 = sphi 0, %s123
      %s141 = sphi 0, %s141
      %s143 = sphi 0, %s141
      %s144 = sphi 0, %s143
      %s158 = sphi 0, %s144
      %s162 = sphi 0, %s162
      %s164 = sphi 0, %s162
      %s165 = sphi 0, %s164
      %s179 = sphi 0, %s165
      %s183 = sphi 0, %s183
      %s185 = sphi 0, %s183
      %s186 = sphi 0, %s185
      %s200 = sphi 0, %s186
      %s204 = sphi 0, %s204
      %s206 = sphi 0, %s204
      %s207 = sphi 0, %s206
      %s221 = sphi 0, %s207
      %s225 = sphi 0, %s225
      %s227 = sphi 0, %s225
      %s228 = sphi 0, %s227
      %s242 = sphi 0, %s228
      %s246 = sphi 0, %s246
      %s248 = sphi 0, %s246
      %s249 = sphi 0, %s248
      %s263 = sphi 0, %s249
      %s269 = sphi 0, %s271
      %s272 = sphi 0, %s269
      %s273 = sphi 0, %s272
      %s289 = sphi 0, %s273
    $region4: #{net_forward.1} parent=1 // loop_header_branch
      %26 = sbr.rel (%p24) target = $region8
    $region5: #{net_forward.1} parent=1 // loop_body
      %s28 = ssub.s32 %s23, 1
      %s29 = ssub.s32 %s23, 2
      %s30 = sadd.s32 %s23, 1
      %s31 = ssub.s32 %s23, %s30
      %p32 = scmp.eq.s32.totalorder %s31, 0
      %s34 = sadd.s32 %s33, 1
      %s35 = scalar_select %p32, %s33, %s34
      %p38 = pneg %p32
      %p39 = scmp.eq.s32.totalorder %s23, 1
      %p40 = por %p38, %p39
      %p41 = scmp.ne.s32.totalorder %s33, %s36
      %p42 = scmp.eq.s32.totalorder %s23, 0
      %p43 = por %p41, %p42
      %p44 = scmp.ne.s32.totalorder %s33, %s36
      %p45 = scmp.eq.s32.totalorder %s28, 1
      %p46 = por %p44, %p45
      %p47 = scmp.ne.s32.totalorder %s36, %s37
      %p48 = scmp.eq.s32.totalorder %s28, 0
      %p49 = por %p47, %p48
      %p50 = scmp.ne.s32.totalorder %s36, %s37
      %p51 = scmp.eq.s32.totalorder %s29, 1
      %p52 = por %p50, %p51
      %p54 = scmp.ne.s32.totalorder %s37, %s53
      %p55 = scmp.eq.s32.totalorder %s29, 0
      %p56 = por %p54, %p55
      %s58 = sadd.s32 %s57, 1
      %p61 = scmp.eq.s32.totalorder %s23, 1
      %p62 = scmp.ne.s32.totalorder %s57, %s59
      %p63 = scmp.eq.s32.totalorder %s23, 0
      %p64 = por %p62, %p63
      %p65 = scmp.ne.s32.totalorder %s57, %s59
      %p66 = scmp.eq.s32.totalorder %s28, 1
      %p67 = por %p65, %p66
      %p68 = scmp.ne.s32.totalorder %s59, %s60
      %p69 = scmp.eq.s32.totalorder %s28, 0
      %p70 = por %p68, %p69
      %p71 = scmp.ne.s32.totalorder %s59, %s60
      %p72 = scmp.eq.s32.totalorder %s29, 1
      %p73 = por %p71, %p72
      %p75 = scmp.ne.s32.totalorder %s60, %s74
      %p76 = scmp.eq.s32.totalorder %s29, 0
      %p77 = por %p75, %p76
      %s79 = sadd.s32 %s78, 1
      %p82 = scmp.eq.s32.totalorder %s23, 1
      %p83 = scmp.ne.s32.totalorder %s78, %s80
      %p84 = scmp.eq.s32.totalorder %s23, 0
      %p85 = por %p83, %p84
      %p86 = scmp.ne.s32.totalorder %s78, %s80
      %p87 = scmp.eq.s32.totalorder %s28, 1
      %p88 = por %p86, %p87
      %p89 = scmp.ne.s32.totalorder %s80, %s81
      %p90 = scmp.eq.s32.totalorder %s28, 0
      %p91 = por %p89, %p90
      %p92 = scmp.ne.s32.totalorder %s80, %s81
      %p93 = scmp.eq.s32.totalorder %s29, 1
      %p94 = por %p92, %p93
      %p96 = scmp.ne.s32.totalorder %s81, %s95
      %p97 = scmp.eq.s32.totalorder %s29, 0
      %p98 = por %p96, %p97
      %s100 = sadd.s32 %s99, 1
      %p103 = scmp.eq.s32.totalorder %s23, 1
      %p104 = scmp.ne.s32.totalorder %s99, %s101
      %p105 = scmp.eq.s32.totalorder %s23, 0
      %p106 = por %p104, %p105
      %p107 = scmp.ne.s32.totalorder %s99, %s101
      %p108 = scmp.eq.s32.totalorder %s28, 1
      %p109 = por %p107, %p108
      %p110 = scmp.ne.s32.totalorder %s101, %s102
      %p111 = scmp.eq.s32.totalorder %s28, 0
      %p112 = por %p110, %p111
      %p113 = scmp.ne.s32.totalorder %s101, %s102
      %p114 = scmp.eq.s32.totalorder %s29, 1
      %p115 = por %p113, %p114
      %p117 = scmp.ne.s32.totalorder %s102, %s116
      %p118 = scmp.eq.s32.totalorder %s29, 0
      %p119 = por %p117, %p118
      %s121 = sadd.s32 %s120, 1
      %p124 = scmp.eq.s32.totalorder %s23, 1
      %p125 = scmp.ne.s32.totalorder %s120, %s122
      %p126 = scmp.eq.s32.totalorder %s23, 0
      %p127 = por %p125, %p126
      %p128 = scmp.ne.s32.totalorder %s120, %s122
      %p129 = scmp.eq.s32.totalorder %s28, 1
      %p130 = por %p128, %p129
      %p131 = scmp.ne.s32.totalorder %s122, %s123
      %p132 = scmp.eq.s32.totalorder %s28, 0
      %p133 = por %p131, %p132
      %p134 = scmp.ne.s32.totalorder %s122, %s123
      %p135 = scmp.eq.s32.totalorder %s29, 1
      %p136 = por %p134, %p135
      %p138 = scmp.ne.s32.totalorder %s123, %s137
      %p139 = scmp.eq.s32.totalorder %s29, 0
      %p140 = por %p138, %p139
      %s142 = sadd.s32 %s141, 1
      %p145 = scmp.eq.s32.totalorder %s23, 1
      %p146 = scmp.ne.s32.totalorder %s141, %s143
      %p147 = scmp.eq.s32.totalorder %s23, 0
      %p148 = por %p146, %p147
      %p149 = scmp.ne.s32.totalorder %s141, %s143
      %p150 = scmp.eq.s32.totalorder %s28, 1
      %p151 = por %p149, %p150
      %p152 = scmp.ne.s32.totalorder %s143, %s144
      %p153 = scmp.eq.s32.totalorder %s28, 0
      %p154 = por %p152, %p153
      %p155 = scmp.ne.s32.totalorder %s143, %s144
      %p156 = scmp.eq.s32.totalorder %s29, 1
      %p157 = por %p155, %p156
      %p159 = scmp.ne.s32.totalorder %s144, %s158
      %p160 = scmp.eq.s32.totalorder %s29, 0
      %p161 = por %p159, %p160
      %s163 = sadd.s32 %s162, 1
      %p166 = scmp.eq.s32.totalorder %s23, 1
      %p167 = scmp.ne.s32.totalorder %s162, %s164
      %p168 = scmp.eq.s32.totalorder %s23, 0
      %p169 = por %p167, %p168
      %p170 = scmp.ne.s32.totalorder %s162, %s164
      %p171 = scmp.eq.s32.totalorder %s28, 1
      %p172 = por %p170, %p171
      %p173 = scmp.ne.s32.totalorder %s164, %s165
      %p174 = scmp.eq.s32.totalorder %s28, 0
      %p175 = por %p173, %p174
      %p176 = scmp.ne.s32.totalorder %s164, %s165
      %p177 = scmp.eq.s32.totalorder %s29, 1
      %p178 = por %p176, %p177
      %p180 = scmp.ne.s32.totalorder %s165, %s179
      %p181 = scmp.eq.s32.totalorder %s29, 0
      %p182 = por %p180, %p181
      %s184 = sadd.s32 %s183, 1
      %p187 = scmp.eq.s32.totalorder %s23, 1
      %p188 = scmp.ne.s32.totalorder %s183, %s185
      %p189 = scmp.eq.s32.totalorder %s23, 0
      %p190 = por %p188, %p189
      %p191 = scmp.ne.s32.totalorder %s183, %s185
      %p192 = scmp.eq.s32.totalorder %s28, 1
      %p193 = por %p191, %p192
      %p194 = scmp.ne.s32.totalorder %s185, %s186
      %p195 = scmp.eq.s32.totalorder %s28, 0
      %p196 = por %p194, %p195
      %p197 = scmp.ne.s32.totalorder %s185, %s186
      %p198 = scmp.eq.s32.totalorder %s29, 1
      %p199 = por %p197, %p198
      %p201 = scmp.ne.s32.totalorder %s186, %s200
      %p202 = scmp.eq.s32.totalorder %s29, 0
      %p203 = por %p201, %p202
      %s205 = sadd.s32 %s204, 1
      %p208 = scmp.eq.s32.totalorder %s23, 1
      %p209 = scmp.ne.s32.totalorder %s204, %s206
      %p210 = scmp.eq.s32.totalorder %s23, 0
      %p211 = por %p209, %p210
      %p212 = scmp.ne.s32.totalorder %s204, %s206
      %p213 = scmp.eq.s32.totalorder %s28, 1
      %p214 = por %p212, %p213
      %p215 = scmp.ne.s32.totalorder %s206, %s207
      %p216 = scmp.eq.s32.totalorder %s28, 0
      %p217 = por %p215, %p216
      %p218 = scmp.ne.s32.totalorder %s206, %s207
      %p219 = scmp.eq.s32.totalorder %s29, 1
      %p220 = por %p218, %p219
      %p222 = scmp.ne.s32.totalorder %s207, %s221
      %p223 = scmp.eq.s32.totalorder %s29, 0
      %p224 = por %p222, %p223
      %s226 = sadd.s32 %s225, 1
      %p229 = scmp.eq.s32.totalorder %s23, 1
      %p230 = scmp.ne.s32.totalorder %s225, %s227
      %p231 = scmp.eq.s32.totalorder %s23, 0
      %p232 = por %p230, %p231
      %p233 = scmp.ne.s32.totalorder %s225, %s227
      %p234 = scmp.eq.s32.totalorder %s28, 1
      %p235 = por %p233, %p234
      %p236 = scmp.ne.s32.totalorder %s227, %s228
      %p237 = scmp.eq.s32.totalorder %s28, 0
      %p238 = por %p236, %p237
      %p239 = scmp.ne.s32.totalorder %s227, %s228
      %p240 = scmp.eq.s32.totalorder %s29, 1
      %p241 = por %p239, %p240
      %p243 = scmp.ne.s32.totalorder %s228, %s242
      %p244 = scmp.eq.s32.totalorder %s29, 0
      %p245 = por %p243, %p244
      %s247 = sadd.s32 %s246, 1
      %p250 = scmp.eq.s32.totalorder %s23, 1
      %p251 = scmp.ne.s32.totalorder %s246, %s248
      %p252 = scmp.eq.s32.totalorder %s23, 0
      %p253 = por %p251, %p252
      %p254 = scmp.ne.s32.totalorder %s246, %s248
      %p255 = scmp.eq.s32.totalorder %s28, 1
      %p256 = por %p254, %p255
      %p257 = scmp.ne.s32.totalorder %s248, %s249
      %p258 = scmp.eq.s32.totalorder %s28, 0
      %p259 = por %p257, %p258
      %p260 = scmp.ne.s32.totalorder %s248, %s249
      %p261 = scmp.eq.s32.totalorder %s29, 1
      %p262 = por %p260, %p261
      %p264 = scmp.ne.s32.totalorder %s249, %s263
      %p265 = scmp.eq.s32.totalorder %s29, 0
      %p266 = por %p264, %p265
      %s267 = ssub.s32 %s23, %s30
      %p268 = scmp.eq.s32.totalorder %s267, 0
      %s270 = sadd.s32 %s269, 1
      %s271 = scalar_select %p268, %s269, %s270
      %p274 = pneg %p268
      %p275 = scmp.eq.s32.totalorder %s23, 1
      %p276 = por %p274, %p275
      %p277 = scmp.ne.s32.totalorder %s269, %s272
      %p278 = scmp.eq.s32.totalorder %s23, 0
      %p279 = por %p277, %p278
      %p280 = scmp.ne.s32.totalorder %s269, %s272
      %p281 = scmp.eq.s32.totalorder %s28, 1
      %p282 = por %p280, %p281
      %p283 = scmp.ne.s32.totalorder %s272, %s273
      %p284 = scmp.eq.s32.totalorder %s28, 0
      %p285 = por %p283, %p284
      %p286 = scmp.ne.s32.totalorder %s272, %s273
      %p287 = scmp.eq.s32.totalorder %s29, 1
      %p288 = por %p286, %p287
      %p290 = scmp.ne.s32.totalorder %s273, %s289
      %p291 = scmp.eq.s32.totalorder %s29, 0
      %p292 = por %p290, %p291
      %p293 = scmp.le.s32.totalorder 1, %s23
      %p294 = scmp.lt.s32.totalorder %s23, 3
      %p295 = pnand %p293, %p294
      %p296 = pneg %p295
      // Predicated region
      $region9: #{net_forward.1} parent=5 // pred_check
        _
      $region10: #{net_forward.1} parent=5 // pred_check_branch
        %298 = sbr.rel (%p295) target = $region12
      $region11: #{net_forward.1} parent=5 // pred_region
        %s299 = ssub.s32 %s23, 1
        // Predicated region
        $region13: #{net_forward.1} parent=11 // pred_check
          %p300 = pneg %p70
        $region14: #{net_forward.1} parent=11 // pred_check_branch
          %302 = sbr.rel (%p300) target = $region16
        $region15: #{net_forward.1} parent=11 // pred_region
          %304 = vsyncadd [#allocation4], 0
          %s306 = sshll.u32 %s1, 4
          %s307 = int_to_ptr.vmem [resolvable:$true] %s306
          %309 = dma.vmem_to_smem %s307, 128, [#allocation2], [#allocation4]
        $region16: #{net_forward.1} parent=11 // pred_fallthru
          _
        // Predicated region
        $region17: #{net_forward.1} parent=11 // pred_check
          %p310 = pneg %p91
        $region18: #{net_forward.1} parent=11 // pred_check_branch
          %312 = sbr.rel (%p310) target = $region20
        $region19: #{net_forward.1} parent=11 // pred_region
          %314 = vsyncadd [#allocation6], 0
          %s316 = sshll.u32 %s2, 4
          %s317 = int_to_ptr.vmem [resolvable:$true] %s316
          %319 = dma.vmem_to_smem %s317, 16, [#allocation5], [#allocation6]
        $region20: #{net_forward.1} parent=11 // pred_fallthru
          _
        // Predicated region
        $region21: #{net_forward.1} parent=11 // pred_check
          %p320 = pneg %p112
        $region22: #{net_forward.1} parent=11 // pred_check_branch
          %322 = sbr.rel (%p320) target = $region24
        $region23: #{net_forward.1} parent=11 // pred_region
          %324 = vsyncadd [#allocation6], 0
          %s325 = sshll.u32 %s3, 4
          %s326 = int_to_ptr.vmem [resolvable:$true] %s325
          %331 = dma.vmem_to_smem %s326, 256, [#allocation7], [#allocation6], 128, 128, 8
        $region24: #{net_forward.1} parent=11 // pred_fallthru
          _
        // Predicated region
        $region25: #{net_forward.1} parent=11 // pred_check
          %p332 = pneg %p133
        $region26: #{net_forward.1} parent=11 // pred_check_branch
          %334 = sbr.rel (%p332) target = $region28
        $region27: #{net_forward.1} parent=11 // pred_region
          %336 = vsyncadd [#allocation9], 0
          %s338 = sshll.u32 %s4, 4
          %s339 = int_to_ptr.vmem [resolvable:$true] %s338
          %341 = dma.vmem_to_smem %s339, 16, [#allocation8], [#allocation9]
        $region28: #{net_forward.1} parent=11 // pred_fallthru
          _
        // Predicated region
        $region29: #{net_forward.1} parent=11 // pred_check
          %p342 = pneg %p154
        $region30: #{net_forward.1} parent=11 // pred_check_branch
          %344 = sbr.rel (%p342) target = $region32
        $region31: #{net_forward.1} parent=11 // pred_region
          _
        $region32: #{net_forward.1} parent=11 // pred_fallthru
          _
        // Predicated region
        $region33: #{net_forward.1} parent=11 // pred_check
          %p345 = pneg %p175
        $region34: #{net_forward.1} parent=11 // pred_check_branch
          %347 = sbr.rel (%p345) target = $region36
        $region35: #{net_forward.1} parent=11 // pred_region
          _
        $region36: #{net_forward.1} parent=11 // pred_fallthru
          _
        // Predicated region
        $region37: #{net_forward.1} parent=11 // pred_check
          %p348 = pneg %p196
        $region38: #{net_forward.1} parent=11 // pred_check_branch
          %350 = sbr.rel (%p348) target = $region40
        $region39: #{net_forward.1} parent=11 // pred_region
          _
        $region40: #{net_forward.1} parent=11 // pred_fallthru
          _
        // Predicated region
        $region41: #{net_forward.1} parent=11 // pred_check
          %p351 = pneg %p217
        $region42: #{net_forward.1} parent=11 // pred_check_branch
          %353 = sbr.rel (%p351) target = $region44
        $region43: #{net_forward.1} parent=11 // pred_region
          _
        $region44: #{net_forward.1} parent=11 // pred_fallthru
          _
        // Predicated region
        $region45: #{net_forward.1} parent=11 // pred_check
          %p354 = pneg %p238
        $region46: #{net_forward.1} parent=11 // pred_check_branch
          %356 = sbr.rel (%p354) target = $region48
        $region47: #{net_forward.1} parent=11 // pred_region
          _
        $region48: #{net_forward.1} parent=11 // pred_fallthru
          _
        // Predicated region
        $region49: #{net_forward.1} parent=11 // pred_check
          %p357 = pneg %p259
        $region50: #{net_forward.1} parent=11 // pred_check_branch
          %359 = sbr.rel (%p357) target = $region52
        $region51: #{net_forward.1} parent=11 // pred_region
          _
        $region52: #{net_forward.1} parent=11 // pred_fallthru
          _
      $region12: #{net_forward.1} parent=5 // pred_fallthru
        _
      %p360 = scmp.lt.s32.totalorder %s23, 2
      // Predicated region
      $region53: #{net_forward.1} parent=5 // pred_check
        %p361 = pneg %p360
      $region54: #{net_forward.1} parent=5 // pred_check_branch
        %363 = sbr.rel (%p361) target = $region56
      $region55: #{net_forward.1} parent=5 // pred_region
        // Predicated region
        $region57: #{net_forward.1} parent=55 // pred_check
          %p364 = pneg %p43
        $region58: #{net_forward.1} parent=55 // pred_check_branch
          %366 = sbr.rel (%p364) target = $region60
        $region59: #{net_forward.1} parent=55 // pred_region
          %p367 = scmp.lt.s32.totalorder %s23, 1
          %s368 = scalar_select %p367, %s23, 1
          %s369 = smul.addr %s368, 4
          %s370 = smul.addr %s369, 8
          %s371 = scalar_lea.vmem %s0, %s370
        $region60: #{net_forward.1} parent=55 // pred_fallthru
          _
      $region56: #{net_forward.1} parent=5 // pred_fallthru
        _
      %p372 = scmp.le.s32.totalorder 1, %s23
      %p373 = scmp.lt.s32.totalorder %s23, 3
      %p374 = pnand %p372, %p373
      %p375 = pneg %p374
      // Predicated region
      $region61: #{net_forward.1} parent=5 // pred_check
        _
      $region62: #{net_forward.1} parent=5 // pred_check_branch
        %377 = sbr.rel (%p374) target = $region64
      $region63: #{net_forward.1} parent=5 // pred_region
        %s378 = ssub.s32 %s23, 1
        // Predicated region
        $region65: #{net_forward.1} parent=63 // pred_check
          %p379 = pneg %p70
        $region66: #{net_forward.1} parent=63 // pred_check_branch
          %381 = sbr.rel (%p379) target = $region68
        $region67: #{net_forward.1} parent=63 // pred_region
          %383 = dma.done [#allocation4], 128
        $region68: #{net_forward.1} parent=63 // pred_fallthru
          _
        // Predicated region
        $region69: #{net_forward.1} parent=63 // pred_check
          %p384 = pneg %p91
        $region70: #{net_forward.1} parent=63 // pred_check_branch
          %386 = sbr.rel (%p384) target = $region72
        $region71: #{net_forward.1} parent=63 // pred_region
          %388 = dma.done [#allocation6], 16
        $region72: #{net_forward.1} parent=63 // pred_fallthru
          _
        // Predicated region
        $region73: #{net_forward.1} parent=63 // pred_check
          %p389 = pneg %p112
        $region74: #{net_forward.1} parent=63 // pred_check_branch
          %391 = sbr.rel (%p389) target = $region76
        $region75: #{net_forward.1} parent=63 // pred_region
          %393 = dma.done [#allocation6], 256
        $region76: #{net_forward.1} parent=63 // pred_fallthru
          _
        // Predicated region
        $region77: #{net_forward.1} parent=63 // pred_check
          %p394 = pneg %p133
        $region78: #{net_forward.1} parent=63 // pred_check_branch
          %396 = sbr.rel (%p394) target = $region80
        $region79: #{net_forward.1} parent=63 // pred_region
          %398 = dma.done [#allocation9], 16
        $region80: #{net_forward.1} parent=63 // pred_fallthru
          _
        %399 = sfence
        %p400 = scmp.lt.s32.totalorder %s28, 1
        %s401 = scalar_select %p400, %s28, 1
        %s402 = smul.addr %s401, 4
        %s403 = smul.addr %s402, 8
        %s404 = scalar_lea.vmem %s0, %s403
        %p405 = pneg %p49
        %p406 = pneg %p46
        %p407 = pneg %p70
        %p408 = pneg %p67
        %p409 = pneg %p91
        %p410 = pneg %p88
        %p411 = pneg %p112
        %p412 = pneg %p109
        %p413 = pneg %p133
        %p414 = pneg %p130
        %p415 = pneg %p154
        %p416 = pneg %p151
        %p417 = pneg %p175
        %p418 = pneg %p172
        %p419 = pneg %p196
        %p420 = pneg %p193
        %p421 = pneg %p217
        %p422 = pneg %p214
        %p423 = pneg %p238
        %p424 = pneg %p235
        %p425 = pneg %p259
        %p426 = pneg %p256
        %p427 = pneg %p285
        %p428 = pneg %p282
        %s429 = sand.u32 %s272, 1
        %s430 = scalar_lea.sflag [#allocation3], %s429
        %s431 = sand.u32 %s272, 1
        %s432 = scalar_lea.vmem [#allocation10], %s431
        %p433 = scmp.lt.s32.totalorder %s28, 1
        %s434 = scalar_select %p433, %s28, 1
        %s435 = smul.addr %s434, 4
        %s436 = smul.addr %s435, 8
        %s437 = scalar_lea.vmem %s0, %s436
        %v438 = vld [vmem:[%s437] sm:$0xff]
        %v439 = vld [vmem:[%s437 + $0x8] sm:$0xff]
        %v440 = vld [vmem:[%s437 + $0x10] sm:$0xff]
        %v441 = vld [vmem:[%s437 + $0x18] sm:$0xff]
        %v442 = vlaneseq
        %v443 = vshrl.u32 %v442, 7
        %v444 = vadd.s32 %v443, 8
        %v445 = vlaneseq
        %v446 = vand.u32 %v445, 127
        %v447 = vmul.u32 %v443, 2
        %v448 = vmul.u32 %v444, 2
        %vm449 = vcmp.eq.s32.totalorder %v446, %v447
        %vm450 = vcmp.eq.s32.totalorder %v446, %v448
        %v451 = vsel %vm449, 1, 0
        %v452 = vsel %vm450, 1, 0
        %v453 = vcvt.s32.f32 %v451
        %v454 = vcvt.s32.f32 %v452
        %v455 = vadd.s32 %v443, 16
        %v456 = vadd.s32 %v443, 24
        %v457 = vmul.u32 %v446, 2
        %vm458 = vcmp.eq.s32.totalorder %v443, %v457
        %vm459 = vcmp.eq.s32.totalorder %v444, %v457
        %vm460 = vcmp.eq.s32.totalorder %v455, %v457
        %vm461 = vcmp.eq.s32.totalorder %v456, %v457
        %v462 = vsel %vm458, 1, 0
        %v463 = vsel %vm459, 1, 0
        %v464 = vsel %vm460, 1, 0
        %v465 = vsel %vm461, 1, 0
        %v466 = vcvt.s32.f32 %v462
        %v467 = vcvt.s32.f32 %v463
        %v468 = vcvt.s32.f32 %v464
        %v469 = vcvt.s32.f32 %v465
        %s470 = sld [smem:[#allocation2]]
        %v471 = vstv %s470
        %v472 = vmul.f32 %v471, %v438
        %v473 = vmul.f32 %v471, %v439
        %v474 = vmul.f32 %v471, %v440
        %v475 = vmul.f32 %v471, %v441
        %s476 = sld [smem:[#allocation2 + $0x1]]
        %v477 = vstv %s476
        %v478 = vmul.f32 %v477, %v438
        %v479 = vmul.f32 %v477, %v439
        %v480 = vmul.f32 %v477, %v440
        %v481 = vmul.f32 %v477, %v441
        %486 = vrot.lane.b32.xlu0 %v478, 127
        %v487 = vpop.permute.xlu0 %486
        %488 = vrot.lane.b32.xlu0 %v479, 127
        %v489 = vpop.permute.xlu0 %488
        %490 = vrot.lane.b32.xlu0 %v480, 127
        %v491 = vpop.permute.xlu0 %490
        %492 = vrot.lane.b32.xlu0 %v481, 127
        %v493 = vpop.permute.xlu0 %492
        %v498 = vadd.f32 %v472, %v487
        %v499 = vadd.f32 %v473, %v489
        %v500 = vadd.f32 %v474, %v491
        %v501 = vadd.f32 %v475, %v493
        %s502 = sld [smem:[#allocation2 + $0x2]]
        %v503 = vstv %s502
        %v504 = vmul.f32 %v503, %v438
        %v505 = vmul.f32 %v503, %v439
        %v506 = vmul.f32 %v503, %v440
        %v507 = vmul.f32 %v503, %v441
        %512 = vrot.lane.b32.xlu0 %v504, 126
        %v513 = vpop.permute.xlu0 %512
        %514 = vrot.lane.b32.xlu0 %v505, 126
        %v515 = vpop.permute.xlu0 %514
        %516 = vrot.lane.b32.xlu0 %v506, 126
        %v517 = vpop.permute.xlu0 %516
        %518 = vrot.lane.b32.xlu0 %v507, 126
        %v519 = vpop.permute.xlu0 %518
        %v524 = vadd.f32 %v498, %v513
        %v525 = vadd.f32 %v499, %v515
        %v526 = vadd.f32 %v500, %v517
        %v527 = vadd.f32 %v501, %v519
        %s528 = sld [smem:[#allocation2 + $0x3]]
        %v529 = vstv %s528
        %v530 = vmul.f32 %v529, %v438
        %v531 = vmul.f32 %v529, %v439
        %v532 = vmul.f32 %v529, %v440
        %v533 = vmul.f32 %v529, %v441
        %vm538 = vcmask 1046528
        %v539 = vrot.slane %v530, 1
        %v540 = vrot.slane %v531, 1
        %v541 = vsel %vm538, %v539, %v540
        %v542 = vrot.slane %v532, 1
        %v543 = vsel %vm538, %v540, %v542
        %v544 = vrot.slane %v533, 1
        %v545 = vsel %vm538, %v542, %v544
        %v550 = vadd.f32 %v524, %v541
        %v551 = vadd.f32 %v525, %v543
        %v552 = vadd.f32 %v526, %v545
        %v553 = vadd.f32 %v527, %v544
        %s554 = sld [smem:[#allocation2 + $0x4]]
        %v555 = vstv %s554
        %v556 = vmul.f32 %v555, %v438
        %v557 = vmul.f32 %v555, %v439
        %v558 = vmul.f32 %v555, %v440
        %v559 = vmul.f32 %v555, %v441
        %v564 = vrot.slane %v556, 1
        %v565 = vrot.slane %v557, 1
        %v566 = vsel %vm538, %v564, %v565
        %v567 = vrot.slane %v558, 1
        %v568 = vsel %vm538, %v565, %v567
        %v569 = vrot.slane %v559, 1
        %v570 = vsel %vm538, %v567, %v569
        %571 = vrot.lane.b32.xlu0 %v566, 127
        %v572 = vpop.permute.xlu0 %571
        %573 = vrot.lane.b32.xlu0 %v568, 127
        %v574 = vpop.permute.xlu0 %573
        %575 = vrot.lane.b32.xlu0 %v570, 127
        %v576 = vpop.permute.xlu0 %575
        %577 = vrot.lane.b32.xlu0 %v569, 127
        %v578 = vpop.permute.xlu0 %577
        %v583 = vadd.f32 %v550, %v572
        %v584 = vadd.f32 %v551, %v574
        %v585 = vadd.f32 %v552, %v576
        %v586 = vadd.f32 %v553, %v578
        %s587 = sld [smem:[#allocation2 + $0x5]]
        %v588 = vstv %s587
        %v589 = vmul.f32 %v588, %v438
        %v590 = vmul.f32 %v588, %v439
        %v591 = vmul.f32 %v588, %v440
        %v592 = vmul.f32 %v588, %v441
        %v597 = vrot.slane %v589, 1
        %v598 = vrot.slane %v590, 1
        %v599 = vsel %vm538, %v597, %v598
        %v600 = vrot.slane %v591, 1
        %v601 = vsel %vm538, %v598, %v600
        %v602 = vrot.slane %v592, 1
        %v603 = vsel %vm538, %v600, %v602
        %604 = vrot.lane.b32.xlu0 %v599, 126
        %v605 = vpop.permute.xlu0 %604
        %606 = vrot.lane.b32.xlu0 %v601, 126
        %v607 = vpop.permute.xlu0 %606
        %608 = vrot.lane.b32.xlu0 %v603, 126
        %v609 = vpop.permute.xlu0 %608
        %610 = vrot.lane.b32.xlu0 %v602, 126
        %v611 = vpop.permute.xlu0 %610
        %v616 = vadd.f32 %v583, %v605
        %v617 = vadd.f32 %v584, %v607
        %v618 = vadd.f32 %v585, %v609
        %v619 = vadd.f32 %v586, %v611
        %s620 = sld [smem:[#allocation2 + $0x6]]
        %v621 = vstv %s620
        %v622 = vmul.f32 %v621, %v438
        %v623 = vmul.f32 %v621, %v439
        %v624 = vmul.f32 %v621, %v440
        %v625 = vmul.f32 %v621, %v441
        %vm630 = vcmask 1045504
        %v631 = vrot.slane %v622, 2
        %v632 = vrot.slane %v623, 2
        %v633 = vsel %vm630, %v631, %v632
        %v634 = vrot.slane %v624, 2
        %v635 = vsel %vm630, %v632, %v634
        %v636 = vrot.slane %v625, 2
        %v637 = vsel %vm630, %v634, %v636
        %v642 = vadd.f32 %v616, %v633
        %v643 = vadd.f32 %v617, %v635
        %v644 = vadd.f32 %v618, %v637
        %v645 = vadd.f32 %v619, %v636
        %s646 = sld [smem:[#allocation2 + $0x7]]
        %v647 = vstv %s646
        %v648 = vmul.f32 %v647, %v438
        %v649 = vmul.f32 %v647, %v439
        %v650 = vmul.f32 %v647, %v440
        %v651 = vmul.f32 %v647, %v441
        %v656 = vrot.slane %v648, 2
        %v657 = vrot.slane %v649, 2
        %v658 = vsel %vm630, %v656, %v657
        %v659 = vrot.slane %v650, 2
        %v660 = vsel %vm630, %v657, %v659
        %v661 = vrot.slane %v651, 2
        %v662 = vsel %vm630, %v659, %v661
        %663 = vrot.lane.b32.xlu0 %v658, 127
        %v664 = vpop.permute.xlu0 %663
        %665 = vrot.lane.b32.xlu0 %v660, 127
        %v666 = vpop.permute.xlu0 %665
        %667 = vrot.lane.b32.xlu0 %v662, 127
        %v668 = vpop.permute.xlu0 %667
        %669 = vrot.lane.b32.xlu0 %v661, 127
        %v670 = vpop.permute.xlu0 %669
        %v675 = vadd.f32 %v642, %v664
        %v676 = vadd.f32 %v643, %v666
        %v677 = vadd.f32 %v644, %v668
        %v678 = vadd.f32 %v645, %v670
        %s679 = sld [smem:[#allocation2 + $0x8]]
        %v680 = vstv %s679
        %v681 = vmul.f32 %v680, %v438
        %v682 = vmul.f32 %v680, %v439
        %v683 = vmul.f32 %v680, %v440
        %v684 = vmul.f32 %v680, %v441
        %v689 = vrot.slane %v681, 2
        %v690 = vrot.slane %v682, 2
        %v691 = vsel %vm630, %v689, %v690
        %v692 = vrot.slane %v683, 2
        %v693 = vsel %vm630, %v690, %v692
        %v694 = vrot.slane %v684, 2
        %v695 = vsel %vm630, %v692, %v694
        %696 = vrot.lane.b32.xlu0 %v691, 126
        %v697 = vpop.permute.xlu0 %696
        %698 = vrot.lane.b32.xlu0 %v693, 126
        %v699 = vpop.permute.xlu0 %698
        %700 = vrot.lane.b32.xlu0 %v695, 126
        %v701 = vpop.permute.xlu0 %700
        %702 = vrot.lane.b32.xlu0 %v694, 126
        %v703 = vpop.permute.xlu0 %702
        %v708 = vadd.f32 %v675, %v697
        %v709 = vadd.f32 %v676, %v699
        %v710 = vadd.f32 %v677, %v701
        %v711 = vadd.f32 %v678, %v703
        %s712 = sld [smem:[#allocation5]]
        %v713 = vstv %s712
        %v714 = vadd.f32 %v708, %v713
        %v715 = vadd.f32 %v709, %v713
        %v716 = vadd.f32 %v710, %v713
        %v717 = vadd.f32 %v711, %v713
        %v718 = vmax.f32 %v714, 0.0
        %v719 = vmax.f32 %v715, 0.0
        %v720 = vmax.f32 %v716, 0.0
        %v721 = vmax.f32 %v717, 0.0
        %v726 = vrot.slane %v718, 1
        %v727 = vrot.slane %v719, 1
        %v728 = vsel %vm538, %v726, %v727
        %v729 = vrot.slane %v720, 1
        %v730 = vsel %vm538, %v727, %v729
        %v731 = vrot.slane %v721, 1
        %v732 = vsel %vm538, %v729, %v731
        %v737 = vmax.f32 %v718, %v728
        %v738 = vmax.f32 %v719, %v730
        %v739 = vmax.f32 %v720, %v732
        %v740 = vmax.f32 %v721, %v731
        %745 = vrot.lane.b32.xlu0 %v737, 127
        %v746 = vpop.permute.xlu0 %745
        %747 = vrot.lane.b32.xlu0 %v738, 127
        %v748 = vpop.permute.xlu0 %747
        %749 = vrot.lane.b32.xlu0 %v739, 127
        %v750 = vpop.permute.xlu0 %749
        %751 = vrot.lane.b32.xlu0 %v740, 127
        %v752 = vpop.permute.xlu0 %751
        %v757 = vmax.f32 %v737, %v746
        %v758 = vmax.f32 %v738, %v748
        %v759 = vmax.f32 %v739, %v750
        %v760 = vmax.f32 %v740, %v752
        %vm761 = vcmask 236544
        %v763 = vsel %vm761, %v453, 0
        %v766 = vsel %vm761, %v454, 0
        %vm768 = vcmask 1044480
        %v770 = vsel %vm768, %v760, 0
        %772 = vmatpush.msra.mxu0 0.0
        %773 = vmatpush.msra.mxu0 0.0
        %774 = vmatpush.msra.mxu0 0.0
        %775 = vmatpush.msra.mxu0 0.0
        %776 = vmatpush.msra.mxu0 0.0
        %777 = vmatpush.msra.mxu0 0.0
        %778 = vmatpush.msra.mxu0 0.0
        %779 = vmatpush.msra.mxu0 0.0
        %780 = vmatpush.msra.mxu0 0.0
        %781 = vmatpush.msra.mxu0 0.0
        %782 = vmatpush.msra.mxu0 0.0
        %783 = vmatpush.msra.mxu0 0.0
        %784 = vmatpush.msra.mxu0 %v770
        %785 = vmatpush.msra.mxu0 %v759
        %786 = vmatpush.msra.mxu0 %v758
        %787 = vmatpush.msra.mxu0 %v757
        %788 = vmatmul.f32.gmra.mxu0 %v763
        %v789 = vpop.f32.mrf.mxu0
        %v790 = vadd.f32 0.0, %v789
        %791 = vmatmul.f32.gmra.mxu0 %v766
        %v792 = vpop.f32.mrf.mxu0
        %v793 = vadd.f32 0.0, %v792
        %794 = vdwg.mxu0
        %v796 = vsel %vm761, %v790, 0
        %v799 = vsel %vm761, %v793, 0
        %v802 = vsel %vm768, %v469, 0
        %804 = vmatpush.msra.mxu0 0.0
        %805 = vmatpush.msra.mxu0 0.0
        %806 = vmatpush.msra.mxu0 0.0
        %807 = vmatpush.msra.mxu0 0.0
        %808 = vmatpush.msra.mxu0 0.0
        %809 = vmatpush.msra.mxu0 0.0
        %810 = vmatpush.msra.mxu0 0.0
        %811 = vmatpush.msra.mxu0 0.0
        %812 = vmatpush.msra.mxu0 0.0
        %813 = vmatpush.msra.mxu0 0.0
        %814 = vmatpush.msra.mxu0 0.0
        %815 = vmatpush.msra.mxu0 0.0
        %816 = vmatpush.msra.mxu0 %v802
        %817 = vmatpush.msra.mxu0 %v468
        %818 = vmatpush.msra.mxu0 %v467
        %819 = vmatpush.msra.mxu0 %v466
        %820 = vmatmul.f32.gmra.mxu0 %v796
        %v821 = vpop.f32.mrf.mxu0
        %v822 = vadd.f32 0.0, %v821
        %823 = vmatmul.f32.gmra.mxu0 %v799
        %v824 = vpop.f32.mrf.mxu0
        %v825 = vadd.f32 0.0, %v824
        %826 = vdwg.mxu0
        %s827 = sld [smem:[#allocation2 + $0x80]]
        %v828 = vstv %s827
        %v829 = vmul.f32 %v828, %v438
        %v830 = vmul.f32 %v828, %v439
        %v831 = vmul.f32 %v828, %v440
        %v832 = vmul.f32 %v828, %v441
        %s833 = sld [smem:[#allocation2 + $0x81]]
        %v834 = vstv %s833
        %v835 = vmul.f32 %v834, %v438
        %v836 = vmul.f32 %v834, %v439
        %v837 = vmul.f32 %v834, %v440
        %v838 = vmul.f32 %v834, %v441
        %843 = vrot.lane.b32.xlu0 %v835, 127
        %v844 = vpop.permute.xlu0 %843
        %845 = vrot.lane.b32.xlu0 %v836, 127
        %v846 = vpop.permute.xlu0 %845
        %847 = vrot.lane.b32.xlu0 %v837, 127
        %v848 = vpop.permute.xlu0 %847
        %849 = vrot.lane.b32.xlu0 %v838, 127
        %v850 = vpop.permute.xlu0 %849
        %v855 = vadd.f32 %v829, %v844
        %v856 = vadd.f32 %v830, %v846
        %v857 = vadd.f32 %v831, %v848
        %v858 = vadd.f32 %v832, %v850
        %s859 = sld [smem:[#allocation2 + $0x82]]
        %v860 = vstv %s859
        %v861 = vmul.f32 %v860, %v438
        %v862 = vmul.f32 %v860, %v439
        %v863 = vmul.f32 %v860, %v440
        %v864 = vmul.f32 %v860, %v441
        %869 = vrot.lane.b32.xlu0 %v861, 126
        %v870 = vpop.permute.xlu0 %869
        %871 = vrot.lane.b32.xlu0 %v862, 126
        %v872 = vpop.permute.xlu0 %871
        %873 = vrot.lane.b32.xlu0 %v863, 126
        %v874 = vpop.permute.xlu0 %873
        %875 = vrot.lane.b32.xlu0 %v864, 126
        %v876 = vpop.permute.xlu0 %875
        %v881 = vadd.f32 %v855, %v870
        %v882 = vadd.f32 %v856, %v872
        %v883 = vadd.f32 %v857, %v874
        %v884 = vadd.f32 %v858, %v876
        %s885 = sld [smem:[#allocation2 + $0x83]]
        %v886 = vstv %s885
        %v887 = vmul.f32 %v886, %v438
        %v888 = vmul.f32 %v886, %v439
        %v889 = vmul.f32 %v886, %v440
        %v890 = vmul.f32 %v886, %v441
        %v895 = vrot.slane %v887, 1
        %v896 = vrot.slane %v888, 1
        %v897 = vsel %vm538, %v895, %v896
        %v898 = vrot.slane %v889, 1
        %v899 = vsel %vm538, %v896, %v898
        %v900 = vrot.slane %v890, 1
        %v901 = vsel %vm538, %v898, %v900
        %v906 = vadd.f32 %v881, %v897
        %v907 = vadd.f32 %v882, %v899
        %v908 = vadd.f32 %v883, %v901
        %v909 = vadd.f32 %v884, %v900
        %s910 = sld [smem:[#allocation2 + $0x84]]
        %v911 = vstv %s910
        %v912 = vmul.f32 %v911, %v438
        %v913 = vmul.f32 %v911, %v439
        %v914 = vmul.f32 %v911, %v440
        %v915 = vmul.f32 %v911, %v441
        %v920 = vrot.slane %v912, 1
        %v921 = vrot.slane %v913, 1
        %v922 = vsel %vm538, %v920, %v921
        %v923 = vrot.slane %v914, 1
        %v924 = vsel %vm538, %v921, %v923
        %v925 = vrot.slane %v915, 1
        %v926 = vsel %vm538, %v923, %v925
        %927 = vrot.lane.b32.xlu0 %v922, 127
        %v928 = vpop.permute.xlu0 %927
        %929 = vrot.lane.b32.xlu0 %v924, 127
        %v930 = vpop.permute.xlu0 %929
        %931 = vrot.lane.b32.xlu0 %v926, 127
        %v932 = vpop.permute.xlu0 %931
        %933 = vrot.lane.b32.xlu0 %v925, 127
        %v934 = vpop.permute.xlu0 %933
        %v939 = vadd.f32 %v906, %v928
        %v940 = vadd.f32 %v907, %v930
        %v941 = vadd.f32 %v908, %v932
        %v942 = vadd.f32 %v909, %v934
        %s943 = sld [smem:[#allocation2 + $0x85]]
        %v944 = vstv %s943
        %v945 = vmul.f32 %v944, %v438
        %v946 = vmul.f32 %v944, %v439
        %v947 = vmul.f32 %v944, %v440
        %v948 = vmul.f32 %v944, %v441
        %v953 = vrot.slane %v945, 1
        %v954 = vrot.slane %v946, 1
        %v955 = vsel %vm538, %v953, %v954
        %v956 = vrot.slane %v947, 1
        %v957 = vsel %vm538, %v954, %v956
        %v958 = vrot.slane %v948, 1
        %v959 = vsel %vm538, %v956, %v958
        %960 = vrot.lane.b32.xlu0 %v955, 126
        %v961 = vpop.permute.xlu0 %960
        %962 = vrot.lane.b32.xlu0 %v957, 126
        %v963 = vpop.permute.xlu0 %962
        %964 = vrot.lane.b32.xlu0 %v959, 126
        %v965 = vpop.permute.xlu0 %964
        %966 = vrot.lane.b32.xlu0 %v958, 126
        %v967 = vpop.permute.xlu0 %966
        %v972 = vadd.f32 %v939, %v961
        %v973 = vadd.f32 %v940, %v963
        %v974 = vadd.f32 %v941, %v965
        %v975 = vadd.f32 %v942, %v967
        %s976 = sld [smem:[#allocation2 + $0x86]]
        %v977 = vstv %s976
        %v978 = vmul.f32 %v977, %v438
        %v979 = vmul.f32 %v977, %v439
        %v980 = vmul.f32 %v977, %v440
        %v981 = vmul.f32 %v977, %v441
        %v986 = vrot.slane %v978, 2
        %v987 = vrot.slane %v979, 2
        %v988 = vsel %vm630, %v986, %v987
        %v989 = vrot.slane %v980, 2
        %v990 = vsel %vm630, %v987, %v989
        %v991 = vrot.slane %v981, 2
        %v992 = vsel %vm630, %v989, %v991
        %v997 = vadd.f32 %v972, %v988
        %v998 = vadd.f32 %v973, %v990
        %v999 = vadd.f32 %v974, %v992
        %v1000 = vadd.f32 %v975, %v991
        %s1001 = sld [smem:[#allocation2 + $0x87]]
        %v1002 = vstv %s1001
        %v1003 = vmul.f32 %v1002, %v438
        %v1004 = vmul.f32 %v1002, %v439
        %v1005 = vmul.f32 %v1002, %v440
        %v1006 = vmul.f32 %v1002, %v441
        %v1011 = vrot.slane %v1003, 2
        %v1012 = vrot.slane %v1004, 2
        %v1013 = vsel %vm630, %v1011, %v1012
        %v1014 = vrot.slane %v1005, 2
        %v1015 = vsel %vm630, %v1012, %v1014
        %v1016 = vrot.slane %v1006, 2
        %v1017 = vsel %vm630, %v1014, %v1016
        %1018 = vrot.lane.b32.xlu0 %v1013, 127
        %v1019 = vpop.permute.xlu0 %1018
        %1020 = vrot.lane.b32.xlu0 %v1015, 127
        %v1021 = vpop.permute.xlu0 %1020
        %1022 = vrot.lane.b32.xlu0 %v1017, 127
        %v1023 = vpop.permute.xlu0 %1022
        %1024 = vrot.lane.b32.xlu0 %v1016, 127
        %v1025 = vpop.permute.xlu0 %1024
        %v1030 = vadd.f32 %v997, %v1019
        %v1031 = vadd.f32 %v998, %v1021
        %v1032 = vadd.f32 %v999, %v1023
        %v1033 = vadd.f32 %v1000, %v1025
        %s1034 = sld [smem:[#allocation2 + $0x88]]
        %v1035 = vstv %s1034
        %v1036 = vmul.f32 %v1035, %v438
        %v1037 = vmul.f32 %v1035, %v439
        %v1038 = vmul.f32 %v1035, %v440
        %v1039 = vmul.f32 %v1035, %v441
        %v1044 = vrot.slane %v1036, 2
        %v1045 = vrot.slane %v1037, 2
        %v1046 = vsel %vm630, %v1044, %v1045
        %v1047 = vrot.slane %v1038, 2
        %v1048 = vsel %vm630, %v1045, %v1047
        %v1049 = vrot.slane %v1039, 2
        %v1050 = vsel %vm630, %v1047, %v1049
        %1051 = vrot.lane.b32.xlu0 %v1046, 126
        %v1052 = vpop.permute.xlu0 %1051
        %1053 = vrot.lane.b32.xlu0 %v1048, 126
        %v1054 = vpop.permute.xlu0 %1053
        %1055 = vrot.lane.b32.xlu0 %v1050, 126
        %v1056 = vpop.permute.xlu0 %1055
        %1057 = vrot.lane.b32.xlu0 %v1049, 126
        %v1058 = vpop.permute.xlu0 %1057
        %v1063 = vadd.f32 %v1030, %v1052
        %v1064 = vadd.f32 %v1031, %v1054
        %v1065 = vadd.f32 %v1032, %v1056
        %v1066 = vadd.f32 %v1033, %v1058
        %s1067 = sld [smem:[#allocation5 + $0x1]]
        %v1068 = vstv %s1067
        %v1069 = vadd.f32 %v1063, %v1068
        %v1070 = vadd.f32 %v1064, %v1068
        %v1071 = vadd.f32 %v1065, %v1068
        %v1072 = vadd.f32 %v1066, %v1068
        %v1073 = vmax.f32 %v1069, 0.0
        %v1074 = vmax.f32 %v1070, 0.0
        %v1075 = vmax.f32 %v1071, 0.0
        %v1076 = vmax.f32 %v1072, 0.0
        %v1081 = vrot.slane %v1073, 1
        %v1082 = vrot.slane %v1074, 1
        %v1083 = vsel %vm538, %v1081, %v1082
        %v1084 = vrot.slane %v1075, 1
        %v1085 = vsel %vm538, %v1082, %v1084
        %v1086 = vrot.slane %v1076, 1
        %v1087 = vsel %vm538, %v1084, %v1086
        %v1092 = vmax.f32 %v1073, %v1083
        %v1093 = vmax.f32 %v1074, %v1085
        %v1094 = vmax.f32 %v1075, %v1087
        %v1095 = vmax.f32 %v1076, %v1086
        %1100 = vrot.lane.b32.xlu0 %v1092, 127
        %v1101 = vpop.permute.xlu0 %1100
        %1102 = vrot.lane.b32.xlu0 %v1093, 127
        %v1103 = vpop.permute.xlu0 %1102
        %1104 = vrot.lane.b32.xlu0 %v1094, 127
        %v1105 = vpop.permute.xlu0 %1104
        %1106 = vrot.lane.b32.xlu0 %v1095, 127
        %v1107 = vpop.permute.xlu0 %1106
        %v1112 = vmax.f32 %v1092, %v1101
        %v1113 = vmax.f32 %v1093, %v1103
        %v1114 = vmax.f32 %v1094, %v1105
        %v1115 = vmax.f32 %v1095, %v1107
        %v1117 = vsel %vm768, %v1115, 0
        %1119 = vmatpush.msra.mxu0 0.0
        %1120 = vmatpush.msra.mxu0 0.0
        %1121 = vmatpush.msra.mxu0 0.0
        %1122 = vmatpush.msra.mxu0 0.0
        %1123 = vmatpush.msra.mxu0 0.0
        %1124 = vmatpush.msra.mxu0 0.0
        %1125 = vmatpush.msra.mxu0 0.0
        %1126 = vmatpush.msra.mxu0 0.0
        %1127 = vmatpush.msra.mxu0 0.0
        %1128 = vmatpush.msra.mxu0 0.0
        %1129 = vmatpush.msra.mxu0 0.0
        %1130 = vmatpush.msra.mxu0 0.0
        %1131 = vmatpush.msra.mxu0 %v1117
        %1132 = vmatpush.msra.mxu0 %v1114
        %1133 = vmatpush.msra.mxu0 %v1113
        %1134 = vmatpush.msra.mxu0 %v1112
        %1135 = vmatmul.f32.gmra.mxu0 %v763
        %v1136 = vpop.f32.mrf.mxu0
        %v1137 = vadd.f32 0.0, %v1136
        %1138 = vmatmul.f32.gmra.mxu0 %v766
        %v1139 = vpop.f32.mrf.mxu0
        %v1140 = vadd.f32 0.0, %v1139
        %1141 = vdwg.mxu0
        %v1143 = vsel %vm761, %v1137, 0
        %v1146 = vsel %vm761, %v1140, 0
        %1148 = vmatpush.msra.mxu0 0.0
        %1149 = vmatpush.msra.mxu0 0.0
        %1150 = vmatpush.msra.mxu0 0.0
        %1151 = vmatpush.msra.mxu0 0.0
        %1152 = vmatpush.msra.mxu0 0.0
        %1153 = vmatpush.msra.mxu0 0.0
        %1154 = vmatpush.msra.mxu0 0.0
        %1155 = vmatpush.msra.mxu0 0.0
        %1156 = vmatpush.msra.mxu0 0.0
        %1157 = vmatpush.msra.mxu0 0.0
        %1158 = vmatpush.msra.mxu0 0.0
        %1159 = vmatpush.msra.mxu0 0.0
        %1160 = vmatpush.msra.mxu0 %v802
        %1161 = vmatpush.msra.mxu0 %v468
        %1162 = vmatpush.msra.mxu0 %v467
        %1163 = vmatpush.msra.mxu0 %v466
        %1164 = vmatmul.f32.gmra.mxu0 %v1143
        %v1165 = vpop.f32.mrf.mxu0
        %v1166 = vadd.f32 0.0, %v1165
        %1167 = vmatmul.f32.gmra.mxu0 %v1146
        %v1168 = vpop.f32.mrf.mxu0
        %v1169 = vadd.f32 0.0, %v1168
        %1170 = vdwg.mxu0
        %s1171 = sld [smem:[#allocation2 + $0x100]]
        %v1172 = vstv %s1171
        %v1173 = vmul.f32 %v1172, %v438
        %v1174 = vmul.f32 %v1172, %v439
        %v1175 = vmul.f32 %v1172, %v440
        %v1176 = vmul.f32 %v1172, %v441
        %s1177 = sld [smem:[#allocation2 + $0x101]]
        %v1178 = vstv %s1177
        %v1179 = vmul.f32 %v1178, %v438
        %v1180 = vmul.f32 %v1178, %v439
        %v1181 = vmul.f32 %v1178, %v440
        %v1182 = vmul.f32 %v1178, %v441
        %1187 = vrot.lane.b32.xlu0 %v1179, 127
        %v1188 = vpop.permute.xlu0 %1187
        %1189 = vrot.lane.b32.xlu0 %v1180, 127
        %v1190 = vpop.permute.xlu0 %1189
        %1191 = vrot.lane.b32.xlu0 %v1181, 127
        %v1192 = vpop.permute.xlu0 %1191
        %1193 = vrot.lane.b32.xlu0 %v1182, 127
        %v1194 = vpop.permute.xlu0 %1193
        %v1199 = vadd.f32 %v1173, %v1188
        %v1200 = vadd.f32 %v1174, %v1190
        %v1201 = vadd.f32 %v1175, %v1192
        %v1202 = vadd.f32 %v1176, %v1194
        %s1203 = sld [smem:[#allocation2 + $0x102]]
        %v1204 = vstv %s1203
        %v1205 = vmul.f32 %v1204, %v438
        %v1206 = vmul.f32 %v1204, %v439
        %v1207 = vmul.f32 %v1204, %v440
        %v1208 = vmul.f32 %v1204, %v441
        %1213 = vrot.lane.b32.xlu0 %v1205, 126
        %v1214 = vpop.permute.xlu0 %1213
        %1215 = vrot.lane.b32.xlu0 %v1206, 126
        %v1216 = vpop.permute.xlu0 %1215
        %1217 = vrot.lane.b32.xlu0 %v1207, 126
        %v1218 = vpop.permute.xlu0 %1217
        %1219 = vrot.lane.b32.xlu0 %v1208, 126
        %v1220 = vpop.permute.xlu0 %1219
        %v1225 = vadd.f32 %v1199, %v1214
        %v1226 = vadd.f32 %v1200, %v1216
        %v1227 = vadd.f32 %v1201, %v1218
        %v1228 = vadd.f32 %v1202, %v1220
        %s1229 = sld [smem:[#allocation2 + $0x103]]
        %v1230 = vstv %s1229
        %v1231 = vmul.f32 %v1230, %v438
        %v1232 = vmul.f32 %v1230, %v439
        %v1233 = vmul.f32 %v1230, %v440
        %v1234 = vmul.f32 %v1230, %v441
        %v1239 = vrot.slane %v1231, 1
        %v1240 = vrot.slane %v1232, 1
        %v1241 = vsel %vm538, %v1239, %v1240
        %v1242 = vrot.slane %v1233, 1
        %v1243 = vsel %vm538, %v1240, %v1242
        %v1244 = vrot.slane %v1234, 1
        %v1245 = vsel %vm538, %v1242, %v1244
        %v1250 = vadd.f32 %v1225, %v1241
        %v1251 = vadd.f32 %v1226, %v1243
        %v1252 = vadd.f32 %v1227, %v1245
        %v1253 = vadd.f32 %v1228, %v1244
        %s1254 = sld [smem:[#allocation2 + $0x104]]
        %v1255 = vstv %s1254
        %v1256 = vmul.f32 %v1255, %v438
        %v1257 = vmul.f32 %v1255, %v439
        %v1258 = vmul.f32 %v1255, %v440
        %v1259 = vmul.f32 %v1255, %v441
        %v1264 = vrot.slane %v1256, 1
        %v1265 = vrot.slane %v1257, 1
        %v1266 = vsel %vm538, %v1264, %v1265
        %v1267 = vrot.slane %v1258, 1
        %v1268 = vsel %vm538, %v1265, %v1267
        %v1269 = vrot.slane %v1259, 1
        %v1270 = vsel %vm538, %v1267, %v1269
        %1271 = vrot.lane.b32.xlu0 %v1266, 127
        %v1272 = vpop.permute.xlu0 %1271
        %1273 = vrot.lane.b32.xlu0 %v1268, 127
        %v1274 = vpop.permute.xlu0 %1273
        %1275 = vrot.lane.b32.xlu0 %v1270, 127
        %v1276 = vpop.permute.xlu0 %1275
        %1277 = vrot.lane.b32.xlu0 %v1269, 127
        %v1278 = vpop.permute.xlu0 %1277
        %v1283 = vadd.f32 %v1250, %v1272
        %v1284 = vadd.f32 %v1251, %v1274
        %v1285 = vadd.f32 %v1252, %v1276
        %v1286 = vadd.f32 %v1253, %v1278
        %s1287 = sld [smem:[#allocation2 + $0x105]]
        %v1288 = vstv %s1287
        %v1289 = vmul.f32 %v1288, %v438
        %v1290 = vmul.f32 %v1288, %v439
        %v1291 = vmul.f32 %v1288, %v440
        %v1292 = vmul.f32 %v1288, %v441
        %v1297 = vrot.slane %v1289, 1
        %v1298 = vrot.slane %v1290, 1
        %v1299 = vsel %vm538, %v1297, %v1298
        %v1300 = vrot.slane %v1291, 1
        %v1301 = vsel %vm538, %v1298, %v1300
        %v1302 = vrot.slane %v1292, 1
        %v1303 = vsel %vm538, %v1300, %v1302
        %1304 = vrot.lane.b32.xlu0 %v1299, 126
        %v1305 = vpop.permute.xlu0 %1304
        %1306 = vrot.lane.b32.xlu0 %v1301, 126
        %v1307 = vpop.permute.xlu0 %1306
        %1308 = vrot.lane.b32.xlu0 %v1303, 126
        %v1309 = vpop.permute.xlu0 %1308
        %1310 = vrot.lane.b32.xlu0 %v1302, 126
        %v1311 = vpop.permute.xlu0 %1310
        %v1316 = vadd.f32 %v1283, %v1305
        %v1317 = vadd.f32 %v1284, %v1307
        %v1318 = vadd.f32 %v1285, %v1309
        %v1319 = vadd.f32 %v1286, %v1311
        %s1320 = sld [smem:[#allocation2 + $0x106]]
        %v1321 = vstv %s1320
        %v1322 = vmul.f32 %v1321, %v438
        %v1323 = vmul.f32 %v1321, %v439
        %v1324 = vmul.f32 %v1321, %v440
        %v1325 = vmul.f32 %v1321, %v441
        %v1330 = vrot.slane %v1322, 2
        %v1331 = vrot.slane %v1323, 2
        %v1332 = vsel %vm630, %v1330, %v1331
        %v1333 = vrot.slane %v1324, 2
        %v1334 = vsel %vm630, %v1331, %v1333
        %v1335 = vrot.slane %v1325, 2
        %v1336 = vsel %vm630, %v1333, %v1335
        %v1341 = vadd.f32 %v1316, %v1332
        %v1342 = vadd.f32 %v1317, %v1334
        %v1343 = vadd.f32 %v1318, %v1336
        %v1344 = vadd.f32 %v1319, %v1335
        %s1345 = sld [smem:[#allocation2 + $0x107]]
        %v1346 = vstv %s1345
        %v1347 = vmul.f32 %v1346, %v438
        %v1348 = vmul.f32 %v1346, %v439
        %v1349 = vmul.f32 %v1346, %v440
        %v1350 = vmul.f32 %v1346, %v441
        %v1355 = vrot.slane %v1347, 2
        %v1356 = vrot.slane %v1348, 2
        %v1357 = vsel %vm630, %v1355, %v1356
        %v1358 = vrot.slane %v1349, 2
        %v1359 = vsel %vm630, %v1356, %v1358
        %v1360 = vrot.slane %v1350, 2
        %v1361 = vsel %vm630, %v1358, %v1360
        %1362 = vrot.lane.b32.xlu0 %v1357, 127
        %v1363 = vpop.permute.xlu0 %1362
        %1364 = vrot.lane.b32.xlu0 %v1359, 127
        %v1365 = vpop.permute.xlu0 %1364
        %1366 = vrot.lane.b32.xlu0 %v1361, 127
        %v1367 = vpop.permute.xlu0 %1366
        %1368 = vrot.lane.b32.xlu0 %v1360, 127
        %v1369 = vpop.permute.xlu0 %1368
        %v1374 = vadd.f32 %v1341, %v1363
        %v1375 = vadd.f32 %v1342, %v1365
        %v1376 = vadd.f32 %v1343, %v1367
        %v1377 = vadd.f32 %v1344, %v1369
        %s1378 = sld [smem:[#allocation2 + $0x108]]
        %v1379 = vstv %s1378
        %v1380 = vmul.f32 %v1379, %v438
        %v1381 = vmul.f32 %v1379, %v439
        %v1382 = vmul.f32 %v1379, %v440
        %v1383 = vmul.f32 %v1379, %v441
        %v1388 = vrot.slane %v1380, 2
        %v1389 = vrot.slane %v1381, 2
        %v1390 = vsel %vm630, %v1388, %v1389
        %v1391 = vrot.slane %v1382, 2
        %v1392 = vsel %vm630, %v1389, %v1391
        %v1393 = vrot.slane %v1383, 2
        %v1394 = vsel %vm630, %v1391, %v1393
        %1395 = vrot.lane.b32.xlu0 %v1390, 126
        %v1396 = vpop.permute.xlu0 %1395
        %1397 = vrot.lane.b32.xlu0 %v1392, 126
        %v1398 = vpop.permute.xlu0 %1397
        %1399 = vrot.lane.b32.xlu0 %v1394, 126
        %v1400 = vpop.permute.xlu0 %1399
        %1401 = vrot.lane.b32.xlu0 %v1393, 126
        %v1402 = vpop.permute.xlu0 %1401
        %v1407 = vadd.f32 %v1374, %v1396
        %v1408 = vadd.f32 %v1375, %v1398
        %v1409 = vadd.f32 %v1376, %v1400
        %v1410 = vadd.f32 %v1377, %v1402
        %s1411 = sld [smem:[#allocation5 + $0x2]]
        %v1412 = vstv %s1411
        %v1413 = vadd.f32 %v1407, %v1412
        %v1414 = vadd.f32 %v1408, %v1412
        %v1415 = vadd.f32 %v1409, %v1412
        %v1416 = vadd.f32 %v1410, %v1412
        %v1417 = vmax.f32 %v1413, 0.0
        %v1418 = vmax.f32 %v1414, 0.0
        %v1419 = vmax.f32 %v1415, 0.0
        %v1420 = vmax.f32 %v1416, 0.0
        %v1425 = vrot.slane %v1417, 1
        %v1426 = vrot.slane %v1418, 1
        %v1427 = vsel %vm538, %v1425, %v1426
        %v1428 = vrot.slane %v1419, 1
        %v1429 = vsel %vm538, %v1426, %v1428
        %v1430 = vrot.slane %v1420, 1
        %v1431 = vsel %vm538, %v1428, %v1430
        %v1436 = vmax.f32 %v1417, %v1427
        %v1437 = vmax.f32 %v1418, %v1429
        %v1438 = vmax.f32 %v1419, %v1431
        %v1439 = vmax.f32 %v1420, %v1430
        %1444 = vrot.lane.b32.xlu0 %v1436, 127
        %v1445 = vpop.permute.xlu0 %1444
        %1446 = vrot.lane.b32.xlu0 %v1437, 127
        %v1447 = vpop.permute.xlu0 %1446
        %1448 = vrot.lane.b32.xlu0 %v1438, 127
        %v1449 = vpop.permute.xlu0 %1448
        %1450 = vrot.lane.b32.xlu0 %v1439, 127
        %v1451 = vpop.permute.xlu0 %1450
        %v1456 = vmax.f32 %v1436, %v1445
        %v1457 = vmax.f32 %v1437, %v1447
        %v1458 = vmax.f32 %v1438, %v1449
        %v1459 = vmax.f32 %v1439, %v1451
        %v1461 = vsel %vm768, %v1459, 0
        %1463 = vmatpush.msra.mxu0 0.0
        %1464 = vmatpush.msra.mxu0 0.0
        %1465 = vmatpush.msra.mxu0 0.0
        %1466 = vmatpush.msra.mxu0 0.0
        %1467 = vmatpush.msra.mxu0 0.0
        %1468 = vmatpush.msra.mxu0 0.0
        %1469 = vmatpush.msra.mxu0 0.0
        %1470 = vmatpush.msra.mxu0 0.0
        %1471 = vmatpush.msra.mxu0 0.0
        %1472 = vmatpush.msra.mxu0 0.0
        %1473 = vmatpush.msra.mxu0 0.0
        %1474 = vmatpush.msra.mxu0 0.0
        %1475 = vmatpush.msra.mxu0 %v1461
        %1476 = vmatpush.msra.mxu0 %v1458
        %1477 = vmatpush.msra.mxu0 %v1457
        %1478 = vmatpush.msra.mxu0 %v1456
        %1479 = vmatmul.f32.gmra.mxu0 %v763
        %v1480 = vpop.f32.mrf.mxu0
        %v1481 = vadd.f32 0.0, %v1480
        %1482 = vmatmul.f32.gmra.mxu0 %v766
        %v1483 = vpop.f32.mrf.mxu0
        %v1484 = vadd.f32 0.0, %v1483
        %1485 = vdwg.mxu0
        %v1487 = vsel %vm761, %v1481, 0
        %v1490 = vsel %vm761, %v1484, 0
        %1492 = vmatpush.msra.mxu0 0.0
        %1493 = vmatpush.msra.mxu0 0.0
        %1494 = vmatpush.msra.mxu0 0.0
        %1495 = vmatpush.msra.mxu0 0.0
        %1496 = vmatpush.msra.mxu0 0.0
        %1497 = vmatpush.msra.mxu0 0.0
        %1498 = vmatpush.msra.mxu0 0.0
        %1499 = vmatpush.msra.mxu0 0.0
        %1500 = vmatpush.msra.mxu0 0.0
        %1501 = vmatpush.msra.mxu0 0.0
        %1502 = vmatpush.msra.mxu0 0.0
        %1503 = vmatpush.msra.mxu0 0.0
        %1504 = vmatpush.msra.mxu0 %v802
        %1505 = vmatpush.msra.mxu0 %v468
        %1506 = vmatpush.msra.mxu0 %v467
        %1507 = vmatpush.msra.mxu0 %v466
        %1508 = vmatmul.f32.gmra.mxu0 %v1487
        %v1509 = vpop.f32.mrf.mxu0
        %v1510 = vadd.f32 0.0, %v1509
        %1511 = vmatmul.f32.gmra.mxu0 %v1490
        %v1512 = vpop.f32.mrf.mxu0
        %v1513 = vadd.f32 0.0, %v1512
        %1514 = vdwg.mxu0
        %s1515 = sld [smem:[#allocation2 + $0x180]]
        %v1516 = vstv %s1515
        %v1517 = vmul.f32 %v1516, %v438
        %v1518 = vmul.f32 %v1516, %v439
        %v1519 = vmul.f32 %v1516, %v440
        %v1520 = vmul.f32 %v1516, %v441
        %s1521 = sld [smem:[#allocation2 + $0x181]]
        %v1522 = vstv %s1521
        %v1523 = vmul.f32 %v1522, %v438
        %v1524 = vmul.f32 %v1522, %v439
        %v1525 = vmul.f32 %v1522, %v440
        %v1526 = vmul.f32 %v1522, %v441
        %1531 = vrot.lane.b32.xlu0 %v1523, 127
        %v1532 = vpop.permute.xlu0 %1531
        %1533 = vrot.lane.b32.xlu0 %v1524, 127
        %v1534 = vpop.permute.xlu0 %1533
        %1535 = vrot.lane.b32.xlu0 %v1525, 127
        %v1536 = vpop.permute.xlu0 %1535
        %1537 = vrot.lane.b32.xlu0 %v1526, 127
        %v1538 = vpop.permute.xlu0 %1537
        %v1543 = vadd.f32 %v1517, %v1532
        %v1544 = vadd.f32 %v1518, %v1534
        %v1545 = vadd.f32 %v1519, %v1536
        %v1546 = vadd.f32 %v1520, %v1538
        %s1547 = sld [smem:[#allocation2 + $0x182]]
        %v1548 = vstv %s1547
        %v1549 = vmul.f32 %v1548, %v438
        %v1550 = vmul.f32 %v1548, %v439
        %v1551 = vmul.f32 %v1548, %v440
        %v1552 = vmul.f32 %v1548, %v441
        %1557 = vrot.lane.b32.xlu0 %v1549, 126
        %v1558 = vpop.permute.xlu0 %1557
        %1559 = vrot.lane.b32.xlu0 %v1550, 126
        %v1560 = vpop.permute.xlu0 %1559
        %1561 = vrot.lane.b32.xlu0 %v1551, 126
        %v1562 = vpop.permute.xlu0 %1561
        %1563 = vrot.lane.b32.xlu0 %v1552, 126
        %v1564 = vpop.permute.xlu0 %1563
        %v1569 = vadd.f32 %v1543, %v1558
        %v1570 = vadd.f32 %v1544, %v1560
        %v1571 = vadd.f32 %v1545, %v1562
        %v1572 = vadd.f32 %v1546, %v1564
        %s1573 = sld [smem:[#allocation2 + $0x183]]
        %v1574 = vstv %s1573
        %v1575 = vmul.f32 %v1574, %v438
        %v1576 = vmul.f32 %v1574, %v439
        %v1577 = vmul.f32 %v1574, %v440
        %v1578 = vmul.f32 %v1574, %v441
        %v1583 = vrot.slane %v1575, 1
        %v1584 = vrot.slane %v1576, 1
        %v1585 = vsel %vm538, %v1583, %v1584
        %v1586 = vrot.slane %v1577, 1
        %v1587 = vsel %vm538, %v1584, %v1586
        %v1588 = vrot.slane %v1578, 1
        %v1589 = vsel %vm538, %v1586, %v1588
        %v1594 = vadd.f32 %v1569, %v1585
        %v1595 = vadd.f32 %v1570, %v1587
        %v1596 = vadd.f32 %v1571, %v1589
        %v1597 = vadd.f32 %v1572, %v1588
        %s1598 = sld [smem:[#allocation2 + $0x184]]
        %v1599 = vstv %s1598
        %v1600 = vmul.f32 %v1599, %v438
        %v1601 = vmul.f32 %v1599, %v439
        %v1602 = vmul.f32 %v1599, %v440
        %v1603 = vmul.f32 %v1599, %v441
        %v1608 = vrot.slane %v1600, 1
        %v1609 = vrot.slane %v1601, 1
        %v1610 = vsel %vm538, %v1608, %v1609
        %v1611 = vrot.slane %v1602, 1
        %v1612 = vsel %vm538, %v1609, %v1611
        %v1613 = vrot.slane %v1603, 1
        %v1614 = vsel %vm538, %v1611, %v1613
        %1615 = vrot.lane.b32.xlu0 %v1610, 127
        %v1616 = vpop.permute.xlu0 %1615
        %1617 = vrot.lane.b32.xlu0 %v1612, 127
        %v1618 = vpop.permute.xlu0 %1617
        %1619 = vrot.lane.b32.xlu0 %v1614, 127
        %v1620 = vpop.permute.xlu0 %1619
        %1621 = vrot.lane.b32.xlu0 %v1613, 127
        %v1622 = vpop.permute.xlu0 %1621
        %v1627 = vadd.f32 %v1594, %v1616
        %v1628 = vadd.f32 %v1595, %v1618
        %v1629 = vadd.f32 %v1596, %v1620
        %v1630 = vadd.f32 %v1597, %v1622
        %s1631 = sld [smem:[#allocation2 + $0x185]]
        %v1632 = vstv %s1631
        %v1633 = vmul.f32 %v1632, %v438
        %v1634 = vmul.f32 %v1632, %v439
        %v1635 = vmul.f32 %v1632, %v440
        %v1636 = vmul.f32 %v1632, %v441
        %v1641 = vrot.slane %v1633, 1
        %v1642 = vrot.slane %v1634, 1
        %v1643 = vsel %vm538, %v1641, %v1642
        %v1644 = vrot.slane %v1635, 1
        %v1645 = vsel %vm538, %v1642, %v1644
        %v1646 = vrot.slane %v1636, 1
        %v1647 = vsel %vm538, %v1644, %v1646
        %1648 = vrot.lane.b32.xlu0 %v1643, 126
        %v1649 = vpop.permute.xlu0 %1648
        %1650 = vrot.lane.b32.xlu0 %v1645, 126
        %v1651 = vpop.permute.xlu0 %1650
        %1652 = vrot.lane.b32.xlu0 %v1647, 126
        %v1653 = vpop.permute.xlu0 %1652
        %1654 = vrot.lane.b32.xlu0 %v1646, 126
        %v1655 = vpop.permute.xlu0 %1654
        %v1660 = vadd.f32 %v1627, %v1649
        %v1661 = vadd.f32 %v1628, %v1651
        %v1662 = vadd.f32 %v1629, %v1653
        %v1663 = vadd.f32 %v1630, %v1655
        %s1664 = sld [smem:[#allocation2 + $0x186]]
        %v1665 = vstv %s1664
        %v1666 = vmul.f32 %v1665, %v438
        %v1667 = vmul.f32 %v1665, %v439
        %v1668 = vmul.f32 %v1665, %v440
        %v1669 = vmul.f32 %v1665, %v441
        %v1674 = vrot.slane %v1666, 2
        %v1675 = vrot.slane %v1667, 2
        %v1676 = vsel %vm630, %v1674, %v1675
        %v1677 = vrot.slane %v1668, 2
        %v1678 = vsel %vm630, %v1675, %v1677
        %v1679 = vrot.slane %v1669, 2
        %v1680 = vsel %vm630, %v1677, %v1679
        %v1685 = vadd.f32 %v1660, %v1676
        %v1686 = vadd.f32 %v1661, %v1678
        %v1687 = vadd.f32 %v1662, %v1680
        %v1688 = vadd.f32 %v1663, %v1679
        %s1689 = sld [smem:[#allocation2 + $0x187]]
        %v1690 = vstv %s1689
        %v1691 = vmul.f32 %v1690, %v438
        %v1692 = vmul.f32 %v1690, %v439
        %v1693 = vmul.f32 %v1690, %v440
        %v1694 = vmul.f32 %v1690, %v441
        %v1699 = vrot.slane %v1691, 2
        %v1700 = vrot.slane %v1692, 2
        %v1701 = vsel %vm630, %v1699, %v1700
        %v1702 = vrot.slane %v1693, 2
        %v1703 = vsel %vm630, %v1700, %v1702
        %v1704 = vrot.slane %v1694, 2
        %v1705 = vsel %vm630, %v1702, %v1704
        %1706 = vrot.lane.b32.xlu0 %v1701, 127
        %v1707 = vpop.permute.xlu0 %1706
        %1708 = vrot.lane.b32.xlu0 %v1703, 127
        %v1709 = vpop.permute.xlu0 %1708
        %1710 = vrot.lane.b32.xlu0 %v1705, 127
        %v1711 = vpop.permute.xlu0 %1710
        %1712 = vrot.lane.b32.xlu0 %v1704, 127
        %v1713 = vpop.permute.xlu0 %1712
        %v1718 = vadd.f32 %v1685, %v1707
        %v1719 = vadd.f32 %v1686, %v1709
        %v1720 = vadd.f32 %v1687, %v1711
        %v1721 = vadd.f32 %v1688, %v1713
        %s1722 = sld [smem:[#allocation2 + $0x188]]
        %v1723 = vstv %s1722
        %v1724 = vmul.f32 %v1723, %v438
        %v1725 = vmul.f32 %v1723, %v439
        %v1726 = vmul.f32 %v1723, %v440
        %v1727 = vmul.f32 %v1723, %v441
        %v1732 = vrot.slane %v1724, 2
        %v1733 = vrot.slane %v1725, 2
        %v1734 = vsel %vm630, %v1732, %v1733
        %v1735 = vrot.slane %v1726, 2
        %v1736 = vsel %vm630, %v1733, %v1735
        %v1737 = vrot.slane %v1727, 2
        %v1738 = vsel %vm630, %v1735, %v1737
        %1739 = vrot.lane.b32.xlu0 %v1734, 126
        %v1740 = vpop.permute.xlu0 %1739
        %1741 = vrot.lane.b32.xlu0 %v1736, 126
        %v1742 = vpop.permute.xlu0 %1741
        %1743 = vrot.lane.b32.xlu0 %v1738, 126
        %v1744 = vpop.permute.xlu0 %1743
        %1745 = vrot.lane.b32.xlu0 %v1737, 126
        %v1746 = vpop.permute.xlu0 %1745
        %v1751 = vadd.f32 %v1718, %v1740
        %v1752 = vadd.f32 %v1719, %v1742
        %v1753 = vadd.f32 %v1720, %v1744
        %v1754 = vadd.f32 %v1721, %v1746
        %s1755 = sld [smem:[#allocation5 + $0x3]]
        %v1756 = vstv %s1755
        %v1757 = vadd.f32 %v1751, %v1756
        %v1758 = vadd.f32 %v1752, %v1756
        %v1759 = vadd.f32 %v1753, %v1756
        %v1760 = vadd.f32 %v1754, %v1756
        %v1761 = vmax.f32 %v1757, 0.0
        %v1762 = vmax.f32 %v1758, 0.0
        %v1763 = vmax.f32 %v1759, 0.0
        %v1764 = vmax.f32 %v1760, 0.0
        %v1769 = vrot.slane %v1761, 1
        %v1770 = vrot.slane %v1762, 1
        %v1771 = vsel %vm538, %v1769, %v1770
        %v1772 = vrot.slane %v1763, 1
        %v1773 = vsel %vm538, %v1770, %v1772
        %v1774 = vrot.slane %v1764, 1
        %v1775 = vsel %vm538, %v1772, %v1774
        %v1780 = vmax.f32 %v1761, %v1771
        %v1781 = vmax.f32 %v1762, %v1773
        %v1782 = vmax.f32 %v1763, %v1775
        %v1783 = vmax.f32 %v1764, %v1774
        %1788 = vrot.lane.b32.xlu0 %v1780, 127
        %v1789 = vpop.permute.xlu0 %1788
        %1790 = vrot.lane.b32.xlu0 %v1781, 127
        %v1791 = vpop.permute.xlu0 %1790
        %1792 = vrot.lane.b32.xlu0 %v1782, 127
        %v1793 = vpop.permute.xlu0 %1792
        %1794 = vrot.lane.b32.xlu0 %v1783, 127
        %v1795 = vpop.permute.xlu0 %1794
        %v1800 = vmax.f32 %v1780, %v1789
        %v1801 = vmax.f32 %v1781, %v1791
        %v1802 = vmax.f32 %v1782, %v1793
        %v1803 = vmax.f32 %v1783, %v1795
        %v1805 = vsel %vm768, %v1803, 0
        %1807 = vmatpush.msra.mxu0 0.0
        %1808 = vmatpush.msra.mxu0 0.0
        %1809 = vmatpush.msra.mxu0 0.0
        %1810 = vmatpush.msra.mxu0 0.0
        %1811 = vmatpush.msra.mxu0 0.0
        %1812 = vmatpush.msra.mxu0 0.0
        %1813 = vmatpush.msra.mxu0 0.0
        %1814 = vmatpush.msra.mxu0 0.0
        %1815 = vmatpush.msra.mxu0 0.0
        %1816 = vmatpush.msra.mxu0 0.0
        %1817 = vmatpush.msra.mxu0 0.0
        %1818 = vmatpush.msra.mxu0 0.0
        %1819 = vmatpush.msra.mxu0 %v1805
        %1820 = vmatpush.msra.mxu0 %v1802
        %1821 = vmatpush.msra.mxu0 %v1801
        %1822 = vmatpush.msra.mxu0 %v1800
        %1823 = vmatmul.f32.gmra.mxu0 %v763
        %v1824 = vpop.f32.mrf.mxu0
        %v1825 = vadd.f32 0.0, %v1824
        %1826 = vmatmul.f32.gmra.mxu0 %v766
        %v1827 = vpop.f32.mrf.mxu0
        %v1828 = vadd.f32 0.0, %v1827
        %1829 = vdwg.mxu0
        %v1831 = vsel %vm761, %v1825, 0
        %v1834 = vsel %vm761, %v1828, 0
        %1836 = vmatpush.msra.mxu0 0.0
        %1837 = vmatpush.msra.mxu0 0.0
        %1838 = vmatpush.msra.mxu0 0.0
        %1839 = vmatpush.msra.mxu0 0.0
        %1840 = vmatpush.msra.mxu0 0.0
        %1841 = vmatpush.msra.mxu0 0.0
        %1842 = vmatpush.msra.mxu0 0.0
        %1843 = vmatpush.msra.mxu0 0.0
        %1844 = vmatpush.msra.mxu0 0.0
        %1845 = vmatpush.msra.mxu0 0.0
        %1846 = vmatpush.msra.mxu0 0.0
        %1847 = vmatpush.msra.mxu0 0.0
        %1848 = vmatpush.msra.mxu0 %v802
        %1849 = vmatpush.msra.mxu0 %v468
        %1850 = vmatpush.msra.mxu0 %v467
        %1851 = vmatpush.msra.mxu0 %v466
        %1852 = vmatmul.f32.gmra.mxu0 %v1831
        %v1853 = vpop.f32.mrf.mxu0
        %v1854 = vadd.f32 0.0, %v1853
        %1855 = vmatmul.f32.gmra.mxu0 %v1834
        %v1856 = vpop.f32.mrf.mxu0
        %v1857 = vadd.f32 0.0, %v1856
        %1858 = vdwg.mxu0
        %s1859 = sld [smem:[#allocation2 + $0x200]]
        %v1860 = vstv %s1859
        %v1861 = vmul.f32 %v1860, %v438
        %v1862 = vmul.f32 %v1860, %v439
        %v1863 = vmul.f32 %v1860, %v440
        %v1864 = vmul.f32 %v1860, %v441
        %s1865 = sld [smem:[#allocation2 + $0x201]]
        %v1866 = vstv %s1865
        %v1867 = vmul.f32 %v1866, %v438
        %v1868 = vmul.f32 %v1866, %v439
        %v1869 = vmul.f32 %v1866, %v440
        %v1870 = vmul.f32 %v1866, %v441
        %1875 = vrot.lane.b32.xlu0 %v1867, 127
        %v1876 = vpop.permute.xlu0 %1875
        %1877 = vrot.lane.b32.xlu0 %v1868, 127
        %v1878 = vpop.permute.xlu0 %1877
        %1879 = vrot.lane.b32.xlu0 %v1869, 127
        %v1880 = vpop.permute.xlu0 %1879
        %1881 = vrot.lane.b32.xlu0 %v1870, 127
        %v1882 = vpop.permute.xlu0 %1881
        %v1887 = vadd.f32 %v1861, %v1876
        %v1888 = vadd.f32 %v1862, %v1878
        %v1889 = vadd.f32 %v1863, %v1880
        %v1890 = vadd.f32 %v1864, %v1882
        %s1891 = sld [smem:[#allocation2 + $0x202]]
        %v1892 = vstv %s1891
        %v1893 = vmul.f32 %v1892, %v438
        %v1894 = vmul.f32 %v1892, %v439
        %v1895 = vmul.f32 %v1892, %v440
        %v1896 = vmul.f32 %v1892, %v441
        %1901 = vrot.lane.b32.xlu0 %v1893, 126
        %v1902 = vpop.permute.xlu0 %1901
        %1903 = vrot.lane.b32.xlu0 %v1894, 126
        %v1904 = vpop.permute.xlu0 %1903
        %1905 = vrot.lane.b32.xlu0 %v1895, 126
        %v1906 = vpop.permute.xlu0 %1905
        %1907 = vrot.lane.b32.xlu0 %v1896, 126
        %v1908 = vpop.permute.xlu0 %1907
        %v1913 = vadd.f32 %v1887, %v1902
        %v1914 = vadd.f32 %v1888, %v1904
        %v1915 = vadd.f32 %v1889, %v1906
        %v1916 = vadd.f32 %v1890, %v1908
        %s1917 = sld [smem:[#allocation2 + $0x203]]
        %v1918 = vstv %s1917
        %v1919 = vmul.f32 %v1918, %v438
        %v1920 = vmul.f32 %v1918, %v439
        %v1921 = vmul.f32 %v1918, %v440
        %v1922 = vmul.f32 %v1918, %v441
        %v1927 = vrot.slane %v1919, 1
        %v1928 = vrot.slane %v1920, 1
        %v1929 = vsel %vm538, %v1927, %v1928
        %v1930 = vrot.slane %v1921, 1
        %v1931 = vsel %vm538, %v1928, %v1930
        %v1932 = vrot.slane %v1922, 1
        %v1933 = vsel %vm538, %v1930, %v1932
        %v1938 = vadd.f32 %v1913, %v1929
        %v1939 = vadd.f32 %v1914, %v1931
        %v1940 = vadd.f32 %v1915, %v1933
        %v1941 = vadd.f32 %v1916, %v1932
        %s1942 = sld [smem:[#allocation2 + $0x204]]
        %v1943 = vstv %s1942
        %v1944 = vmul.f32 %v1943, %v438
        %v1945 = vmul.f32 %v1943, %v439
        %v1946 = vmul.f32 %v1943, %v440
        %v1947 = vmul.f32 %v1943, %v441
        %v1952 = vrot.slane %v1944, 1
        %v1953 = vrot.slane %v1945, 1
        %v1954 = vsel %vm538, %v1952, %v1953
        %v1955 = vrot.slane %v1946, 1
        %v1956 = vsel %vm538, %v1953, %v1955
        %v1957 = vrot.slane %v1947, 1
        %v1958 = vsel %vm538, %v1955, %v1957
        %1959 = vrot.lane.b32.xlu0 %v1954, 127
        %v1960 = vpop.permute.xlu0 %1959
        %1961 = vrot.lane.b32.xlu0 %v1956, 127
        %v1962 = vpop.permute.xlu0 %1961
        %1963 = vrot.lane.b32.xlu0 %v1958, 127
        %v1964 = vpop.permute.xlu0 %1963
        %1965 = vrot.lane.b32.xlu0 %v1957, 127
        %v1966 = vpop.permute.xlu0 %1965
        %v1971 = vadd.f32 %v1938, %v1960
        %v1972 = vadd.f32 %v1939, %v1962
        %v1973 = vadd.f32 %v1940, %v1964
        %v1974 = vadd.f32 %v1941, %v1966
        %s1975 = sld [smem:[#allocation2 + $0x205]]
        %v1976 = vstv %s1975
        %v1977 = vmul.f32 %v1976, %v438
        %v1978 = vmul.f32 %v1976, %v439
        %v1979 = vmul.f32 %v1976, %v440
        %v1980 = vmul.f32 %v1976, %v441
        %v1985 = vrot.slane %v1977, 1
        %v1986 = vrot.slane %v1978, 1
        %v1987 = vsel %vm538, %v1985, %v1986
        %v1988 = vrot.slane %v1979, 1
        %v1989 = vsel %vm538, %v1986, %v1988
        %v1990 = vrot.slane %v1980, 1
        %v1991 = vsel %vm538, %v1988, %v1990
        %1992 = vrot.lane.b32.xlu0 %v1987, 126
        %v1993 = vpop.permute.xlu0 %1992
        %1994 = vrot.lane.b32.xlu0 %v1989, 126
        %v1995 = vpop.permute.xlu0 %1994
        %1996 = vrot.lane.b32.xlu0 %v1991, 126
        %v1997 = vpop.permute.xlu0 %1996
        %1998 = vrot.lane.b32.xlu0 %v1990, 126
        %v1999 = vpop.permute.xlu0 %1998
        %v2004 = vadd.f32 %v1971, %v1993
        %v2005 = vadd.f32 %v1972, %v1995
        %v2006 = vadd.f32 %v1973, %v1997
        %v2007 = vadd.f32 %v1974, %v1999
        %s2008 = sld [smem:[#allocation2 + $0x206]]
        %v2009 = vstv %s2008
        %v2010 = vmul.f32 %v2009, %v438
        %v2011 = vmul.f32 %v2009, %v439
        %v2012 = vmul.f32 %v2009, %v440
        %v2013 = vmul.f32 %v2009, %v441
        %v2018 = vrot.slane %v2010, 2
        %v2019 = vrot.slane %v2011, 2
        %v2020 = vsel %vm630, %v2018, %v2019
        %v2021 = vrot.slane %v2012, 2
        %v2022 = vsel %vm630, %v2019, %v2021
        %v2023 = vrot.slane %v2013, 2
        %v2024 = vsel %vm630, %v2021, %v2023
        %v2029 = vadd.f32 %v2004, %v2020
        %v2030 = vadd.f32 %v2005, %v2022
        %v2031 = vadd.f32 %v2006, %v2024
        %v2032 = vadd.f32 %v2007, %v2023
        %s2033 = sld [smem:[#allocation2 + $0x207]]
        %v2034 = vstv %s2033
        %v2035 = vmul.f32 %v2034, %v438
        %v2036 = vmul.f32 %v2034, %v439
        %v2037 = vmul.f32 %v2034, %v440
        %v2038 = vmul.f32 %v2034, %v441
        %v2043 = vrot.slane %v2035, 2
        %v2044 = vrot.slane %v2036, 2
        %v2045 = vsel %vm630, %v2043, %v2044
        %v2046 = vrot.slane %v2037, 2
        %v2047 = vsel %vm630, %v2044, %v2046
        %v2048 = vrot.slane %v2038, 2
        %v2049 = vsel %vm630, %v2046, %v2048
        %2050 = vrot.lane.b32.xlu0 %v2045, 127
        %v2051 = vpop.permute.xlu0 %2050
        %2052 = vrot.lane.b32.xlu0 %v2047, 127
        %v2053 = vpop.permute.xlu0 %2052
        %2054 = vrot.lane.b32.xlu0 %v2049, 127
        %v2055 = vpop.permute.xlu0 %2054
        %2056 = vrot.lane.b32.xlu0 %v2048, 127
        %v2057 = vpop.permute.xlu0 %2056
        %v2062 = vadd.f32 %v2029, %v2051
        %v2063 = vadd.f32 %v2030, %v2053
        %v2064 = vadd.f32 %v2031, %v2055
        %v2065 = vadd.f32 %v2032, %v2057
        %s2066 = sld [smem:[#allocation2 + $0x208]]
        %v2067 = vstv %s2066
        %v2068 = vmul.f32 %v2067, %v438
        %v2069 = vmul.f32 %v2067, %v439
        %v2070 = vmul.f32 %v2067, %v440
        %v2071 = vmul.f32 %v2067, %v441
        %v2076 = vrot.slane %v2068, 2
        %v2077 = vrot.slane %v2069, 2
        %v2078 = vsel %vm630, %v2076, %v2077
        %v2079 = vrot.slane %v2070, 2
        %v2080 = vsel %vm630, %v2077, %v2079
        %v2081 = vrot.slane %v2071, 2
        %v2082 = vsel %vm630, %v2079, %v2081
        %2083 = vrot.lane.b32.xlu0 %v2078, 126
        %v2084 = vpop.permute.xlu0 %2083
        %2085 = vrot.lane.b32.xlu0 %v2080, 126
        %v2086 = vpop.permute.xlu0 %2085
        %2087 = vrot.lane.b32.xlu0 %v2082, 126
        %v2088 = vpop.permute.xlu0 %2087
        %2089 = vrot.lane.b32.xlu0 %v2081, 126
        %v2090 = vpop.permute.xlu0 %2089
        %v2095 = vadd.f32 %v2062, %v2084
        %v2096 = vadd.f32 %v2063, %v2086
        %v2097 = vadd.f32 %v2064, %v2088
        %v2098 = vadd.f32 %v2065, %v2090
        %s2099 = sld [smem:[#allocation5 + $0x4]]
        %v2100 = vstv %s2099
        %v2101 = vadd.f32 %v2095, %v2100
        %v2102 = vadd.f32 %v2096, %v2100
        %v2103 = vadd.f32 %v2097, %v2100
        %v2104 = vadd.f32 %v2098, %v2100
        %v2105 = vmax.f32 %v2101, 0.0
        %v2106 = vmax.f32 %v2102, 0.0
        %v2107 = vmax.f32 %v2103, 0.0
        %v2108 = vmax.f32 %v2104, 0.0
        %v2113 = vrot.slane %v2105, 1
        %v2114 = vrot.slane %v2106, 1
        %v2115 = vsel %vm538, %v2113, %v2114
        %v2116 = vrot.slane %v2107, 1
        %v2117 = vsel %vm538, %v2114, %v2116
        %v2118 = vrot.slane %v2108, 1
        %v2119 = vsel %vm538, %v2116, %v2118
        %v2124 = vmax.f32 %v2105, %v2115
        %v2125 = vmax.f32 %v2106, %v2117
        %v2126 = vmax.f32 %v2107, %v2119
        %v2127 = vmax.f32 %v2108, %v2118
        %2132 = vrot.lane.b32.xlu0 %v2124, 127
        %v2133 = vpop.permute.xlu0 %2132
        %2134 = vrot.lane.b32.xlu0 %v2125, 127
        %v2135 = vpop.permute.xlu0 %2134
        %2136 = vrot.lane.b32.xlu0 %v2126, 127
        %v2137 = vpop.permute.xlu0 %2136
        %2138 = vrot.lane.b32.xlu0 %v2127, 127
        %v2139 = vpop.permute.xlu0 %2138
        %v2144 = vmax.f32 %v2124, %v2133
        %v2145 = vmax.f32 %v2125, %v2135
        %v2146 = vmax.f32 %v2126, %v2137
        %v2147 = vmax.f32 %v2127, %v2139
        %v2149 = vsel %vm768, %v2147, 0
        %2151 = vmatpush.msra.mxu0 0.0
        %2152 = vmatpush.msra.mxu0 0.0
        %2153 = vmatpush.msra.mxu0 0.0
        %2154 = vmatpush.msra.mxu0 0.0
        %2155 = vmatpush.msra.mxu0 0.0
        %2156 = vmatpush.msra.mxu0 0.0
        %2157 = vmatpush.msra.mxu0 0.0
        %2158 = vmatpush.msra.mxu0 0.0
        %2159 = vmatpush.msra.mxu0 0.0
        %2160 = vmatpush.msra.mxu0 0.0
        %2161 = vmatpush.msra.mxu0 0.0
        %2162 = vmatpush.msra.mxu0 0.0
        %2163 = vmatpush.msra.mxu0 %v2149
        %2164 = vmatpush.msra.mxu0 %v2146
        %2165 = vmatpush.msra.mxu0 %v2145
        %2166 = vmatpush.msra.mxu0 %v2144
        %2167 = vmatmul.f32.gmra.mxu0 %v763
        %v2168 = vpop.f32.mrf.mxu0
        %v2169 = vadd.f32 0.0, %v2168
        %2170 = vmatmul.f32.gmra.mxu0 %v766
        %v2171 = vpop.f32.mrf.mxu0
        %v2172 = vadd.f32 0.0, %v2171
        %2173 = vdwg.mxu0
        %v2175 = vsel %vm761, %v2169, 0
        %v2178 = vsel %vm761, %v2172, 0
        %2180 = vmatpush.msra.mxu0 0.0
        %2181 = vmatpush.msra.mxu0 0.0
        %2182 = vmatpush.msra.mxu0 0.0
        %2183 = vmatpush.msra.mxu0 0.0
        %2184 = vmatpush.msra.mxu0 0.0
        %2185 = vmatpush.msra.mxu0 0.0
        %2186 = vmatpush.msra.mxu0 0.0
        %2187 = vmatpush.msra.mxu0 0.0
        %2188 = vmatpush.msra.mxu0 0.0
        %2189 = vmatpush.msra.mxu0 0.0
        %2190 = vmatpush.msra.mxu0 0.0
        %2191 = vmatpush.msra.mxu0 0.0
        %2192 = vmatpush.msra.mxu0 %v802
        %2193 = vmatpush.msra.mxu0 %v468
        %2194 = vmatpush.msra.mxu0 %v467
        %2195 = vmatpush.msra.mxu0 %v466
        %2196 = vmatmul.f32.gmra.mxu0 %v2175
        %v2197 = vpop.f32.mrf.mxu0
        %v2198 = vadd.f32 0.0, %v2197
        %2199 = vmatmul.f32.gmra.mxu0 %v2178
        %v2200 = vpop.f32.mrf.mxu0
        %v2201 = vadd.f32 0.0, %v2200
        %2202 = vdwg.mxu0
        %s2203 = sld [smem:[#allocation2 + $0x280]]
        %v2204 = vstv %s2203
        %v2205 = vmul.f32 %v2204, %v438
        %v2206 = vmul.f32 %v2204, %v439
        %v2207 = vmul.f32 %v2204, %v440
        %v2208 = vmul.f32 %v2204, %v441
        %s2209 = sld [smem:[#allocation2 + $0x281]]
        %v2210 = vstv %s2209
        %v2211 = vmul.f32 %v2210, %v438
        %v2212 = vmul.f32 %v2210, %v439
        %v2213 = vmul.f32 %v2210, %v440
        %v2214 = vmul.f32 %v2210, %v441
        %2219 = vrot.lane.b32.xlu0 %v2211, 127
        %v2220 = vpop.permute.xlu0 %2219
        %2221 = vrot.lane.b32.xlu0 %v2212, 127
        %v2222 = vpop.permute.xlu0 %2221
        %2223 = vrot.lane.b32.xlu0 %v2213, 127
        %v2224 = vpop.permute.xlu0 %2223
        %2225 = vrot.lane.b32.xlu0 %v2214, 127
        %v2226 = vpop.permute.xlu0 %2225
        %v2231 = vadd.f32 %v2205, %v2220
        %v2232 = vadd.f32 %v2206, %v2222
        %v2233 = vadd.f32 %v2207, %v2224
        %v2234 = vadd.f32 %v2208, %v2226
        %s2235 = sld [smem:[#allocation2 + $0x282]]
        %v2236 = vstv %s2235
        %v2237 = vmul.f32 %v2236, %v438
        %v2238 = vmul.f32 %v2236, %v439
        %v2239 = vmul.f32 %v2236, %v440
        %v2240 = vmul.f32 %v2236, %v441
        %2245 = vrot.lane.b32.xlu0 %v2237, 126
        %v2246 = vpop.permute.xlu0 %2245
        %2247 = vrot.lane.b32.xlu0 %v2238, 126
        %v2248 = vpop.permute.xlu0 %2247
        %2249 = vrot.lane.b32.xlu0 %v2239, 126
        %v2250 = vpop.permute.xlu0 %2249
        %2251 = vrot.lane.b32.xlu0 %v2240, 126
        %v2252 = vpop.permute.xlu0 %2251
        %v2257 = vadd.f32 %v2231, %v2246
        %v2258 = vadd.f32 %v2232, %v2248
        %v2259 = vadd.f32 %v2233, %v2250
        %v2260 = vadd.f32 %v2234, %v2252
        %s2261 = sld [smem:[#allocation2 + $0x283]]
        %v2262 = vstv %s2261
        %v2263 = vmul.f32 %v2262, %v438
        %v2264 = vmul.f32 %v2262, %v439
        %v2265 = vmul.f32 %v2262, %v440
        %v2266 = vmul.f32 %v2262, %v441
        %v2271 = vrot.slane %v2263, 1
        %v2272 = vrot.slane %v2264, 1
        %v2273 = vsel %vm538, %v2271, %v2272
        %v2274 = vrot.slane %v2265, 1
        %v2275 = vsel %vm538, %v2272, %v2274
        %v2276 = vrot.slane %v2266, 1
        %v2277 = vsel %vm538, %v2274, %v2276
        %v2282 = vadd.f32 %v2257, %v2273
        %v2283 = vadd.f32 %v2258, %v2275
        %v2284 = vadd.f32 %v2259, %v2277
        %v2285 = vadd.f32 %v2260, %v2276
        %s2286 = sld [smem:[#allocation2 + $0x284]]
        %v2287 = vstv %s2286
        %v2288 = vmul.f32 %v2287, %v438
        %v2289 = vmul.f32 %v2287, %v439
        %v2290 = vmul.f32 %v2287, %v440
        %v2291 = vmul.f32 %v2287, %v441
        %v2296 = vrot.slane %v2288, 1
        %v2297 = vrot.slane %v2289, 1
        %v2298 = vsel %vm538, %v2296, %v2297
        %v2299 = vrot.slane %v2290, 1
        %v2300 = vsel %vm538, %v2297, %v2299
        %v2301 = vrot.slane %v2291, 1
        %v2302 = vsel %vm538, %v2299, %v2301
        %2303 = vrot.lane.b32.xlu0 %v2298, 127
        %v2304 = vpop.permute.xlu0 %2303
        %2305 = vrot.lane.b32.xlu0 %v2300, 127
        %v2306 = vpop.permute.xlu0 %2305
        %2307 = vrot.lane.b32.xlu0 %v2302, 127
        %v2308 = vpop.permute.xlu0 %2307
        %2309 = vrot.lane.b32.xlu0 %v2301, 127
        %v2310 = vpop.permute.xlu0 %2309
        %v2315 = vadd.f32 %v2282, %v2304
        %v2316 = vadd.f32 %v2283, %v2306
        %v2317 = vadd.f32 %v2284, %v2308
        %v2318 = vadd.f32 %v2285, %v2310
        %s2319 = sld [smem:[#allocation2 + $0x285]]
        %v2320 = vstv %s2319
        %v2321 = vmul.f32 %v2320, %v438
        %v2322 = vmul.f32 %v2320, %v439
        %v2323 = vmul.f32 %v2320, %v440
        %v2324 = vmul.f32 %v2320, %v441
        %v2329 = vrot.slane %v2321, 1
        %v2330 = vrot.slane %v2322, 1
        %v2331 = vsel %vm538, %v2329, %v2330
        %v2332 = vrot.slane %v2323, 1
        %v2333 = vsel %vm538, %v2330, %v2332
        %v2334 = vrot.slane %v2324, 1
        %v2335 = vsel %vm538, %v2332, %v2334
        %2336 = vrot.lane.b32.xlu0 %v2331, 126
        %v2337 = vpop.permute.xlu0 %2336
        %2338 = vrot.lane.b32.xlu0 %v2333, 126
        %v2339 = vpop.permute.xlu0 %2338
        %2340 = vrot.lane.b32.xlu0 %v2335, 126
        %v2341 = vpop.permute.xlu0 %2340
        %2342 = vrot.lane.b32.xlu0 %v2334, 126
        %v2343 = vpop.permute.xlu0 %2342
        %v2348 = vadd.f32 %v2315, %v2337
        %v2349 = vadd.f32 %v2316, %v2339
        %v2350 = vadd.f32 %v2317, %v2341
        %v2351 = vadd.f32 %v2318, %v2343
        %s2352 = sld [smem:[#allocation2 + $0x286]]
        %v2353 = vstv %s2352
        %v2354 = vmul.f32 %v2353, %v438
        %v2355 = vmul.f32 %v2353, %v439
        %v2356 = vmul.f32 %v2353, %v440
        %v2357 = vmul.f32 %v2353, %v441
        %v2362 = vrot.slane %v2354, 2
        %v2363 = vrot.slane %v2355, 2
        %v2364 = vsel %vm630, %v2362, %v2363
        %v2365 = vrot.slane %v2356, 2
        %v2366 = vsel %vm630, %v2363, %v2365
        %v2367 = vrot.slane %v2357, 2
        %v2368 = vsel %vm630, %v2365, %v2367
        %v2373 = vadd.f32 %v2348, %v2364
        %v2374 = vadd.f32 %v2349, %v2366
        %v2375 = vadd.f32 %v2350, %v2368
        %v2376 = vadd.f32 %v2351, %v2367
        %s2377 = sld [smem:[#allocation2 + $0x287]]
        %v2378 = vstv %s2377
        %v2379 = vmul.f32 %v2378, %v438
        %v2380 = vmul.f32 %v2378, %v439
        %v2381 = vmul.f32 %v2378, %v440
        %v2382 = vmul.f32 %v2378, %v441
        %v2387 = vrot.slane %v2379, 2
        %v2388 = vrot.slane %v2380, 2
        %v2389 = vsel %vm630, %v2387, %v2388
        %v2390 = vrot.slane %v2381, 2
        %v2391 = vsel %vm630, %v2388, %v2390
        %v2392 = vrot.slane %v2382, 2
        %v2393 = vsel %vm630, %v2390, %v2392
        %2394 = vrot.lane.b32.xlu0 %v2389, 127
        %v2395 = vpop.permute.xlu0 %2394
        %2396 = vrot.lane.b32.xlu0 %v2391, 127
        %v2397 = vpop.permute.xlu0 %2396
        %2398 = vrot.lane.b32.xlu0 %v2393, 127
        %v2399 = vpop.permute.xlu0 %2398
        %2400 = vrot.lane.b32.xlu0 %v2392, 127
        %v2401 = vpop.permute.xlu0 %2400
        %v2406 = vadd.f32 %v2373, %v2395
        %v2407 = vadd.f32 %v2374, %v2397
        %v2408 = vadd.f32 %v2375, %v2399
        %v2409 = vadd.f32 %v2376, %v2401
        %s2410 = sld [smem:[#allocation2 + $0x288]]
        %v2411 = vstv %s2410
        %v2412 = vmul.f32 %v2411, %v438
        %v2413 = vmul.f32 %v2411, %v439
        %v2414 = vmul.f32 %v2411, %v440
        %v2415 = vmul.f32 %v2411, %v441
        %v2420 = vrot.slane %v2412, 2
        %v2421 = vrot.slane %v2413, 2
        %v2422 = vsel %vm630, %v2420, %v2421
        %v2423 = vrot.slane %v2414, 2
        %v2424 = vsel %vm630, %v2421, %v2423
        %v2425 = vrot.slane %v2415, 2
        %v2426 = vsel %vm630, %v2423, %v2425
        %2427 = vrot.lane.b32.xlu0 %v2422, 126
        %v2428 = vpop.permute.xlu0 %2427
        %2429 = vrot.lane.b32.xlu0 %v2424, 126
        %v2430 = vpop.permute.xlu0 %2429
        %2431 = vrot.lane.b32.xlu0 %v2426, 126
        %v2432 = vpop.permute.xlu0 %2431
        %2433 = vrot.lane.b32.xlu0 %v2425, 126
        %v2434 = vpop.permute.xlu0 %2433
        %v2439 = vadd.f32 %v2406, %v2428
        %v2440 = vadd.f32 %v2407, %v2430
        %v2441 = vadd.f32 %v2408, %v2432
        %v2442 = vadd.f32 %v2409, %v2434
        %s2443 = sld [smem:[#allocation5 + $0x5]]
        %v2444 = vstv %s2443
        %v2445 = vadd.f32 %v2439, %v2444
        %v2446 = vadd.f32 %v2440, %v2444
        %v2447 = vadd.f32 %v2441, %v2444
        %v2448 = vadd.f32 %v2442, %v2444
        %v2449 = vmax.f32 %v2445, 0.0
        %v2450 = vmax.f32 %v2446, 0.0
        %v2451 = vmax.f32 %v2447, 0.0
        %v2452 = vmax.f32 %v2448, 0.0
        %v2457 = vrot.slane %v2449, 1
        %v2458 = vrot.slane %v2450, 1
        %v2459 = vsel %vm538, %v2457, %v2458
        %v2460 = vrot.slane %v2451, 1
        %v2461 = vsel %vm538, %v2458, %v2460
        %v2462 = vrot.slane %v2452, 1
        %v2463 = vsel %vm538, %v2460, %v2462
        %v2468 = vmax.f32 %v2449, %v2459
        %v2469 = vmax.f32 %v2450, %v2461
        %v2470 = vmax.f32 %v2451, %v2463
        %v2471 = vmax.f32 %v2452, %v2462
        %2476 = vrot.lane.b32.xlu0 %v2468, 127
        %v2477 = vpop.permute.xlu0 %2476
        %2478 = vrot.lane.b32.xlu0 %v2469, 127
        %v2479 = vpop.permute.xlu0 %2478
        %2480 = vrot.lane.b32.xlu0 %v2470, 127
        %v2481 = vpop.permute.xlu0 %2480
        %2482 = vrot.lane.b32.xlu0 %v2471, 127
        %v2483 = vpop.permute.xlu0 %2482
        %v2488 = vmax.f32 %v2468, %v2477
        %v2489 = vmax.f32 %v2469, %v2479
        %v2490 = vmax.f32 %v2470, %v2481
        %v2491 = vmax.f32 %v2471, %v2483
        %v2493 = vsel %vm768, %v2491, 0
        %2495 = vmatpush.msra.mxu0 0.0
        %2496 = vmatpush.msra.mxu0 0.0
        %2497 = vmatpush.msra.mxu0 0.0
        %2498 = vmatpush.msra.mxu0 0.0
        %2499 = vmatpush.msra.mxu0 0.0
        %2500 = vmatpush.msra.mxu0 0.0
        %2501 = vmatpush.msra.mxu0 0.0
        %2502 = vmatpush.msra.mxu0 0.0
        %2503 = vmatpush.msra.mxu0 0.0
        %2504 = vmatpush.msra.mxu0 0.0
        %2505 = vmatpush.msra.mxu0 0.0
        %2506 = vmatpush.msra.mxu0 0.0
        %2507 = vmatpush.msra.mxu0 %v2493
        %2508 = vmatpush.msra.mxu0 %v2490
        %2509 = vmatpush.msra.mxu0 %v2489
        %2510 = vmatpush.msra.mxu0 %v2488
        %2511 = vmatmul.f32.gmra.mxu0 %v763
        %v2512 = vpop.f32.mrf.mxu0
        %v2513 = vadd.f32 0.0, %v2512
        %2514 = vmatmul.f32.gmra.mxu0 %v766
        %v2515 = vpop.f32.mrf.mxu0
        %v2516 = vadd.f32 0.0, %v2515
        %2517 = vdwg.mxu0
        %v2519 = vsel %vm761, %v2513, 0
        %v2522 = vsel %vm761, %v2516, 0
        %2524 = vmatpush.msra.mxu0 0.0
        %2525 = vmatpush.msra.mxu0 0.0
        %2526 = vmatpush.msra.mxu0 0.0
        %2527 = vmatpush.msra.mxu0 0.0
        %2528 = vmatpush.msra.mxu0 0.0
        %2529 = vmatpush.msra.mxu0 0.0
        %2530 = vmatpush.msra.mxu0 0.0
        %2531 = vmatpush.msra.mxu0 0.0
        %2532 = vmatpush.msra.mxu0 0.0
        %2533 = vmatpush.msra.mxu0 0.0
        %2534 = vmatpush.msra.mxu0 0.0
        %2535 = vmatpush.msra.mxu0 0.0
        %2536 = vmatpush.msra.mxu0 %v802
        %2537 = vmatpush.msra.mxu0 %v468
        %2538 = vmatpush.msra.mxu0 %v467
        %2539 = vmatpush.msra.mxu0 %v466
        %2540 = vmatmul.f32.gmra.mxu0 %v2519
        %v2541 = vpop.f32.mrf.mxu0
        %v2542 = vadd.f32 0.0, %v2541
        %2543 = vmatmul.f32.gmra.mxu0 %v2522
        %v2544 = vpop.f32.mrf.mxu0
        %v2545 = vadd.f32 0.0, %v2544
        %2546 = vdwg.mxu0
        loop: start=0, step=1, limit=16
        $region81: #{net_forward.1} parent=63 // loop_pre_header
          _
        $region82: #{net_forward.1} parent=63 // loop_header
          %s2548 = sphi 0, %s2552
          %p2549 = scmp.ge.s32.totalorder %s2548, 16
          %v2553 = vphi 0.0, %v3638
        $region83: #{net_forward.1} parent=63 // loop_header_branch
          %2551 = sbr.rel (%p2549) target = $region87
        $region84: #{net_forward.1} parent=63 // loop_body
          %s2554 = smul.u32 %s2548, 128
          %s2555 = sld [smem:[#allocation7 + %s2554]]
          %v2556 = vstv %s2555
          %v2557 = vmul.f32 %v2556, %v822
          %v2558 = vmul.f32 %v2556, %v825
          %s2559 = sadd.s32 %s2554, 1
          %s2560 = sld [smem:[#allocation7 + %s2559]]
          %v2561 = vstv %s2560
          %v2562 = vmul.f32 %v2561, %v822
          %v2563 = vmul.f32 %v2561, %v825
          %2566 = vrot.lane.b32.xlu0 %v2562, 127
          %v2567 = vpop.permute.xlu0 %2566
          %2568 = vrot.lane.b32.xlu0 %v2563, 127
          %v2569 = vpop.permute.xlu0 %2568
          %v2572 = vadd.f32 %v2557, %v2567
          %v2573 = vadd.f32 %v2558, %v2569
          %s2574 = sadd.s32 %s2554, 2
          %s2575 = sld [smem:[#allocation7 + %s2574]]
          %v2576 = vstv %s2575
          %v2577 = vmul.f32 %v2576, %v822
          %v2578 = vmul.f32 %v2576, %v825
          %2581 = vrot.lane.b32.xlu0 %v2577, 126
          %v2582 = vpop.permute.xlu0 %2581
          %2583 = vrot.lane.b32.xlu0 %v2578, 126
          %v2584 = vpop.permute.xlu0 %2583
          %v2587 = vadd.f32 %v2572, %v2582
          %v2588 = vadd.f32 %v2573, %v2584
          %s2589 = sadd.s32 %s2554, 3
          %s2590 = sld [smem:[#allocation7 + %s2589]]
          %v2591 = vstv %s2590
          %v2592 = vmul.f32 %v2591, %v822
          %v2593 = vmul.f32 %v2591, %v825
          %v2596 = vrot.slane %v2592, 1
          %v2597 = vrot.slane %v2593, 1
          %v2598 = vsel %vm538, %v2596, %v2597
          %v2601 = vadd.f32 %v2587, %v2598
          %v2602 = vadd.f32 %v2588, %v2597
          %s2603 = sadd.s32 %s2554, 4
          %s2604 = sld [smem:[#allocation7 + %s2603]]
          %v2605 = vstv %s2604
          %v2606 = vmul.f32 %v2605, %v822
          %v2607 = vmul.f32 %v2605, %v825
          %v2610 = vrot.slane %v2606, 1
          %v2611 = vrot.slane %v2607, 1
          %v2612 = vsel %vm538, %v2610, %v2611
          %2613 = vrot.lane.b32.xlu0 %v2612, 127
          %v2614 = vpop.permute.xlu0 %2613
          %2615 = vrot.lane.b32.xlu0 %v2611, 127
          %v2616 = vpop.permute.xlu0 %2615
          %v2619 = vadd.f32 %v2601, %v2614
          %v2620 = vadd.f32 %v2602, %v2616
          %s2621 = sadd.s32 %s2554, 5
          %s2622 = sld [smem:[#allocation7 + %s2621]]
          %v2623 = vstv %s2622
          %v2624 = vmul.f32 %v2623, %v822
          %v2625 = vmul.f32 %v2623, %v825
          %v2628 = vrot.slane %v2624, 1
          %v2629 = vrot.slane %v2625, 1
          %v2630 = vsel %vm538, %v2628, %v2629
          %2631 = vrot.lane.b32.xlu0 %v2630, 126
          %v2632 = vpop.permute.xlu0 %2631
          %2633 = vrot.lane.b32.xlu0 %v2629, 126
          %v2634 = vpop.permute.xlu0 %2633
          %v2637 = vadd.f32 %v2619, %v2632
          %v2638 = vadd.f32 %v2620, %v2634
          %s2639 = sadd.s32 %s2554, 6
          %s2640 = sld [smem:[#allocation7 + %s2639]]
          %v2641 = vstv %s2640
          %v2642 = vmul.f32 %v2641, %v822
          %v2643 = vmul.f32 %v2641, %v825
          %v2646 = vrot.slane %v2642, 2
          %v2647 = vrot.slane %v2643, 2
          %v2648 = vsel %vm630, %v2646, %v2647
          %v2651 = vadd.f32 %v2637, %v2648
          %v2652 = vadd.f32 %v2638, %v2647
          %s2653 = sadd.s32 %s2554, 7
          %s2654 = sld [smem:[#allocation7 + %s2653]]
          %v2655 = vstv %s2654
          %v2656 = vmul.f32 %v2655, %v822
          %v2657 = vmul.f32 %v2655, %v825
          %v2660 = vrot.slane %v2656, 2
          %v2661 = vrot.slane %v2657, 2
          %v2662 = vsel %vm630, %v2660, %v2661
          %2663 = vrot.lane.b32.xlu0 %v2662, 127
          %v2664 = vpop.permute.xlu0 %2663
          %2665 = vrot.lane.b32.xlu0 %v2661, 127
          %v2666 = vpop.permute.xlu0 %2665
          %v2669 = vadd.f32 %v2651, %v2664
          %v2670 = vadd.f32 %v2652, %v2666
          %s2671 = sadd.s32 %s2554, 8
          %s2672 = sld [smem:[#allocation7 + %s2671]]
          %v2673 = vstv %s2672
          %v2674 = vmul.f32 %v2673, %v822
          %v2675 = vmul.f32 %v2673, %v825
          %v2678 = vrot.slane %v2674, 2
          %v2679 = vrot.slane %v2675, 2
          %v2680 = vsel %vm630, %v2678, %v2679
          %2681 = vrot.lane.b32.xlu0 %v2680, 126
          %v2682 = vpop.permute.xlu0 %2681
          %2683 = vrot.lane.b32.xlu0 %v2679, 126
          %v2684 = vpop.permute.xlu0 %2683
          %v2687 = vadd.f32 %v2669, %v2682
          %v2688 = vadd.f32 %v2670, %v2684
          %s2689 = sadd.s32 %s2554, 9
          %s2690 = sld [smem:[#allocation7 + %s2689]]
          %v2691 = vstv %s2690
          %v2692 = vmul.f32 %v2691, %v1166
          %v2693 = vmul.f32 %v2691, %v1169
          %v2694 = vadd.f32 %v2687, %v2692
          %v2695 = vadd.f32 %v2688, %v2693
          %s2696 = sadd.s32 %s2554, 10
          %s2697 = sld [smem:[#allocation7 + %s2696]]
          %v2698 = vstv %s2697
          %v2699 = vmul.f32 %v2698, %v1166
          %v2700 = vmul.f32 %v2698, %v1169
          %2703 = vrot.lane.b32.xlu0 %v2699, 127
          %v2704 = vpop.permute.xlu0 %2703
          %2705 = vrot.lane.b32.xlu0 %v2700, 127
          %v2706 = vpop.permute.xlu0 %2705
          %v2709 = vadd.f32 %v2694, %v2704
          %v2710 = vadd.f32 %v2695, %v2706
          %s2711 = sadd.s32 %s2554, 11
          %s2712 = sld [smem:[#allocation7 + %s2711]]
          %v2713 = vstv %s2712
          %v2714 = vmul.f32 %v2713, %v1166
          %v2715 = vmul.f32 %v2713, %v1169
          %2718 = vrot.lane.b32.xlu0 %v2714, 126
          %v2719 = vpop.permute.xlu0 %2718
          %2720 = vrot.lane.b32.xlu0 %v2715, 126
          %v2721 = vpop.permute.xlu0 %2720
          %v2724 = vadd.f32 %v2709, %v2719
          %v2725 = vadd.f32 %v2710, %v2721
          %s2726 = sadd.s32 %s2554, 12
          %s2727 = sld [smem:[#allocation7 + %s2726]]
          %v2728 = vstv %s2727
          %v2729 = vmul.f32 %v2728, %v1166
          %v2730 = vmul.f32 %v2728, %v1169
          %v2733 = vrot.slane %v2729, 1
          %v2734 = vrot.slane %v2730, 1
          %v2735 = vsel %vm538, %v2733, %v2734
          %v2738 = vadd.f32 %v2724, %v2735
          %v2739 = vadd.f32 %v2725, %v2734
          %s2740 = sadd.s32 %s2554, 13
          %s2741 = sld [smem:[#allocation7 + %s2740]]
          %v2742 = vstv %s2741
          %v2743 = vmul.f32 %v2742, %v1166
          %v2744 = vmul.f32 %v2742, %v1169
          %v2747 = vrot.slane %v2743, 1
          %v2748 = vrot.slane %v2744, 1
          %v2749 = vsel %vm538, %v2747, %v2748
          %2750 = vrot.lane.b32.xlu0 %v2749, 127
          %v2751 = vpop.permute.xlu0 %2750
          %2752 = vrot.lane.b32.xlu0 %v2748, 127
          %v2753 = vpop.permute.xlu0 %2752
          %v2756 = vadd.f32 %v2738, %v2751
          %v2757 = vadd.f32 %v2739, %v2753
          %s2758 = sadd.s32 %s2554, 14
          %s2759 = sld [smem:[#allocation7 + %s2758]]
          %v2760 = vstv %s2759
          %v2761 = vmul.f32 %v2760, %v1166
          %v2762 = vmul.f32 %v2760, %v1169
          %v2765 = vrot.slane %v2761, 1
          %v2766 = vrot.slane %v2762, 1
          %v2767 = vsel %vm538, %v2765, %v2766
          %2768 = vrot.lane.b32.xlu0 %v2767, 126
          %v2769 = vpop.permute.xlu0 %2768
          %2770 = vrot.lane.b32.xlu0 %v2766, 126
          %v2771 = vpop.permute.xlu0 %2770
          %v2774 = vadd.f32 %v2756, %v2769
          %v2775 = vadd.f32 %v2757, %v2771
          %s2776 = sadd.s32 %s2554, 15
          %s2777 = sld [smem:[#allocation7 + %s2776]]
          %v2778 = vstv %s2777
          %v2779 = vmul.f32 %v2778, %v1166
          %v2780 = vmul.f32 %v2778, %v1169
          %v2783 = vrot.slane %v2779, 2
          %v2784 = vrot.slane %v2780, 2
          %v2785 = vsel %vm630, %v2783, %v2784
          %v2788 = vadd.f32 %v2774, %v2785
          %v2789 = vadd.f32 %v2775, %v2784
          %s2790 = sadd.s32 %s2554, 16
          %s2791 = sld [smem:[#allocation7 + %s2790]]
          %v2792 = vstv %s2791
          %v2793 = vmul.f32 %v2792, %v1166
          %v2794 = vmul.f32 %v2792, %v1169
          %v2797 = vrot.slane %v2793, 2
          %v2798 = vrot.slane %v2794, 2
          %v2799 = vsel %vm630, %v2797, %v2798
          %2800 = vrot.lane.b32.xlu0 %v2799, 127
          %v2801 = vpop.permute.xlu0 %2800
          %2802 = vrot.lane.b32.xlu0 %v2798, 127
          %v2803 = vpop.permute.xlu0 %2802
          %v2806 = vadd.f32 %v2788, %v2801
          %v2807 = vadd.f32 %v2789, %v2803
          %s2808 = sadd.s32 %s2554, 17
          %s2809 = sld [smem:[#allocation7 + %s2808]]
          %v2810 = vstv %s2809
          %v2811 = vmul.f32 %v2810, %v1166
          %v2812 = vmul.f32 %v2810, %v1169
          %v2815 = vrot.slane %v2811, 2
          %v2816 = vrot.slane %v2812, 2
          %v2817 = vsel %vm630, %v2815, %v2816
          %2818 = vrot.lane.b32.xlu0 %v2817, 126
          %v2819 = vpop.permute.xlu0 %2818
          %2820 = vrot.lane.b32.xlu0 %v2816, 126
          %v2821 = vpop.permute.xlu0 %2820
          %v2824 = vadd.f32 %v2806, %v2819
          %v2825 = vadd.f32 %v2807, %v2821
          %s2826 = sadd.s32 %s2554, 18
          %s2827 = sld [smem:[#allocation7 + %s2826]]
          %v2828 = vstv %s2827
          %v2829 = vmul.f32 %v2828, %v1510
          %v2830 = vmul.f32 %v2828, %v1513
          %v2831 = vadd.f32 %v2824, %v2829
          %v2832 = vadd.f32 %v2825, %v2830
          %s2833 = sadd.s32 %s2554, 19
          %s2834 = sld [smem:[#allocation7 + %s2833]]
          %v2835 = vstv %s2834
          %v2836 = vmul.f32 %v2835, %v1510
          %v2837 = vmul.f32 %v2835, %v1513
          %2840 = vrot.lane.b32.xlu0 %v2836, 127
          %v2841 = vpop.permute.xlu0 %2840
          %2842 = vrot.lane.b32.xlu0 %v2837, 127
          %v2843 = vpop.permute.xlu0 %2842
          %v2846 = vadd.f32 %v2831, %v2841
          %v2847 = vadd.f32 %v2832, %v2843
          %s2848 = sadd.s32 %s2554, 20
          %s2849 = sld [smem:[#allocation7 + %s2848]]
          %v2850 = vstv %s2849
          %v2851 = vmul.f32 %v2850, %v1510
          %v2852 = vmul.f32 %v2850, %v1513
          %2855 = vrot.lane.b32.xlu0 %v2851, 126
          %v2856 = vpop.permute.xlu0 %2855
          %2857 = vrot.lane.b32.xlu0 %v2852, 126
          %v2858 = vpop.permute.xlu0 %2857
          %v2861 = vadd.f32 %v2846, %v2856
          %v2862 = vadd.f32 %v2847, %v2858
          %s2863 = sadd.s32 %s2554, 21
          %s2864 = sld [smem:[#allocation7 + %s2863]]
          %v2865 = vstv %s2864
          %v2866 = vmul.f32 %v2865, %v1510
          %v2867 = vmul.f32 %v2865, %v1513
          %v2870 = vrot.slane %v2866, 1
          %v2871 = vrot.slane %v2867, 1
          %v2872 = vsel %vm538, %v2870, %v2871
          %v2875 = vadd.f32 %v2861, %v2872
          %v2876 = vadd.f32 %v2862, %v2871
          %s2877 = sadd.s32 %s2554, 22
          %s2878 = sld [smem:[#allocation7 + %s2877]]
          %v2879 = vstv %s2878
          %v2880 = vmul.f32 %v2879, %v1510
          %v2881 = vmul.f32 %v2879, %v1513
          %v2884 = vrot.slane %v2880, 1
          %v2885 = vrot.slane %v2881, 1
          %v2886 = vsel %vm538, %v2884, %v2885
          %2887 = vrot.lane.b32.xlu0 %v2886, 127
          %v2888 = vpop.permute.xlu0 %2887
          %2889 = vrot.lane.b32.xlu0 %v2885, 127
          %v2890 = vpop.permute.xlu0 %2889
          %v2893 = vadd.f32 %v2875, %v2888
          %v2894 = vadd.f32 %v2876, %v2890
          %s2895 = sadd.s32 %s2554, 23
          %s2896 = sld [smem:[#allocation7 + %s2895]]
          %v2897 = vstv %s2896
          %v2898 = vmul.f32 %v2897, %v1510
          %v2899 = vmul.f32 %v2897, %v1513
          %v2902 = vrot.slane %v2898, 1
          %v2903 = vrot.slane %v2899, 1
          %v2904 = vsel %vm538, %v2902, %v2903
          %2905 = vrot.lane.b32.xlu0 %v2904, 126
          %v2906 = vpop.permute.xlu0 %2905
          %2907 = vrot.lane.b32.xlu0 %v2903, 126
          %v2908 = vpop.permute.xlu0 %2907
          %v2911 = vadd.f32 %v2893, %v2906
          %v2912 = vadd.f32 %v2894, %v2908
          %s2913 = sadd.s32 %s2554, 24
          %s2914 = sld [smem:[#allocation7 + %s2913]]
          %v2915 = vstv %s2914
          %v2916 = vmul.f32 %v2915, %v1510
          %v2917 = vmul.f32 %v2915, %v1513
          %v2920 = vrot.slane %v2916, 2
          %v2921 = vrot.slane %v2917, 2
          %v2922 = vsel %vm630, %v2920, %v2921
          %v2925 = vadd.f32 %v2911, %v2922
          %v2926 = vadd.f32 %v2912, %v2921
          %s2927 = sadd.s32 %s2554, 25
          %s2928 = sld [smem:[#allocation7 + %s2927]]
          %v2929 = vstv %s2928
          %v2930 = vmul.f32 %v2929, %v1510
          %v2931 = vmul.f32 %v2929, %v1513
          %v2934 = vrot.slane %v2930, 2
          %v2935 = vrot.slane %v2931, 2
          %v2936 = vsel %vm630, %v2934, %v2935
          %2937 = vrot.lane.b32.xlu0 %v2936, 127
          %v2938 = vpop.permute.xlu0 %2937
          %2939 = vrot.lane.b32.xlu0 %v2935, 127
          %v2940 = vpop.permute.xlu0 %2939
          %v2943 = vadd.f32 %v2925, %v2938
          %v2944 = vadd.f32 %v2926, %v2940
          %s2945 = sadd.s32 %s2554, 26
          %s2946 = sld [smem:[#allocation7 + %s2945]]
          %v2947 = vstv %s2946
          %v2948 = vmul.f32 %v2947, %v1510
          %v2949 = vmul.f32 %v2947, %v1513
          %v2952 = vrot.slane %v2948, 2
          %v2953 = vrot.slane %v2949, 2
          %v2954 = vsel %vm630, %v2952, %v2953
          %2955 = vrot.lane.b32.xlu0 %v2954, 126
          %v2956 = vpop.permute.xlu0 %2955
          %2957 = vrot.lane.b32.xlu0 %v2953, 126
          %v2958 = vpop.permute.xlu0 %2957
          %v2961 = vadd.f32 %v2943, %v2956
          %v2962 = vadd.f32 %v2944, %v2958
          %s2963 = sadd.s32 %s2554, 27
          %s2964 = sld [smem:[#allocation7 + %s2963]]
          %v2965 = vstv %s2964
          %v2966 = vmul.f32 %v2965, %v1854
          %v2967 = vmul.f32 %v2965, %v1857
          %v2968 = vadd.f32 %v2961, %v2966
          %v2969 = vadd.f32 %v2962, %v2967
          %s2970 = sadd.s32 %s2554, 28
          %s2971 = sld [smem:[#allocation7 + %s2970]]
          %v2972 = vstv %s2971
          %v2973 = vmul.f32 %v2972, %v1854
          %v2974 = vmul.f32 %v2972, %v1857
          %2977 = vrot.lane.b32.xlu0 %v2973, 127
          %v2978 = vpop.permute.xlu0 %2977
          %2979 = vrot.lane.b32.xlu0 %v2974, 127
          %v2980 = vpop.permute.xlu0 %2979
          %v2983 = vadd.f32 %v2968, %v2978
          %v2984 = vadd.f32 %v2969, %v2980
          %s2985 = sadd.s32 %s2554, 29
          %s2986 = sld [smem:[#allocation7 + %s2985]]
          %v2987 = vstv %s2986
          %v2988 = vmul.f32 %v2987, %v1854
          %v2989 = vmul.f32 %v2987, %v1857
          %2992 = vrot.lane.b32.xlu0 %v2988, 126
          %v2993 = vpop.permute.xlu0 %2992
          %2994 = vrot.lane.b32.xlu0 %v2989, 126
          %v2995 = vpop.permute.xlu0 %2994
          %v2998 = vadd.f32 %v2983, %v2993
          %v2999 = vadd.f32 %v2984, %v2995
          %s3000 = sadd.s32 %s2554, 30
          %s3001 = sld [smem:[#allocation7 + %s3000]]
          %v3002 = vstv %s3001
          %v3003 = vmul.f32 %v3002, %v1854
          %v3004 = vmul.f32 %v3002, %v1857
          %v3007 = vrot.slane %v3003, 1
          %v3008 = vrot.slane %v3004, 1
          %v3009 = vsel %vm538, %v3007, %v3008
          %v3012 = vadd.f32 %v2998, %v3009
          %v3013 = vadd.f32 %v2999, %v3008
          %s3014 = sadd.s32 %s2554, 31
          %s3015 = sld [smem:[#allocation7 + %s3014]]
          %v3016 = vstv %s3015
          %v3017 = vmul.f32 %v3016, %v1854
          %v3018 = vmul.f32 %v3016, %v1857
          %v3021 = vrot.slane %v3017, 1
          %v3022 = vrot.slane %v3018, 1
          %v3023 = vsel %vm538, %v3021, %v3022
          %3024 = vrot.lane.b32.xlu0 %v3023, 127
          %v3025 = vpop.permute.xlu0 %3024
          %3026 = vrot.lane.b32.xlu0 %v3022, 127
          %v3027 = vpop.permute.xlu0 %3026
          %v3030 = vadd.f32 %v3012, %v3025
          %v3031 = vadd.f32 %v3013, %v3027
          %s3032 = sadd.s32 %s2554, 32
          %s3033 = sld [smem:[#allocation7 + %s3032]]
          %v3034 = vstv %s3033
          %v3035 = vmul.f32 %v3034, %v1854
          %v3036 = vmul.f32 %v3034, %v1857
          %v3039 = vrot.slane %v3035, 1
          %v3040 = vrot.slane %v3036, 1
          %v3041 = vsel %vm538, %v3039, %v3040
          %3042 = vrot.lane.b32.xlu0 %v3041, 126
          %v3043 = vpop.permute.xlu0 %3042
          %3044 = vrot.lane.b32.xlu0 %v3040, 126
          %v3045 = vpop.permute.xlu0 %3044
          %v3048 = vadd.f32 %v3030, %v3043
          %v3049 = vadd.f32 %v3031, %v3045
          %s3050 = sadd.s32 %s2554, 33
          %s3051 = sld [smem:[#allocation7 + %s3050]]
          %v3052 = vstv %s3051
          %v3053 = vmul.f32 %v3052, %v1854
          %v3054 = vmul.f32 %v3052, %v1857
          %v3057 = vrot.slane %v3053, 2
          %v3058 = vrot.slane %v3054, 2
          %v3059 = vsel %vm630, %v3057, %v3058
          %v3062 = vadd.f32 %v3048, %v3059
          %v3063 = vadd.f32 %v3049, %v3058
          %s3064 = sadd.s32 %s2554, 34
          %s3065 = sld [smem:[#allocation7 + %s3064]]
          %v3066 = vstv %s3065
          %v3067 = vmul.f32 %v3066, %v1854
          %v3068 = vmul.f32 %v3066, %v1857
          %v3071 = vrot.slane %v3067, 2
          %v3072 = vrot.slane %v3068, 2
          %v3073 = vsel %vm630, %v3071, %v3072
          %3074 = vrot.lane.b32.xlu0 %v3073, 127
          %v3075 = vpop.permute.xlu0 %3074
          %3076 = vrot.lane.b32.xlu0 %v3072, 127
          %v3077 = vpop.permute.xlu0 %3076
          %v3080 = vadd.f32 %v3062, %v3075
          %v3081 = vadd.f32 %v3063, %v3077
          %s3082 = sadd.s32 %s2554, 35
          %s3083 = sld [smem:[#allocation7 + %s3082]]
          %v3084 = vstv %s3083
          %v3085 = vmul.f32 %v3084, %v1854
          %v3086 = vmul.f32 %v3084, %v1857
          %v3089 = vrot.slane %v3085, 2
          %v3090 = vrot.slane %v3086, 2
          %v3091 = vsel %vm630, %v3089, %v3090
          %3092 = vrot.lane.b32.xlu0 %v3091, 126
          %v3093 = vpop.permute.xlu0 %3092
          %3094 = vrot.lane.b32.xlu0 %v3090, 126
          %v3095 = vpop.permute.xlu0 %3094
          %v3098 = vadd.f32 %v3080, %v3093
          %v3099 = vadd.f32 %v3081, %v3095
          %s3100 = sadd.s32 %s2554, 36
          %s3101 = sld [smem:[#allocation7 + %s3100]]
          %v3102 = vstv %s3101
          %v3103 = vmul.f32 %v3102, %v2198
          %v3104 = vmul.f32 %v3102, %v2201
          %v3105 = vadd.f32 %v3098, %v3103
          %v3106 = vadd.f32 %v3099, %v3104
          %s3107 = sadd.s32 %s2554, 37
          %s3108 = sld [smem:[#allocation7 + %s3107]]
          %v3109 = vstv %s3108
          %v3110 = vmul.f32 %v3109, %v2198
          %v3111 = vmul.f32 %v3109, %v2201
          %3114 = vrot.lane.b32.xlu0 %v3110, 127
          %v3115 = vpop.permute.xlu0 %3114
          %3116 = vrot.lane.b32.xlu0 %v3111, 127
          %v3117 = vpop.permute.xlu0 %3116
          %v3120 = vadd.f32 %v3105, %v3115
          %v3121 = vadd.f32 %v3106, %v3117
          %s3122 = sadd.s32 %s2554, 38
          %s3123 = sld [smem:[#allocation7 + %s3122]]
          %v3124 = vstv %s3123
          %v3125 = vmul.f32 %v3124, %v2198
          %v3126 = vmul.f32 %v3124, %v2201
          %3129 = vrot.lane.b32.xlu0 %v3125, 126
          %v3130 = vpop.permute.xlu0 %3129
          %3131 = vrot.lane.b32.xlu0 %v3126, 126
          %v3132 = vpop.permute.xlu0 %3131
          %v3135 = vadd.f32 %v3120, %v3130
          %v3136 = vadd.f32 %v3121, %v3132
          %s3137 = sadd.s32 %s2554, 39
          %s3138 = sld [smem:[#allocation7 + %s3137]]
          %v3139 = vstv %s3138
          %v3140 = vmul.f32 %v3139, %v2198
          %v3141 = vmul.f32 %v3139, %v2201
          %v3144 = vrot.slane %v3140, 1
          %v3145 = vrot.slane %v3141, 1
          %v3146 = vsel %vm538, %v3144, %v3145
          %v3149 = vadd.f32 %v3135, %v3146
          %v3150 = vadd.f32 %v3136, %v3145
          %s3151 = sadd.s32 %s2554, 40
          %s3152 = sld [smem:[#allocation7 + %s3151]]
          %v3153 = vstv %s3152
          %v3154 = vmul.f32 %v3153, %v2198
          %v3155 = vmul.f32 %v3153, %v2201
          %v3158 = vrot.slane %v3154, 1
          %v3159 = vrot.slane %v3155, 1
          %v3160 = vsel %vm538, %v3158, %v3159
          %3161 = vrot.lane.b32.xlu0 %v3160, 127
          %v3162 = vpop.permute.xlu0 %3161
          %3163 = vrot.lane.b32.xlu0 %v3159, 127
          %v3164 = vpop.permute.xlu0 %3163
          %v3167 = vadd.f32 %v3149, %v3162
          %v3168 = vadd.f32 %v3150, %v3164
          %s3169 = sadd.s32 %s2554, 41
          %s3170 = sld [smem:[#allocation7 + %s3169]]
          %v3171 = vstv %s3170
          %v3172 = vmul.f32 %v3171, %v2198
          %v3173 = vmul.f32 %v3171, %v2201
          %v3176 = vrot.slane %v3172, 1
          %v3177 = vrot.slane %v3173, 1
          %v3178 = vsel %vm538, %v3176, %v3177
          %3179 = vrot.lane.b32.xlu0 %v3178, 126
          %v3180 = vpop.permute.xlu0 %3179
          %3181 = vrot.lane.b32.xlu0 %v3177, 126
          %v3182 = vpop.permute.xlu0 %3181
          %v3185 = vadd.f32 %v3167, %v3180
          %v3186 = vadd.f32 %v3168, %v3182
          %s3187 = sadd.s32 %s2554, 42
          %s3188 = sld [smem:[#allocation7 + %s3187]]
          %v3189 = vstv %s3188
          %v3190 = vmul.f32 %v3189, %v2198
          %v3191 = vmul.f32 %v3189, %v2201
          %v3194 = vrot.slane %v3190, 2
          %v3195 = vrot.slane %v3191, 2
          %v3196 = vsel %vm630, %v3194, %v3195
          %v3199 = vadd.f32 %v3185, %v3196
          %v3200 = vadd.f32 %v3186, %v3195
          %s3201 = sadd.s32 %s2554, 43
          %s3202 = sld [smem:[#allocation7 + %s3201]]
          %v3203 = vstv %s3202
          %v3204 = vmul.f32 %v3203, %v2198
          %v3205 = vmul.f32 %v3203, %v2201
          %v3208 = vrot.slane %v3204, 2
          %v3209 = vrot.slane %v3205, 2
          %v3210 = vsel %vm630, %v3208, %v3209
          %3211 = vrot.lane.b32.xlu0 %v3210, 127
          %v3212 = vpop.permute.xlu0 %3211
          %3213 = vrot.lane.b32.xlu0 %v3209, 127
          %v3214 = vpop.permute.xlu0 %3213
          %v3217 = vadd.f32 %v3199, %v3212
          %v3218 = vadd.f32 %v3200, %v3214
          %s3219 = sadd.s32 %s2554, 44
          %s3220 = sld [smem:[#allocation7 + %s3219]]
          %v3221 = vstv %s3220
          %v3222 = vmul.f32 %v3221, %v2198
          %v3223 = vmul.f32 %v3221, %v2201
          %v3226 = vrot.slane %v3222, 2
          %v3227 = vrot.slane %v3223, 2
          %v3228 = vsel %vm630, %v3226, %v3227
          %3229 = vrot.lane.b32.xlu0 %v3228, 126
          %v3230 = vpop.permute.xlu0 %3229
          %3231 = vrot.lane.b32.xlu0 %v3227, 126
          %v3232 = vpop.permute.xlu0 %3231
          %v3235 = vadd.f32 %v3217, %v3230
          %v3236 = vadd.f32 %v3218, %v3232
          %s3237 = sadd.s32 %s2554, 45
          %s3238 = sld [smem:[#allocation7 + %s3237]]
          %v3239 = vstv %s3238
          %v3240 = vmul.f32 %v3239, %v2542
          %v3241 = vmul.f32 %v3239, %v2545
          %v3242 = vadd.f32 %v3235, %v3240
          %v3243 = vadd.f32 %v3236, %v3241
          %s3244 = sadd.s32 %s2554, 46
          %s3245 = sld [smem:[#allocation7 + %s3244]]
          %v3246 = vstv %s3245
          %v3247 = vmul.f32 %v3246, %v2542
          %v3248 = vmul.f32 %v3246, %v2545
          %3251 = vrot.lane.b32.xlu0 %v3247, 127
          %v3252 = vpop.permute.xlu0 %3251
          %3253 = vrot.lane.b32.xlu0 %v3248, 127
          %v3254 = vpop.permute.xlu0 %3253
          %v3257 = vadd.f32 %v3242, %v3252
          %v3258 = vadd.f32 %v3243, %v3254
          %s3259 = sadd.s32 %s2554, 47
          %s3260 = sld [smem:[#allocation7 + %s3259]]
          %v3261 = vstv %s3260
          %v3262 = vmul.f32 %v3261, %v2542
          %v3263 = vmul.f32 %v3261, %v2545
          %3266 = vrot.lane.b32.xlu0 %v3262, 126
          %v3267 = vpop.permute.xlu0 %3266
          %3268 = vrot.lane.b32.xlu0 %v3263, 126
          %v3269 = vpop.permute.xlu0 %3268
          %v3272 = vadd.f32 %v3257, %v3267
          %v3273 = vadd.f32 %v3258, %v3269
          %s3274 = sadd.s32 %s2554, 48
          %s3275 = sld [smem:[#allocation7 + %s3274]]
          %v3276 = vstv %s3275
          %v3277 = vmul.f32 %v3276, %v2542
          %v3278 = vmul.f32 %v3276, %v2545
          %v3281 = vrot.slane %v3277, 1
          %v3282 = vrot.slane %v3278, 1
          %v3283 = vsel %vm538, %v3281, %v3282
          %v3286 = vadd.f32 %v3272, %v3283
          %v3287 = vadd.f32 %v3273, %v3282
          %s3288 = sadd.s32 %s2554, 49
          %s3289 = sld [smem:[#allocation7 + %s3288]]
          %v3290 = vstv %s3289
          %v3291 = vmul.f32 %v3290, %v2542
          %v3292 = vmul.f32 %v3290, %v2545
          %v3295 = vrot.slane %v3291, 1
          %v3296 = vrot.slane %v3292, 1
          %v3297 = vsel %vm538, %v3295, %v3296
          %3298 = vrot.lane.b32.xlu0 %v3297, 127
          %v3299 = vpop.permute.xlu0 %3298
          %3300 = vrot.lane.b32.xlu0 %v3296, 127
          %v3301 = vpop.permute.xlu0 %3300
          %v3304 = vadd.f32 %v3286, %v3299
          %v3305 = vadd.f32 %v3287, %v3301
          %s3306 = sadd.s32 %s2554, 50
          %s3307 = sld [smem:[#allocation7 + %s3306]]
          %v3308 = vstv %s3307
          %v3309 = vmul.f32 %v3308, %v2542
          %v3310 = vmul.f32 %v3308, %v2545
          %v3313 = vrot.slane %v3309, 1
          %v3314 = vrot.slane %v3310, 1
          %v3315 = vsel %vm538, %v3313, %v3314
          %3316 = vrot.lane.b32.xlu0 %v3315, 126
          %v3317 = vpop.permute.xlu0 %3316
          %3318 = vrot.lane.b32.xlu0 %v3314, 126
          %v3319 = vpop.permute.xlu0 %3318
          %v3322 = vadd.f32 %v3304, %v3317
          %v3323 = vadd.f32 %v3305, %v3319
          %s3324 = sadd.s32 %s2554, 51
          %s3325 = sld [smem:[#allocation7 + %s3324]]
          %v3326 = vstv %s3325
          %v3327 = vmul.f32 %v3326, %v2542
          %v3328 = vmul.f32 %v3326, %v2545
          %v3331 = vrot.slane %v3327, 2
          %v3332 = vrot.slane %v3328, 2
          %v3333 = vsel %vm630, %v3331, %v3332
          %v3336 = vadd.f32 %v3322, %v3333
          %v3337 = vadd.f32 %v3323, %v3332
          %s3338 = sadd.s32 %s2554, 52
          %s3339 = sld [smem:[#allocation7 + %s3338]]
          %v3340 = vstv %s3339
          %v3341 = vmul.f32 %v3340, %v2542
          %v3342 = vmul.f32 %v3340, %v2545
          %v3345 = vrot.slane %v3341, 2
          %v3346 = vrot.slane %v3342, 2
          %v3347 = vsel %vm630, %v3345, %v3346
          %3348 = vrot.lane.b32.xlu0 %v3347, 127
          %v3349 = vpop.permute.xlu0 %3348
          %3350 = vrot.lane.b32.xlu0 %v3346, 127
          %v3351 = vpop.permute.xlu0 %3350
          %v3354 = vadd.f32 %v3336, %v3349
          %v3355 = vadd.f32 %v3337, %v3351
          %s3356 = sadd.s32 %s2554, 53
          %s3357 = sld [smem:[#allocation7 + %s3356]]
          %v3358 = vstv %s3357
          %v3359 = vmul.f32 %v3358, %v2542
          %v3360 = vmul.f32 %v3358, %v2545
          %v3363 = vrot.slane %v3359, 2
          %v3364 = vrot.slane %v3360, 2
          %v3365 = vsel %vm630, %v3363, %v3364
          %3366 = vrot.lane.b32.xlu0 %v3365, 126
          %v3367 = vpop.permute.xlu0 %3366
          %3368 = vrot.lane.b32.xlu0 %v3364, 126
          %v3369 = vpop.permute.xlu0 %3368
          %v3372 = vadd.f32 %v3354, %v3367
          %v3373 = vadd.f32 %v3355, %v3369
          %s3374 = sld [smem:[#allocation8 + %s2548]]
          %v3375 = vstv %s3374
          %v3376 = vadd.f32 %v3372, %v3375
          %v3377 = vadd.f32 %v3373, %v3375
          %v3378 = vmax.f32 %v3376, 0.0
          %v3379 = vmax.f32 %v3377, 0.0
          %v3382 = vrot.slane %v3378, 1
          %v3383 = vrot.slane %v3379, 1
          %v3384 = vsel %vm538, %v3382, %v3383
          %v3387 = vmax.f32 %v3378, %v3384
          %v3388 = vmax.f32 %v3379, %v3383
          %3391 = vrot.lane.b32.xlu0 %v3387, 127
          %v3392 = vpop.permute.xlu0 %3391
          %3393 = vrot.lane.b32.xlu0 %v3388, 127
          %v3394 = vpop.permute.xlu0 %3393
          %v3397 = vmax.f32 %v3387, %v3392
          %v3398 = vmax.f32 %v3388, %v3394
          %vm3399 = vcmask 97280
          %v3400 = vsel %vm3399, %v453, 0
          %vm3402 = vcmask 1043456
          %v3404 = vsel %vm3402, %v3398, 0
          %3406 = vmatpush.msra.mxu0 0.0
          %3407 = vmatpush.msra.mxu0 0.0
          %3408 = vmatpush.msra.mxu0 0.0
          %3409 = vmatpush.msra.mxu0 0.0
          %3410 = vmatpush.msra.mxu0 0.0
          %3411 = vmatpush.msra.mxu0 0.0
          %3412 = vmatpush.msra.mxu0 0.0
          %3413 = vmatpush.msra.mxu0 0.0
          %3414 = vmatpush.msra.mxu0 0.0
          %3415 = vmatpush.msra.mxu0 0.0
          %3416 = vmatpush.msra.mxu0 0.0
          %3417 = vmatpush.msra.mxu0 0.0
          %3418 = vmatpush.msra.mxu0 0.0
          %3419 = vmatpush.msra.mxu0 0.0
          %3420 = vmatpush.msra.mxu0 %v3404
          %3421 = vmatpush.msra.mxu0 %v3397
          %3422 = vmatmul.f32.gmra.mxu0 %v3400
          %v3423 = vpop.f32.mrf.mxu0
          %v3424 = vadd.f32 0.0, %v3423
          %3425 = vdwg.mxu0
          %v3427 = vsel %vm3399, %v3424, 0
          %v3430 = vsel %vm3402, %v467, 0
          %3432 = vmatpush.msra.mxu0 0.0
          %3433 = vmatpush.msra.mxu0 0.0
          %3434 = vmatpush.msra.mxu0 0.0
          %3435 = vmatpush.msra.mxu0 0.0
          %3436 = vmatpush.msra.mxu0 0.0
          %3437 = vmatpush.msra.mxu0 0.0
          %3438 = vmatpush.msra.mxu0 0.0
          %3439 = vmatpush.msra.mxu0 0.0
          %3440 = vmatpush.msra.mxu0 0.0
          %3441 = vmatpush.msra.mxu0 0.0
          %3442 = vmatpush.msra.mxu0 0.0
          %3443 = vmatpush.msra.mxu0 0.0
          %3444 = vmatpush.msra.mxu0 0.0
          %3445 = vmatpush.msra.mxu0 0.0
          %3446 = vmatpush.msra.mxu0 %v3430
          %3447 = vmatpush.msra.mxu0 %v466
          %3448 = vmatmul.f32.gmra.mxu0 %v3427
          %v3449 = vpop.f32.mrf.mxu0
          %v3450 = vadd.f32 0.0, %v3449
          %3451 = vdwg.mxu0
          %s3452 = smul.u32 %s2548, 6
          %s3453 = smul.u32 %s3452, 8
          %s3454 = scalar_lea.vmem %s5, %s3453
          %v3455 = vld [vmem:[%s3454] sm:$0x3f]
          %vm3456 = vcmask 48128
          %v3458 = vsel %vm3456, %v3450, 0
          %v3461 = vsel %vm630, %v3455, 0
          %3463 = vmatpush.msra.mxu0 0.0
          %3464 = vmatpush.msra.mxu0 0.0
          %3465 = vmatpush.msra.mxu0 0.0
          %3466 = vmatpush.msra.mxu0 0.0
          %3467 = vmatpush.msra.mxu0 0.0
          %3468 = vmatpush.msra.mxu0 0.0
          %3469 = vmatpush.msra.mxu0 0.0
          %3470 = vmatpush.msra.mxu0 0.0
          %3471 = vmatpush.msra.mxu0 0.0
          %3472 = vmatpush.msra.mxu0 0.0
          %3473 = vmatpush.msra.mxu0 0.0
          %3474 = vmatpush.msra.mxu0 0.0
          %3475 = vmatpush.msra.mxu0 0.0
          %3476 = vmatpush.msra.mxu0 0.0
          %3477 = vmatpush.msra.mxu0 0.0
          %3478 = vmatpush.msra.mxu0 %v3461
          %3479 = vmatmul.f32.gmra.mxu0 %v3458
          %v3480 = vpop.f32.mrf.mxu0
          %v3481 = vadd.f32 0.0, %v3480
          %3482 = vdwg.mxu0
          %v3483 = vadd.f32 %v2553, %v3481
          %s3484 = sadd.s32 %s3452, 1
          %s3485 = smul.u32 %s3484, 8
          %s3486 = scalar_lea.vmem %s5, %s3485
          %v3487 = vld [vmem:[%s3486] sm:$0x3f]
          %v3488 = vrot.slane %v3450, 1
          %v3489 = vsel %vm3456, %v3488, 0
          %v3492 = vsel %vm630, %v3487, 0
          %3494 = vmatpush.msra.mxu0 0.0
          %3495 = vmatpush.msra.mxu0 0.0
          %3496 = vmatpush.msra.mxu0 0.0
          %3497 = vmatpush.msra.mxu0 0.0
          %3498 = vmatpush.msra.mxu0 0.0
          %3499 = vmatpush.msra.mxu0 0.0
          %3500 = vmatpush.msra.mxu0 0.0
          %3501 = vmatpush.msra.mxu0 0.0
          %3502 = vmatpush.msra.mxu0 0.0
          %3503 = vmatpush.msra.mxu0 0.0
          %3504 = vmatpush.msra.mxu0 0.0
          %3505 = vmatpush.msra.mxu0 0.0
          %3506 = vmatpush.msra.mxu0 0.0
          %3507 = vmatpush.msra.mxu0 0.0
          %3508 = vmatpush.msra.mxu0 0.0
          %3509 = vmatpush.msra.mxu0 %v3492
          %3510 = vmatmul.f32.gmra.mxu0 %v3489
          %v3511 = vpop.f32.mrf.mxu0
          %v3512 = vadd.f32 0.0, %v3511
          %3513 = vdwg.mxu0
          %v3514 = vadd.f32 %v3483, %v3512
          %s3515 = sadd.s32 %s3452, 2
          %s3516 = smul.u32 %s3515, 8
          %s3517 = scalar_lea.vmem %s5, %s3516
          %v3518 = vld [vmem:[%s3517] sm:$0x3f]
          %v3519 = vrot.slane %v3450, 2
          %v3520 = vsel %vm3456, %v3519, 0
          %v3523 = vsel %vm630, %v3518, 0
          %3525 = vmatpush.msra.mxu0 0.0
          %3526 = vmatpush.msra.mxu0 0.0
          %3527 = vmatpush.msra.mxu0 0.0
          %3528 = vmatpush.msra.mxu0 0.0
          %3529 = vmatpush.msra.mxu0 0.0
          %3530 = vmatpush.msra.mxu0 0.0
          %3531 = vmatpush.msra.mxu0 0.0
          %3532 = vmatpush.msra.mxu0 0.0
          %3533 = vmatpush.msra.mxu0 0.0
          %3534 = vmatpush.msra.mxu0 0.0
          %3535 = vmatpush.msra.mxu0 0.0
          %3536 = vmatpush.msra.mxu0 0.0
          %3537 = vmatpush.msra.mxu0 0.0
          %3538 = vmatpush.msra.mxu0 0.0
          %3539 = vmatpush.msra.mxu0 0.0
          %3540 = vmatpush.msra.mxu0 %v3523
          %3541 = vmatmul.f32.gmra.mxu0 %v3520
          %v3542 = vpop.f32.mrf.mxu0
          %v3543 = vadd.f32 0.0, %v3542
          %3544 = vdwg.mxu0
          %v3545 = vadd.f32 %v3514, %v3543
          %s3546 = sadd.s32 %s3452, 3
          %s3547 = smul.u32 %s3546, 8
          %s3548 = scalar_lea.vmem %s5, %s3547
          %v3549 = vld [vmem:[%s3548] sm:$0x3f]
          %v3550 = vrot.slane %v3450, 3
          %v3551 = vsel %vm3456, %v3550, 0
          %v3554 = vsel %vm630, %v3549, 0
          %3556 = vmatpush.msra.mxu0 0.0
          %3557 = vmatpush.msra.mxu0 0.0
          %3558 = vmatpush.msra.mxu0 0.0
          %3559 = vmatpush.msra.mxu0 0.0
          %3560 = vmatpush.msra.mxu0 0.0
          %3561 = vmatpush.msra.mxu0 0.0
          %3562 = vmatpush.msra.mxu0 0.0
          %3563 = vmatpush.msra.mxu0 0.0
          %3564 = vmatpush.msra.mxu0 0.0
          %3565 = vmatpush.msra.mxu0 0.0
          %3566 = vmatpush.msra.mxu0 0.0
          %3567 = vmatpush.msra.mxu0 0.0
          %3568 = vmatpush.msra.mxu0 0.0
          %3569 = vmatpush.msra.mxu0 0.0
          %3570 = vmatpush.msra.mxu0 0.0
          %3571 = vmatpush.msra.mxu0 %v3554
          %3572 = vmatmul.f32.gmra.mxu0 %v3551
          %v3573 = vpop.f32.mrf.mxu0
          %v3574 = vadd.f32 0.0, %v3573
          %3575 = vdwg.mxu0
          %v3576 = vadd.f32 %v3545, %v3574
          %s3577 = sadd.s32 %s3452, 4
          %s3578 = smul.u32 %s3577, 8
          %s3579 = scalar_lea.vmem %s5, %s3578
          %v3580 = vld [vmem:[%s3579] sm:$0x3f]
          %v3581 = vrot.slane %v3450, 4
          %v3582 = vsel %vm3456, %v3581, 0
          %v3585 = vsel %vm630, %v3580, 0
          %3587 = vmatpush.msra.mxu0 0.0
          %3588 = vmatpush.msra.mxu0 0.0
          %3589 = vmatpush.msra.mxu0 0.0
          %3590 = vmatpush.msra.mxu0 0.0
          %3591 = vmatpush.msra.mxu0 0.0
          %3592 = vmatpush.msra.mxu0 0.0
          %3593 = vmatpush.msra.mxu0 0.0
          %3594 = vmatpush.msra.mxu0 0.0
          %3595 = vmatpush.msra.mxu0 0.0
          %3596 = vmatpush.msra.mxu0 0.0
          %3597 = vmatpush.msra.mxu0 0.0
          %3598 = vmatpush.msra.mxu0 0.0
          %3599 = vmatpush.msra.mxu0 0.0
          %3600 = vmatpush.msra.mxu0 0.0
          %3601 = vmatpush.msra.mxu0 0.0
          %3602 = vmatpush.msra.mxu0 %v3585
          %3603 = vmatmul.f32.gmra.mxu0 %v3582
          %v3604 = vpop.f32.mrf.mxu0
          %v3605 = vadd.f32 0.0, %v3604
          %3606 = vdwg.mxu0
          %v3607 = vadd.f32 %v3576, %v3605
          %s3608 = sadd.s32 %s3452, 5
          %s3609 = smul.u32 %s3608, 8
          %s3610 = scalar_lea.vmem %s5, %s3609
          %v3611 = vld [vmem:[%s3610] sm:$0x3f]
          %v3612 = vrot.slane %v3450, 5
          %v3613 = vsel %vm3456, %v3612, 0
          %v3616 = vsel %vm630, %v3611, 0
          %3618 = vmatpush.msra.mxu0 0.0
          %3619 = vmatpush.msra.mxu0 0.0
          %3620 = vmatpush.msra.mxu0 0.0
          %3621 = vmatpush.msra.mxu0 0.0
          %3622 = vmatpush.msra.mxu0 0.0
          %3623 = vmatpush.msra.mxu0 0.0
          %3624 = vmatpush.msra.mxu0 0.0
          %3625 = vmatpush.msra.mxu0 0.0
          %3626 = vmatpush.msra.mxu0 0.0
          %3627 = vmatpush.msra.mxu0 0.0
          %3628 = vmatpush.msra.mxu0 0.0
          %3629 = vmatpush.msra.mxu0 0.0
          %3630 = vmatpush.msra.mxu0 0.0
          %3631 = vmatpush.msra.mxu0 0.0
          %3632 = vmatpush.msra.mxu0 0.0
          %3633 = vmatpush.msra.mxu0 %v3616
          %3634 = vmatmul.f32.gmra.mxu0 %v3613
          %v3635 = vpop.f32.mrf.mxu0
          %v3636 = vadd.f32 0.0, %v3635
          %3637 = vdwg.mxu0
          %v3638 = vadd.f32 %v3607, %v3636
        $region85: #{net_forward.1} parent=63 // loop_footer
          %s2552 = sadd.s32 1, %s2548
        $region86: #{net_forward.1} parent=63 // loop_footer_branch
          %2547 = sbr.rel target = $region82
        $region87: #{net_forward.1} parent=63 // loop_exit
          _
        %v3639 = vld [vmem:[%s6] sm:$0x1]
        %v3640 = vadd.f32 %v2553, %v3639
        %v3641 = vmax.f32 %v3640, 0.0
        %v3642 = vld [vmem:[%s7] sm:$0xff]
        %v3643 = vld [vmem:[%s7 + $0x8] sm:$0xff]
        %v3644 = vld [vmem:[%s7 + $0x10] sm:$0xff]
        %v3645 = vld [vmem:[%s7 + $0x18] sm:$0xff]
        %v3646 = vld [vmem:[%s7 + $0x20] sm:$0xff]
        %v3647 = vld [vmem:[%s7 + $0x28] sm:$0xff]
        %v3648 = vld [vmem:[%s7 + $0x30] sm:$0xff]
        %v3649 = vld [vmem:[%s7 + $0x38] sm:$0xff]
        %v3650 = vld [vmem:[%s7 + $0x40] sm:$0xff]
        %v3651 = vld [vmem:[%s7 + $0x48] sm:$0xff]
        %v3652 = vld [vmem:[%s7 + $0x50] sm:$0xff]
        %v3653 = vld [vmem:[%s7 + $0x58] sm:$0xff]
        %v3654 = vld [vmem:[%s7 + $0x60] sm:$0xff]
        %v3655 = vld [vmem:[%s7 + $0x68] sm:$0xff]
        %v3656 = vld [vmem:[%s7 + $0x70] sm:$0xff]
        %v3657 = vld [vmem:[%s8] sm:$0x1]
        %vm3658 = vcmask 982016
        %v3660 = vsel %vm3658, %v3641, 0
        %3662 = vmatpush.msra.mxu0 0.0
        %3663 = vmatpush.msra.mxu0 %v3656
        %3664 = vmatpush.msra.mxu0 %v3655
        %3665 = vmatpush.msra.mxu0 %v3654
        %3666 = vmatpush.msra.mxu0 %v3653
        %3667 = vmatpush.msra.mxu0 %v3652
        %3668 = vmatpush.msra.mxu0 %v3651
        %3669 = vmatpush.msra.mxu0 %v3650
        %3670 = vmatpush.msra.mxu0 %v3649
        %3671 = vmatpush.msra.mxu0 %v3648
        %3672 = vmatpush.msra.mxu0 %v3647
        %3673 = vmatpush.msra.mxu0 %v3646
        %3674 = vmatpush.msra.mxu0 %v3645
        %3675 = vmatpush.msra.mxu0 %v3644
        %3676 = vmatpush.msra.mxu0 %v3643
        %3677 = vmatpush.msra.mxu0 %v3642
        %3678 = vmatmul.f32.gmra.mxu0 %v3660
        %v3679 = vpop.f32.mrf.mxu0
        %v3680 = vadd.f32 %v3657, %v3679
        %3681 = vdwg.mxu0
        %v3682 = vmax.f32 %v3680, 0.0
        %v3683 = vld [vmem:[%s9] sm:$0xff]
        %v3684 = vld [vmem:[%s9 + $0x8] sm:$0xff]
        %v3685 = vld [vmem:[%s9 + $0x10] sm:$0xff]
        %v3686 = vld [vmem:[%s9 + $0x18] sm:$0xff]
        %v3687 = vld [vmem:[%s9 + $0x20] sm:$0xff]
        %v3688 = vld [vmem:[%s9 + $0x28] sm:$0xff]
        %v3689 = vld [vmem:[%s9 + $0x30] sm:$0xff]
        %v3690 = vld [vmem:[%s9 + $0x38] sm:$0xff]
        %v3691 = vld [vmem:[%s9 + $0x40] sm:$0xff]
        %v3692 = vld [vmem:[%s9 + $0x48] sm:$0xff]
        %v3693 = vld [vmem:[%s9 + $0x50] sm:$0xf]
        %v3694 = vld [vmem:[%s10] sm:$0x1]
        %vm3695 = vcmask 687104
        %v3697 = vsel %vm3695, %v3682, 0
        %vm3699 = vcmask 1043456
        %v3701 = vsel %vm3699, %v3693, 0
        %3703 = vmatpush.msra.mxu0 0.0
        %3704 = vmatpush.msra.mxu0 0.0
        %3705 = vmatpush.msra.mxu0 0.0
        %3706 = vmatpush.msra.mxu0 0.0
        %3707 = vmatpush.msra.mxu0 0.0
        %3708 = vmatpush.msra.mxu0 %v3701
        %3709 = vmatpush.msra.mxu0 %v3692
        %3710 = vmatpush.msra.mxu0 %v3691
        %3711 = vmatpush.msra.mxu0 %v3690
        %3712 = vmatpush.msra.mxu0 %v3689
        %3713 = vmatpush.msra.mxu0 %v3688
        %3714 = vmatpush.msra.mxu0 %v3687
        %3715 = vmatpush.msra.mxu0 %v3686
        %3716 = vmatpush.msra.mxu0 %v3685
        %3717 = vmatpush.msra.mxu0 %v3684
        %3718 = vmatpush.msra.mxu0 %v3683
        %3719 = vmatmul.f32.gmra.mxu0 %v3697
        %v3720 = vpop.f32.mrf.mxu0
        %v3721 = vadd.f32 %v3694, %v3720
        %3722 = vdwg.mxu0
        %vm3723 = vcmask 73728
        %3724 = vst.msk [vmem:[%s432] sm:$0x1] %vm3723, %v3721
        %s3725 = sand.u32 %s272, 1
        %s3726 = scalar_lea.sflag [#allocation3], %s3725
        %s3727 = sand.u32 %s272, 1
        %s3728 = scalar_lea.vmem [#allocation10], %s3727
        // Predicated region
        $region88: #{net_forward.1} parent=63 // pred_check
          %p3729 = pneg %p282
        $region89: #{net_forward.1} parent=63 // pred_check_branch
          %3731 = sbr.rel (%p3729) target = $region91
        $region90: #{net_forward.1} parent=63 // pred_region
          %3733 = vsyncadd %s3726, 0
          %s3734 = scalar_lea.hbm %s11, %s28
          %s3736 = sshll.u32 %s3728, 4
          %s3737 = int_to_ptr.vmem [resolvable:$true] %s3736
          %s3738 = sshll.u32 %s3734, 4
          %s3739 = int_to_ptr.hbm [resolvable:$true] %s3738
          %3741 = dma.vmem_to_hbm [thread:$0]  %s3737, 16, %s3739, %s3726
        $region91: #{net_forward.1} parent=63 // pred_fallthru
          _
      $region64: #{net_forward.1} parent=5 // pred_fallthru
        _
      %p3742 = scmp.le.s32.totalorder 2, %s23
      // Predicated region
      $region92: #{net_forward.1} parent=5 // pred_check
        %p3743 = pneg %p3742
      $region93: #{net_forward.1} parent=5 // pred_check_branch
        %3745 = sbr.rel (%p3743) target = $region95
      $region94: #{net_forward.1} parent=5 // pred_region
        %s3746 = ssub.s32 %s23, 2
        // Predicated region
        $region96: #{net_forward.1} parent=94 // pred_check
          %p3747 = pneg %p288
        $region97: #{net_forward.1} parent=94 // pred_check_branch
          %3749 = sbr.rel (%p3747) target = $region99
        $region98: #{net_forward.1} parent=94 // pred_region
          %s3750 = sand.u32 %s273, 1
          %s3751 = scalar_lea.sflag [#allocation3], %s3750
          %s3752 = sand.u32 %s273, 1
          %s3753 = scalar_lea.vmem [#allocation10], %s3752
          %3755 = dma.done %s3751, 16
        $region99: #{net_forward.1} parent=94 // pred_fallthru
          _
      $region95: #{net_forward.1} parent=5 // pred_fallthru
        _
    $region6: #{net_forward.1} parent=1 // loop_footer
      %s27 = sadd.s32 1, %s23
    $region7: #{net_forward.1} parent=1 // loop_footer_branch
      %22 = sbr.rel target = $region3
    $region8: #{net_forward.1} parent=1 // loop_exit
      _
    %3756 = vsyncpa [#allocation3], 1
    %s3757 = scalar_lea.sflag [#allocation3], 1
    %3758 = vsyncpa %s3757, 1
    %3759 = vsyncpa [#allocation4], 1
    %s3760 = scalar_lea.sflag [#allocation4], 1
    %3761 = vsyncpa %s3760, 1
    %3762 = vsyncpa [#allocation6], 1
    %3763 = vsyncpa [#allocation9], 1

</llo_original>
